<compile_context>
chip_gen: v7x
topology: tpu7x:2x2x1
jax: 0.10.0
libtpu: 0.0.40
codegen_flags: <defaults>
</compile_context>

<pallas_src>
import functools

import jax
import jax.numpy as jnp
from jax.experimental import pallas as pl
from jax.experimental.pallas import tpu as pltpu

CH1 = 64
CH2 = 32


def _round_up(x, m):
    return (x + m - 1) // m * m


def _fused_srcnn_kernel(H, W, M, Q, NC,
                        x_ref, mask_ref, w1_ref, b1_ref, w2_ref, b2_ref,
                        w3_ref, b3_ref, o_ref, a1_ref, a2_ref):
    """Fused 3-layer SRCNN for one batch element.

    Layout (channels on sublanes, flattened padded spatial on lanes):
      x_ref   : (1, 1, Lx)       flattened zero-padded input row
      mask_ref: (1, Rvp) f32     {0,1}: 1 on real output columns only
      w1_ref  : (CH1, 9) f32         b1_ref: (CH1, 1) f32
      w2_ref  : (9, CH2, CH1) bf16   b2_ref: (CH2, 1) f32
      w3_ref  : (CH2, 9) f32         b3_ref: (1, 1) f32
      o_ref   : (1, 1, Rvp)      flattened, lane-padded output row
      a1_ref  : (CH1, 2*M+Rvp) bf16 scratch (zero margins = top/bottom pad)
      a2_ref  : (CH2, 2*M+Rvp) bf16 scratch
    """
    P = W + 2                      # padded row pitch
    Rvp = NC * Q                   # lane-padded flat width of a layer output
    base = M - (P + 1)             # scratch column of relative tap offset 0
    ch1 = w1_ref.shape[0]
    ch2 = w2_ref.shape[1]

    # Zero only the margin columns (they supply the top/bottom "same" padding
    # rows).  The interior [M, M+Rvp) is fully overwritten below, with the
    # left/right pad columns and the [Rv, Rvp) tail forced to 0 by the mask.
    zeros1 = jnp.zeros((ch1, M), a1_ref.dtype)
    zeros2 = jnp.zeros((ch2, M), a2_ref.dtype)
    a1_ref[:, :M] = zeros1
    a1_ref[:, M + Rvp:] = zeros1
    a2_ref[:, :M] = zeros2
    a2_ref[:, M + Rvp:] = zeros2

    def chunk_start(i):
        if isinstance(i, int):
            return i * Q
        return pl.multiple_of(i * Q, 128)

    def for_each_chunk(body):
        if NC <= 8:
            for i in range(NC):            # static unroll for small images
                body(i)
        else:
            @pl.loop(0, NC)
            def _(i):
                body(i)

    # ------- layer 1: 1 -> CH1 (VPU broadcast-FMA; a K=9 matmul wastes MXU) -
    def layer1(i):
        q0 = chunk_start(i)
        acc = jnp.zeros((ch1, Q), jnp.float32)
        for k in range(9):
            kh, kw = divmod(k, 3)
            xk = x_ref[0, :, pl.ds(q0 + kh * P + kw, Q)]          # (1, Q)
            acc = acc + w1_ref[:, k:k + 1] * xk                   # (CH1, Q)
        msk = mask_ref[:, pl.ds(q0, Q)]
        a1 = jnp.maximum(acc + b1_ref[...], 0.0) * msk
        a1_ref[:, pl.ds(M + q0, Q)] = a1.astype(a1_ref.dtype)

    # ------- layer 2: CH1 -> CH2 (9 per-tap bf16 MXU matmuls, f32 acc) ------
    def layer2(i):
        q0 = chunk_start(i)
        acc = jnp.zeros((ch2, Q), jnp.float32)
        for k in range(9):
            kh, kw = divmod(k, 3)
            win = a1_ref[:, pl.ds(base + q0 + kh * P + kw, Q)]    # (CH1, Q)
            acc = acc + jnp.dot(w2_ref[k], win,
                                preferred_element_type=jnp.float32)
        msk = mask_ref[:, pl.ds(q0, Q)]
        a2 = jnp.maximum(acc + b2_ref[...], 0.0) * msk
        a2_ref[:, pl.ds(M + q0, Q)] = a2.astype(a2_ref.dtype)

    # ------- layer 3: CH2 -> 1 (VPU FMA + sublane reduce; no 8-row matmul) --
    def layer3(i):
        q0 = chunk_start(i)
        acc = jnp.zeros((ch2, Q), jnp.float32)
        for k in range(9):
            kh, kw = divmod(k, 3)
            win = a2_ref[:, pl.ds(base + q0 + kh * P + kw, Q)]    # (CH2, Q)
            acc = acc + w3_ref[:, k:k + 1] * win
        y = jnp.sum(acc, axis=0, keepdims=True) + b3_ref[...]     # (1, Q)
        y = jnp.maximum(y, 0.0)
        o_ref[:, :, pl.ds(q0, Q)] = y.reshape(1, 1, Q).astype(o_ref.dtype)

    for_each_chunk(layer1)
    for_each_chunk(layer2)
    for_each_chunk(layer3)


def srcnn_forward_pallas(x_nchw, params, *, chunk_lanes=2048):
    """Forward pass matching nn.Sequential(Conv3x3+ReLU x3). x_nchw: (N,1,H,W)."""
    (w1, b1), (w2, b2), (w3, b3) = params
    N, C, H, W = x_nchw.shape
    assert C == 1, "SRCNN takes a single-channel input"
    ch1 = w1.shape[-1]
    ch2 = w2.shape[-1]

    P = W + 2                             # padded row pitch
    Rv = H * P                            # true flat width of one layer output
    NC = max(1, -(-Rv // max(128, chunk_lanes)))
    Q = _round_up(-(-Rv // NC), 128)      # lane-chunk width (multiple of 128)
    NC = -(-Rv // Q)
    Rvp = NC * Q                          # lane-padded flat width
    M = _round_up(P + 1, 128)             # zero margin (>= one padded row + 1)
    Lx = _round_up(Rvp + 2 * P + 2, 128)  # flat input length incl. tap slack

    # Flatten + zero-pad the 1-channel input so spatial taps become lane
    # shifts of a single lane-dense row (no C=1 channels-last penalty).
    xp = jnp.pad(x_nchw[:, 0], ((0, 0), (1, 1), (1, 1)))         # (N, H+2, P)
    x_flat = jnp.pad(xp.reshape(N, (H + 2) * P),
                     ((0, 0), (0, Lx - (H + 2) * P)))            # (N, Lx)
    x_flat = x_flat.reshape(N, 1, Lx)

    # {0,1} mask of real output columns (kills the left/right pad columns of
    # the flat frame and the [Rv, Rvp) lane-padding tail).  Hoisted here; it
    # stays resident in VMEM for the whole grid.
    col = jnp.arange(Rvp, dtype=jnp.int32)
    mask = (((col % P) < W) & (col < Rv)).astype(jnp.float32)[None, :]

    # Weight layouts (tap index k = 3*kh + kw).
    w1m = jnp.transpose(w1.reshape(9, ch1)).astype(jnp.float32)                  # (ch1, 9)
    w2m = jnp.transpose(w2.reshape(9, ch1, ch2), (0, 2, 1)).astype(jnp.bfloat16)  # (9, ch2, ch1)
    w3m = jnp.transpose(w3.reshape(9, ch2)).astype(jnp.float32)                  # (ch2, 9)
    b1c = b1.reshape(ch1, 1).astype(jnp.float32)
    b2c = b2.reshape(ch2, 1).astype(jnp.float32)
    b3c = b3.reshape(1, 1).astype(jnp.float32)

    kernel = functools.partial(_fused_srcnn_kernel, H, W, M, Q, NC)

    # Explicit VMEM budget: bf16 scratch + double-buffered I/O blocks +
    # resident weights/mask + per-chunk transients, plus headroom.
    itemsize = x_nchw.dtype.itemsize
    scratch_bytes = (ch1 + ch2) * (2 * M + Rvp) * 2
    io_bytes = 2 * (Lx + Rvp) * itemsize
    const_bytes = (Rvp * 4 + w1m.size * 4 + w2m.size * 2 + w3m.size * 4
                   + (ch1 + ch2 + 1) * 4)
    transient_bytes = 8 * max(ch1, ch2) * Q * 4
    vmem_limit = int(min(scratch_bytes + io_bytes + const_bytes
                         + transient_bytes + (8 << 20), 96 << 20))

    flops = 2 * 9 * N * H * W * (ch1 + ch1 * ch2 + ch2)
    bytes_accessed = int(N * (Lx + Rvp) * itemsize + const_bytes)
    cost = pl.CostEstimate(flops=flops, transcendentals=0,
                           bytes_accessed=bytes_accessed)

    out_flat = pl.pallas_call(
        kernel,
        out_shape=jax.ShapeDtypeStruct((N, 1, Rvp), x_nchw.dtype),
        grid_spec=pltpu.PrefetchScalarGridSpec(
            num_scalar_prefetch=0,
            grid=(N,),                                    # one image per step
            in_specs=[
                pl.BlockSpec((1, 1, Lx), lambda n: (n, 0, 0)),
                pl.BlockSpec((1, Rvp), lambda n: (0, 0)),
                pl.BlockSpec((ch1, 9), lambda n: (0, 0)),
                pl.BlockSpec((ch1, 1), lambda n: (0, 0)),
                pl.BlockSpec((9, ch2, ch1), lambda n: (0, 0, 0)),
                pl.BlockSpec((ch2, 1), lambda n: (0, 0)),
                pl.BlockSpec((ch2, 9), lambda n: (0, 0)),
                pl.BlockSpec((1, 1), lambda n: (0, 0)),
            ],
            out_specs=pl.BlockSpec((1, 1, Rvp), lambda n: (n, 0, 0)),
            scratch_shapes=[
                pltpu.VMEM((ch1, 2 * M + Rvp), jnp.bfloat16),  # layer-1 acts
                pltpu.VMEM((ch2, 2 * M + Rvp), jnp.bfloat16),  # layer-2 acts
            ],
        ),
        compiler_params=pltpu.CompilerParams(
            dimension_semantics=("parallel",),
            vmem_limit_bytes=vmem_limit),
        cost_estimate=cost,
    )(x_flat, mask, w1m, b1c, w2m, b2c, w3m, b3c)

    # Drop the lane-padding tail and the pad columns, restore NCHW.
    out = out_flat[:, 0, :Rv].reshape(N, H, P)[:, :, :W]
    return out.reshape(N, 1, H, W)


def init_srcnn_params(key, ch1=CH1, ch2=CH2):
    """Deterministic init mimicking PyTorch Conv2d defaults (U(-1/sqrt(fan_in), .))."""
    dims = [(1, ch1), (ch1, ch2), (ch2, 1)]
    params = []
    for i, (cin, cout) in enumerate(dims):
        kw_, kb_ = jax.random.split(jax.random.fold_in(key, i))
        bound = 1.0 / (cin * 9) ** 0.5
        w = jax.random.uniform(kw_, (3, 3, cin, cout), jnp.float32, -bound, bound)
        b = jax.random.uniform(kb_, (cout,), jnp.float32, -bound, bound)
        params.append((w, b))
    return params


def _reference_forward(x_nchw, params):
    """Pure-JAX reference (lax.conv) matching the PyTorch module (ReLU after
    every conv, including the last, as in the nn.Sequential spec)."""
    x = x_nchw
    for w, b in params:
        w_oihw = jnp.transpose(w, (3, 2, 0, 1))
        x = jax.lax.conv_general_dilated(
            x, w_oihw, window_strides=(1, 1), padding="SAME",
            dimension_numbers=("NCHW", "OIHW", "NCHW"))
        x = jax.nn.relu(x + b.reshape(1, -1, 1, 1))
    return x


if __name__ == "__main__":
    key = jax.random.PRNGKey(0)
    kx, kp = jax.random.split(key)

    # batch=2, 1 channel, 16x16 image (NCHW like the PyTorch module)
    x = jax.random.normal(kx, (2, 1, 16, 16), jnp.float32)
    params = init_srcnn_params(kp)

    fwd = jax.jit(srcnn_forward_pallas)
    out = jax.block_until_ready(fwd(x, params))
    assert out.shape == (2, 1, 16, 16), out.shape

    ref = _reference_forward(x, params)
    err = float(jnp.max(jnp.abs(out - ref)))
    # bf16 activations / layer-2 weights on the MXU path (f32 accumulation)
    # -> slightly looser tolerance than the all-f32 version.
    assert jnp.allclose(out, ref, rtol=2e-2, atol=2e-2), f"mismatch vs reference conv: {err}"

    print("KERNEL_OK")
</pallas_src>

<mosaic_0001>
module attributes {stable_mosaic.version = 11 : i64} {
  func.func @_fused_srcnn_kernel(%arg0: i32, %arg1: memref<1x1x512xf32, #tpu.memory_space<vmem>>, %arg2: memref<1x384xf32, #tpu.memory_space<vmem>>, %arg3: memref<64x9xf32, #tpu.memory_space<vmem>>, %arg4: memref<64x1xf32, #tpu.memory_space<vmem>>, %arg5: memref<9x32x64xbf16, #tpu.memory_space<vmem>>, %arg6: memref<32x1xf32, #tpu.memory_space<vmem>>, %arg7: memref<32x9xf32, #tpu.memory_space<vmem>>, %arg8: memref<1x1xf32, #tpu.memory_space<vmem>>, %arg9: memref<1x1x384xf32, #tpu.memory_space<vmem>>, %arg10: memref<64x640xbf16, #tpu.memory_space<vmem>>, %arg11: memref<32x640xbf16, #tpu.memory_space<vmem>>) attributes {dimension_semantics = [#tpu.dimension_semantics<parallel>], iteration_bounds = array<i64: 2>, scalar_prefetch = 0 : i64, scratch_operands = 2 : i64, tpu.core_type = #tpu.core_type<tc>, window_params = [{transform_indices = @transform_0, window_bounds = array<i64: 1, 1, 512>}, {pipeline_mode = #tpu.pipeline_mode<synchronous>, transform_indices = @transform_1, window_bounds = array<i64: 1, 384>}, {pipeline_mode = #tpu.pipeline_mode<synchronous>, transform_indices = @transform_2, window_bounds = array<i64: 64, 9>}, {pipeline_mode = #tpu.pipeline_mode<synchronous>, transform_indices = @transform_3, window_bounds = array<i64: 64, 1>}, {pipeline_mode = #tpu.pipeline_mode<synchronous>, transform_indices = @transform_4, window_bounds = array<i64: 9, 32, 64>}, {pipeline_mode = #tpu.pipeline_mode<synchronous>, transform_indices = @transform_5, window_bounds = array<i64: 32, 1>}, {pipeline_mode = #tpu.pipeline_mode<synchronous>, transform_indices = @transform_6, window_bounds = array<i64: 32, 9>}, {pipeline_mode = #tpu.pipeline_mode<synchronous>, transform_indices = @transform_7, window_bounds = array<i64: 1, 1>}, {transform_indices = @transform_8, window_bounds = array<i64: 1, 1, 384>}]} {
    %cst = arith.constant 0.000000e+00 : bf16
    %0 = vector.broadcast %cst : bf16 to vector<64x128xbf16>
    %cst_0 = arith.constant 0.000000e+00 : bf16
    %1 = vector.broadcast %cst_0 : bf16 to vector<32x128xbf16>
    %c0 = arith.constant 0 : index
    %c0_1 = arith.constant 0 : index
    %2 = vector.load %arg10[%c0, %c0_1] : memref<64x640xbf16, #tpu.memory_space<vmem>>, vector<64x128xbf16>
    tpu.vector_store %arg10[%c0, %c0_1], %0 {strides = array<i32>} : memref<64x640xbf16, #tpu.memory_space<vmem>>, vector<64x128xbf16>,
    %c0_2 = arith.constant 0 : index
    %c512 = arith.constant 512 : index
    %3 = vector.load %arg10[%c0_2, %c512] : memref<64x640xbf16, #tpu.memory_space<vmem>>, vector<64x128xbf16>
    tpu.vector_store %arg10[%c0_2, %c512], %0 {strides = array<i32>} : memref<64x640xbf16, #tpu.memory_space<vmem>>, vector<64x128xbf16>,
    %c0_3 = arith.constant 0 : index
    %c0_4 = arith.constant 0 : index
    %4 = vector.load %arg11[%c0_3, %c0_4] : memref<32x640xbf16, #tpu.memory_space<vmem>>, vector<32x128xbf16>
    tpu.vector_store %arg11[%c0_3, %c0_4], %1 {strides = array<i32>} : memref<32x640xbf16, #tpu.memory_space<vmem>>, vector<32x128xbf16>,
    %c0_5 = arith.constant 0 : index
    %c512_6 = arith.constant 512 : index
    %5 = vector.load %arg11[%c0_5, %c512_6] : memref<32x640xbf16, #tpu.memory_space<vmem>>, vector<32x128xbf16>
    tpu.vector_store %arg11[%c0_5, %c512_6], %1 {strides = array<i32>} : memref<32x640xbf16, #tpu.memory_space<vmem>>, vector<32x128xbf16>,
    %cst_7 = arith.constant 0.000000e+00 : f32
    %6 = vector.broadcast %cst_7 : f32 to vector<64x384xf32>
    %c0_8 = arith.constant 0 : index
    %c0_9 = arith.constant 0 : index
    %c0_10 = arith.constant 0 : index
    %7 = vector.load %arg1[%c0_8, %c0_9, %c0_10] : memref<1x1x512xf32, #tpu.memory_space<vmem>>, vector<1x1x384xf32>
    %8 = vector.shape_cast %7 : vector<1x1x384xf32> to vector<1x384xf32>
    %c0_11 = arith.constant 0 : index
    %c0_12 = arith.constant 0 : index
    %9 = vector.load %arg3[%c0_11, %c0_12] : memref<64x9xf32, #tpu.memory_space<vmem>>, vector<64x1xf32>
    %10 = vector.broadcast %9 : vector<64x1xf32> to vector<64x384xf32>
    %11 = vector.broadcast %8 : vector<1x384xf32> to vector<64x384xf32>
    %12 = arith.mulf %10, %11 : vector<64x384xf32>
    %13 = arith.addf %6, %12 : vector<64x384xf32>
    %c0_13 = arith.constant 0 : index
    %c0_14 = arith.constant 0 : index
    %c1 = arith.constant 1 : index
    %14 = vector.load %arg1[%c0_13, %c0_14, %c1] : memref<1x1x512xf32, #tpu.memory_space<vmem>>, vector<1x1x384xf32>
    %15 = vector.shape_cast %14 : vector<1x1x384xf32> to vector<1x384xf32>
    %c0_15 = arith.constant 0 : index
    %c1_16 = arith.constant 1 : index
    %16 = vector.load %arg3[%c0_15, %c1_16] : memref<64x9xf32, #tpu.memory_space<vmem>>, vector<64x1xf32>
    %17 = vector.broadcast %16 : vector<64x1xf32> to vector<64x384xf32>
    %18 = vector.broadcast %15 : vector<1x384xf32> to vector<64x384xf32>
    %19 = arith.mulf %17, %18 : vector<64x384xf32>
    %20 = arith.addf %13, %19 : vector<64x384xf32>
    %c0_17 = arith.constant 0 : index
    %c0_18 = arith.constant 0 : index
    %c2 = arith.constant 2 : index
    %21 = vector.load %arg1[%c0_17, %c0_18, %c2] : memref<1x1x512xf32, #tpu.memory_space<vmem>>, vector<1x1x384xf32>
    %22 = vector.shape_cast %21 : vector<1x1x384xf32> to vector<1x384xf32>
    %c0_19 = arith.constant 0 : index
    %c2_20 = arith.constant 2 : index
    %23 = vector.load %arg3[%c0_19, %c2_20] : memref<64x9xf32, #tpu.memory_space<vmem>>, vector<64x1xf32>
    %24 = vector.broadcast %23 : vector<64x1xf32> to vector<64x384xf32>
    %25 = vector.broadcast %22 : vector<1x384xf32> to vector<64x384xf32>
    %26 = arith.mulf %24, %25 : vector<64x384xf32>
    %27 = arith.addf %20, %26 : vector<64x384xf32>
    %c0_21 = arith.constant 0 : index
    %c0_22 = arith.constant 0 : index
    %c18 = arith.constant 18 : index
    %28 = vector.load %arg1[%c0_21, %c0_22, %c18] : memref<1x1x512xf32, #tpu.memory_space<vmem>>, vector<1x1x384xf32>
    %29 = vector.shape_cast %28 : vector<1x1x384xf32> to vector<1x384xf32>
    %c0_23 = arith.constant 0 : index
    %c3 = arith.constant 3 : index
    %30 = vector.load %arg3[%c0_23, %c3] : memref<64x9xf32, #tpu.memory_space<vmem>>, vector<64x1xf32>
    %31 = vector.broadcast %30 : vector<64x1xf32> to vector<64x384xf32>
    %32 = vector.broadcast %29 : vector<1x384xf32> to vector<64x384xf32>
    %33 = arith.mulf %31, %32 : vector<64x384xf32>
    %34 = arith.addf %27, %33 : vector<64x384xf32>
    %c0_24 = arith.constant 0 : index
    %c0_25 = arith.constant 0 : index
    %c19 = arith.constant 19 : index
    %35 = vector.load %arg1[%c0_24, %c0_25, %c19] : memref<1x1x512xf32, #tpu.memory_space<vmem>>, vector<1x1x384xf32>
    %36 = vector.shape_cast %35 : vector<1x1x384xf32> to vector<1x384xf32>
    %c0_26 = arith.constant 0 : index
    %c4 = arith.constant 4 : index
    %37 = vector.load %arg3[%c0_26, %c4] : memref<64x9xf32, #tpu.memory_space<vmem>>, vector<64x1xf32>
    %38 = vector.broadcast %37 : vector<64x1xf32> to vector<64x384xf32>
    %39 = vector.broadcast %36 : vector<1x384xf32> to vector<64x384xf32>
    %40 = arith.mulf %38, %39 : vector<64x384xf32>
    %41 = arith.addf %34, %40 : vector<64x384xf32>
    %c0_27 = arith.constant 0 : index
    %c0_28 = arith.constant 0 : index
    %c20 = arith.constant 20 : index
    %42 = vector.load %arg1[%c0_27, %c0_28, %c20] : memref<1x1x512xf32, #tpu.memory_space<vmem>>, vector<1x1x384xf32>
    %43 = vector.shape_cast %42 : vector<1x1x384xf32> to vector<1x384xf32>
    %c0_29 = arith.constant 0 : index
    %c5 = arith.constant 5 : index
    %44 = vector.load %arg3[%c0_29, %c5] : memref<64x9xf32, #tpu.memory_space<vmem>>, vector<64x1xf32>
    %45 = vector.broadcast %44 : vector<64x1xf32> to vector<64x384xf32>
    %46 = vector.broadcast %43 : vector<1x384xf32> to vector<64x384xf32>
    %47 = arith.mulf %45, %46 : vector<64x384xf32>
    %48 = arith.addf %41, %47 : vector<64x384xf32>
    %c0_30 = arith.constant 0 : index
    %c0_31 = arith.constant 0 : index
    %c36 = arith.constant 36 : index
    %49 = vector.load %arg1[%c0_30, %c0_31, %c36] : memref<1x1x512xf32, #tpu.memory_space<vmem>>, vector<1x1x384xf32>
    %50 = vector.shape_cast %49 : vector<1x1x384xf32> to vector<1x384xf32>
    %c0_32 = arith.constant 0 : index
    %c6 = arith.constant 6 : index
    %51 = vector.load %arg3[%c0_32, %c6] : memref<64x9xf32, #tpu.memory_space<vmem>>, vector<64x1xf32>
    %52 = vector.broadcast %51 : vector<64x1xf32> to vector<64x384xf32>
    %53 = vector.broadcast %50 : vector<1x384xf32> to vector<64x384xf32>
    %54 = arith.mulf %52, %53 : vector<64x384xf32>
    %55 = arith.addf %48, %54 : vector<64x384xf32>
    %c0_33 = arith.constant 0 : index
    %c0_34 = arith.constant 0 : index
    %c37 = arith.constant 37 : index
    %56 = vector.load %arg1[%c0_33, %c0_34, %c37] : memref<1x1x512xf32, #tpu.memory_space<vmem>>, vector<1x1x384xf32>
    %57 = vector.shape_cast %56 : vector<1x1x384xf32> to vector<1x384xf32>
    %c0_35 = arith.constant 0 : index
    %c7 = arith.constant 7 : index
    %58 = vector.load %arg3[%c0_35, %c7] : memref<64x9xf32, #tpu.memory_space<vmem>>, vector<64x1xf32>
    %59 = vector.broadcast %58 : vector<64x1xf32> to vector<64x384xf32>
    %60 = vector.broadcast %57 : vector<1x384xf32> to vector<64x384xf32>
    %61 = arith.mulf %59, %60 : vector<64x384xf32>
    %62 = arith.addf %55, %61 : vector<64x384xf32>
    %c0_36 = arith.constant 0 : index
    %c0_37 = arith.constant 0 : index
    %c38 = arith.constant 38 : index
    %63 = vector.load %arg1[%c0_36, %c0_37, %c38] : memref<1x1x512xf32, #tpu.memory_space<vmem>>, vector<1x1x384xf32>
    %64 = vector.shape_cast %63 : vector<1x1x384xf32> to vector<1x384xf32>
    %c0_38 = arith.constant 0 : index
    %c8 = arith.constant 8 : index
    %65 = vector.load %arg3[%c0_38, %c8] : memref<64x9xf32, #tpu.memory_space<vmem>>, vector<64x1xf32>
    %66 = vector.broadcast %65 : vector<64x1xf32> to vector<64x384xf32>
    %67 = vector.broadcast %64 : vector<1x384xf32> to vector<64x384xf32>
    %68 = arith.mulf %66, %67 : vector<64x384xf32>
    %69 = arith.addf %62, %68 : vector<64x384xf32>
    %c0_39 = arith.constant 0 : index
    %c0_40 = arith.constant 0 : index
    %70 = vector.load %arg2[%c0_39, %c0_40] : memref<1x384xf32, #tpu.memory_space<vmem>>, vector<1x384xf32>
    %c0_41 = arith.constant 0 : index
    %c0_42 = arith.constant 0 : index
    %71 = vector.load %arg4[%c0_41, %c0_42] : memref<64x1xf32, #tpu.memory_space<vmem>>, vector<64x1xf32>
    %72 = vector.broadcast %71 : vector<64x1xf32> to vector<64x384xf32>
    %73 = arith.addf %69, %72 : vector<64x384xf32>
    %cst_43 = arith.constant 0.000000e+00 : f32
    %74 = vector.broadcast %cst_43 : f32 to vector<64x384xf32>
    %75 = arith.maximumf %73, %74 : vector<64x384xf32>
    %76 = vector.broadcast %70 : vector<1x384xf32> to vector<64x384xf32>
    %77 = arith.mulf %75, %76 : vector<64x384xf32>
    %78 = arith.truncf %77 : vector<64x384xf32> to vector<64x384xbf16>
    %c0_44 = arith.constant 0 : index
    %c128 = arith.constant 128 : index
    %79 = vector.load %arg10[%c0_44, %c128] : memref<64x640xbf16, #tpu.memory_space<vmem>>, vector<64x384xbf16>
    tpu.vector_store %arg10[%c0_44, %c128], %78 {strides = array<i32>} : memref<64x640xbf16, #tpu.memory_space<vmem>>, vector<64x384xbf16>,
    %cst_45 = arith.constant 0.000000e+00 : f32
    %80 = vector.broadcast %cst_45 : f32 to vector<32x384xf32>
    %c0_46 = arith.constant 0 : index
    %c109 = arith.constant 109 : index
    %81 = vector.load %arg10[%c0_46, %c109] : memref<64x640xbf16, #tpu.memory_space<vmem>>, vector<64x384xbf16>
    %c0_47 = arith.constant 0 : index
    %c0_48 = arith.constant 0 : index
    %c0_49 = arith.constant 0 : index
    %82 = vector.load %arg5[%c0_47, %c0_48, %c0_49] : memref<9x32x64xbf16, #tpu.memory_space<vmem>>, vector<1x32x64xbf16>
    %83 = vector.shape_cast %82 : vector<1x32x64xbf16> to vector<32x64xbf16>
    %cst_50 = arith.constant dense<0.000000e+00> : vector<32x384xf32>
    %84 = tpu.matmul %83, %81, %cst_50 {dimension_numbers = #tpu.dot_dimension_numbers<[1], [0], [0], [1], [0, 0, 1, 1], [], []>} : vector<32x64xbf16>, vector<64x384xbf16>, vector<32x384xf32> -> vector<32x384xf32>
    %85 = arith.addf %80, %84 : vector<32x384xf32>
    %c0_51 = arith.constant 0 : index
    %c110 = arith.constant 110 : index
    %86 = vector.load %arg10[%c0_51, %c110] : memref<64x640xbf16, #tpu.memory_space<vmem>>, vector<64x384xbf16>
    %c1_52 = arith.constant 1 : index
    %c0_53 = arith.constant 0 : index
    %c0_54 = arith.constant 0 : index
    %87 = vector.load %arg5[%c1_52, %c0_53, %c0_54] : memref<9x32x64xbf16, #tpu.memory_space<vmem>>, vector<1x32x64xbf16>
    %88 = vector.shape_cast %87 : vector<1x32x64xbf16> to vector<32x64xbf16>
    %cst_55 = arith.constant dense<0.000000e+00> : vector<32x384xf32>
    %89 = tpu.matmul %88, %86, %cst_55 {dimension_numbers = #tpu.dot_dimension_numbers<[1], [0], [0], [1], [0, 0, 1, 1], [], []>} : vector<32x64xbf16>, vector<64x384xbf16>, vector<32x384xf32> -> vector<32x384xf32>
    %90 = arith.addf %85, %89 : vector<32x384xf32>
    %c0_56 = arith.constant 0 : index
    %c111 = arith.constant 111 : index
    %91 = vector.load %arg10[%c0_56, %c111] : memref<64x640xbf16, #tpu.memory_space<vmem>>, vector<64x384xbf16>
    %c2_57 = arith.constant 2 : index
    %c0_58 = arith.constant 0 : index
    %c0_59 = arith.constant 0 : index
    %92 = vector.load %arg5[%c2_57, %c0_58, %c0_59] : memref<9x32x64xbf16, #tpu.memory_space<vmem>>, vector<1x32x64xbf16>
    %93 = vector.shape_cast %92 : vector<1x32x64xbf16> to vector<32x64xbf16>
    %cst_60 = arith.constant dense<0.000000e+00> : vector<32x384xf32>
    %94 = tpu.matmul %93, %91, %cst_60 {dimension_numbers = #tpu.dot_dimension_numbers<[1], [0], [0], [1], [0, 0, 1, 1], [], []>} : vector<32x64xbf16>, vector<64x384xbf16>, vector<32x384xf32> -> vector<32x384xf32>
    %95 = arith.addf %90, %94 : vector<32x384xf32>
    %c0_61 = arith.constant 0 : index
    %c127 = arith.constant 127 : index
    %96 = vector.load %arg10[%c0_61, %c127] : memref<64x640xbf16, #tpu.memory_space<vmem>>, vector<64x384xbf16>
    %c3_62 = arith.constant 3 : index
    %c0_63 = arith.constant 0 : index
    %c0_64 = arith.constant 0 : index
    %97 = vector.load %arg5[%c3_62, %c0_63, %c0_64] : memref<9x32x64xbf16, #tpu.memory_space<vmem>>, vector<1x32x64xbf16>
    %98 = vector.shape_cast %97 : vector<1x32x64xbf16> to vector<32x64xbf16>
    %cst_65 = arith.constant dense<0.000000e+00> : vector<32x384xf32>
    %99 = tpu.matmul %98, %96, %cst_65 {dimension_numbers = #tpu.dot_dimension_numbers<[1], [0], [0], [1], [0, 0, 1, 1], [], []>} : vector<32x64xbf16>, vector<64x384xbf16>, vector<32x384xf32> -> vector<32x384xf32>
    %100 = arith.addf %95, %99 : vector<32x384xf32>
    %c0_66 = arith.constant 0 : index
    %c128_67 = arith.constant 128 : index
    %101 = vector.load %arg10[%c0_66, %c128_67] : memref<64x640xbf16, #tpu.memory_space<vmem>>, vector<64x384xbf16>
    %c4_68 = arith.constant 4 : index
    %c0_69 = arith.constant 0 : index
    %c0_70 = arith.constant 0 : index
    %102 = vector.load %arg5[%c4_68, %c0_69, %c0_70] : memref<9x32x64xbf16, #tpu.memory_space<vmem>>, vector<1x32x64xbf16>
    %103 = vector.shape_cast %102 : vector<1x32x64xbf16> to vector<32x64xbf16>
    %cst_71 = arith.constant dense<0.000000e+00> : vector<32x384xf32>
    %104 = tpu.matmul %103, %101, %cst_71 {dimension_numbers = #tpu.dot_dimension_numbers<[1], [0], [0], [1], [0, 0, 1, 1], [], []>} : vector<32x64xbf16>, vector<64x384xbf16>, vector<32x384xf32> -> vector<32x384xf32>
    %105 = arith.addf %100, %104 : vector<32x384xf32>
    %c0_72 = arith.constant 0 : index
    %c129 = arith.constant 129 : index
    %106 = vector.load %arg10[%c0_72, %c129] : memref<64x640xbf16, #tpu.memory_space<vmem>>, vector<64x384xbf16>
    %c5_73 = arith.constant 5 : index
    %c0_74 = arith.constant 0 : index
    %c0_75 = arith.constant 0 : index
    %107 = vector.load %arg5[%c5_73, %c0_74, %c0_75] : memref<9x32x64xbf16, #tpu.memory_space<vmem>>, vector<1x32x64xbf16>
    %108 = vector.shape_cast %107 : vector<1x32x64xbf16> to vector<32x64xbf16>
    %cst_76 = arith.constant dense<0.000000e+00> : vector<32x384xf32>
    %109 = tpu.matmul %108, %106, %cst_76 {dimension_numbers = #tpu.dot_dimension_numbers<[1], [0], [0], [1], [0, 0, 1, 1], [], []>} : vector<32x64xbf16>, vector<64x384xbf16>, vector<32x384xf32> -> vector<32x384xf32>
    %110 = arith.addf %105, %109 : vector<32x384xf32>
    %c0_77 = arith.constant 0 : index
    %c145 = arith.constant 145 : index
    %111 = vector.load %arg10[%c0_77, %c145] : memref<64x640xbf16, #tpu.memory_space<vmem>>, vector<64x384xbf16>
    %c6_78 = arith.constant 6 : index
    %c0_79 = arith.constant 0 : index
    %c0_80 = arith.constant 0 : index
    %112 = vector.load %arg5[%c6_78, %c0_79, %c0_80] : memref<9x32x64xbf16, #tpu.memory_space<vmem>>, vector<1x32x64xbf16>
    %113 = vector.shape_cast %112 : vector<1x32x64xbf16> to vector<32x64xbf16>
    %cst_81 = arith.constant dense<0.000000e+00> : vector<32x384xf32>
    %114 = tpu.matmul %113, %111, %cst_81 {dimension_numbers = #tpu.dot_dimension_numbers<[1], [0], [0], [1], [0, 0, 1, 1], [], []>} : vector<32x64xbf16>, vector<64x384xbf16>, vector<32x384xf32> -> vector<32x384xf32>
    %115 = arith.addf %110, %114 : vector<32x384xf32>
    %c0_82 = arith.constant 0 : index
    %c146 = arith.constant 146 : index
    %116 = vector.load %arg10[%c0_82, %c146] : memref<64x640xbf16, #tpu.memory_space<vmem>>, vector<64x384xbf16>
    %c7_83 = arith.constant 7 : index
    %c0_84 = arith.constant 0 : index
    %c0_85 = arith.constant 0 : index
    %117 = vector.load %arg5[%c7_83, %c0_84, %c0_85] : memref<9x32x64xbf16, #tpu.memory_space<vmem>>, vector<1x32x64xbf16>
    %118 = vector.shape_cast %117 : vector<1x32x64xbf16> to vector<32x64xbf16>
    %cst_86 = arith.constant dense<0.000000e+00> : vector<32x384xf32>
    %119 = tpu.matmul %118, %116, %cst_86 {dimension_numbers = #tpu.dot_dimension_numbers<[1], [0], [0], [1], [0, 0, 1, 1], [], []>} : vector<32x64xbf16>, vector<64x384xbf16>, vector<32x384xf32> -> vector<32x384xf32>
    %120 = arith.addf %115, %119 : vector<32x384xf32>
    %c0_87 = arith.constant 0 : index
    %c147 = arith.constant 147 : index
    %121 = vector.load %arg10[%c0_87, %c147] : memref<64x640xbf16, #tpu.memory_space<vmem>>, vector<64x384xbf16>
    %c8_88 = arith.constant 8 : index
    %c0_89 = arith.constant 0 : index
    %c0_90 = arith.constant 0 : index
    %122 = vector.load %arg5[%c8_88, %c0_89, %c0_90] : memref<9x32x64xbf16, #tpu.memory_space<vmem>>, vector<1x32x64xbf16>
    %123 = vector.shape_cast %122 : vector<1x32x64xbf16> to vector<32x64xbf16>
    %cst_91 = arith.constant dense<0.000000e+00> : vector<32x384xf32>
    %124 = tpu.matmul %123, %121, %cst_91 {dimension_numbers = #tpu.dot_dimension_numbers<[1], [0], [0], [1], [0, 0, 1, 1], [], []>} : vector<32x64xbf16>, vector<64x384xbf16>, vector<32x384xf32> -> vector<32x384xf32>
    %125 = arith.addf %120, %124 : vector<32x384xf32>
    %c0_92 = arith.constant 0 : index
    %c0_93 = arith.constant 0 : index
    %126 = vector.load %arg2[%c0_92, %c0_93] : memref<1x384xf32, #tpu.memory_space<vmem>>, vector<1x384xf32>
    %c0_94 = arith.constant 0 : index
    %c0_95 = arith.constant 0 : index
    %127 = vector.load %arg6[%c0_94, %c0_95] : memref<32x1xf32, #tpu.memory_space<vmem>>, vector<32x1xf32>
    %128 = vector.broadcast %127 : vector<32x1xf32> to vector<32x384xf32>
    %129 = arith.addf %125, %128 : vector<32x384xf32>
    %cst_96 = arith.constant 0.000000e+00 : f32
    %130 = vector.broadcast %cst_96 : f32 to vector<32x384xf32>
    %131 = arith.maximumf %129, %130 : vector<32x384xf32>
    %132 = vector.broadcast %126 : vector<1x384xf32> to vector<32x384xf32>
    %133 = arith.mulf %131, %132 : vector<32x384xf32>
    %134 = arith.truncf %133 : vector<32x384xf32> to vector<32x384xbf16>
    %c0_97 = arith.constant 0 : index
    %c128_98 = arith.constant 128 : index
    %135 = vector.load %arg11[%c0_97, %c128_98] : memref<32x640xbf16, #tpu.memory_space<vmem>>, vector<32x384xbf16>
    tpu.vector_store %arg11[%c0_97, %c128_98], %134 {strides = array<i32>} : memref<32x640xbf16, #tpu.memory_space<vmem>>, vector<32x384xbf16>,
    %cst_99 = arith.constant 0.000000e+00 : f32
    %136 = vector.broadcast %cst_99 : f32 to vector<32x384xf32>
    %c0_100 = arith.constant 0 : index
    %c109_101 = arith.constant 109 : index
    %137 = vector.load %arg11[%c0_100, %c109_101] : memref<32x640xbf16, #tpu.memory_space<vmem>>, vector<32x384xbf16>
    %c0_102 = arith.constant 0 : index
    %c0_103 = arith.constant 0 : index
    %138 = vector.load %arg7[%c0_102, %c0_103] : memref<32x9xf32, #tpu.memory_space<vmem>>, vector<32x1xf32>
    %139 = arith.extf %137 : vector<32x384xbf16> to vector<32x384xf32>
    %140 = vector.broadcast %138 : vector<32x1xf32> to vector<32x384xf32>
    %141 = arith.mulf %140, %139 : vector<32x384xf32>
    %142 = arith.addf %136, %141 : vector<32x384xf32>
    %c0_104 = arith.constant 0 : index
    %c110_105 = arith.constant 110 : index
    %143 = vector.load %arg11[%c0_104, %c110_105] : memref<32x640xbf16, #tpu.memory_space<vmem>>, vector<32x384xbf16>
    %c0_106 = arith.constant 0 : index
    %c1_107 = arith.constant 1 : index
    %144 = vector.load %arg7[%c0_106, %c1_107] : memref<32x9xf32, #tpu.memory_space<vmem>>, vector<32x1xf32>
    %145 = arith.extf %143 : vector<32x384xbf16> to vector<32x384xf32>
    %146 = vector.broadcast %144 : vector<32x1xf32> to vector<32x384xf32>
    %147 = arith.mulf %146, %145 : vector<32x384xf32>
    %148 = arith.addf %142, %147 : vector<32x384xf32>
    %c0_108 = arith.constant 0 : index
    %c111_109 = arith.constant 111 : index
    %149 = vector.load %arg11[%c0_108, %c111_109] : memref<32x640xbf16, #tpu.memory_space<vmem>>, vector<32x384xbf16>
    %c0_110 = arith.constant 0 : index
    %c2_111 = arith.constant 2 : index
    %150 = vector.load %arg7[%c0_110, %c2_111] : memref<32x9xf32, #tpu.memory_space<vmem>>, vector<32x1xf32>
    %151 = arith.extf %149 : vector<32x384xbf16> to vector<32x384xf32>
    %152 = vector.broadcast %150 : vector<32x1xf32> to vector<32x384xf32>
    %153 = arith.mulf %152, %151 : vector<32x384xf32>
    %154 = arith.addf %148, %153 : vector<32x384xf32>
    %c0_112 = arith.constant 0 : index
    %c127_113 = arith.constant 127 : index
    %155 = vector.load %arg11[%c0_112, %c127_113] : memref<32x640xbf16, #tpu.memory_space<vmem>>, vector<32x384xbf16>
    %c0_114 = arith.constant 0 : index
    %c3_115 = arith.constant 3 : index
    %156 = vector.load %arg7[%c0_114, %c3_115] : memref<32x9xf32, #tpu.memory_space<vmem>>, vector<32x1xf32>
    %157 = arith.extf %155 : vector<32x384xbf16> to vector<32x384xf32>
    %158 = vector.broadcast %156 : vector<32x1xf32> to vector<32x384xf32>
    %159 = arith.mulf %158, %157 : vector<32x384xf32>
    %160 = arith.addf %154, %159 : vector<32x384xf32>
    %c0_116 = arith.constant 0 : index
    %c128_117 = arith.constant 128 : index
    %161 = vector.load %arg11[%c0_116, %c128_117] : memref<32x640xbf16, #tpu.memory_space<vmem>>, vector<32x384xbf16>
    %c0_118 = arith.constant 0 : index
    %c4_119 = arith.constant 4 : index
    %162 = vector.load %arg7[%c0_118, %c4_119] : memref<32x9xf32, #tpu.memory_space<vmem>>, vector<32x1xf32>
    %163 = arith.extf %161 : vector<32x384xbf16> to vector<32x384xf32>
    %164 = vector.broadcast %162 : vector<32x1xf32> to vector<32x384xf32>
    %165 = arith.mulf %164, %163 : vector<32x384xf32>
    %166 = arith.addf %160, %165 : vector<32x384xf32>
    %c0_120 = arith.constant 0 : index
    %c129_121 = arith.constant 129 : index
    %167 = vector.load %arg11[%c0_120, %c129_121] : memref<32x640xbf16, #tpu.memory_space<vmem>>, vector<32x384xbf16>
    %c0_122 = arith.constant 0 : index
    %c5_123 = arith.constant 5 : index
    %168 = vector.load %arg7[%c0_122, %c5_123] : memref<32x9xf32, #tpu.memory_space<vmem>>, vector<32x1xf32>
    %169 = arith.extf %167 : vector<32x384xbf16> to vector<32x384xf32>
    %170 = vector.broadcast %168 : vector<32x1xf32> to vector<32x384xf32>
    %171 = arith.mulf %170, %169 : vector<32x384xf32>
    %172 = arith.addf %166, %171 : vector<32x384xf32>
    %c0_124 = arith.constant 0 : index
    %c145_125 = arith.constant 145 : index
    %173 = vector.load %arg11[%c0_124, %c145_125] : memref<32x640xbf16, #tpu.memory_space<vmem>>, vector<32x384xbf16>
    %c0_126 = arith.constant 0 : index
    %c6_127 = arith.constant 6 : index
    %174 = vector.load %arg7[%c0_126, %c6_127] : memref<32x9xf32, #tpu.memory_space<vmem>>, vector<32x1xf32>
    %175 = arith.extf %173 : vector<32x384xbf16> to vector<32x384xf32>
    %176 = vector.broadcast %174 : vector<32x1xf32> to vector<32x384xf32>
    %177 = arith.mulf %176, %175 : vector<32x384xf32>
    %178 = arith.addf %172, %177 : vector<32x384xf32>
    %c0_128 = arith.constant 0 : index
    %c146_129 = arith.constant 146 : index
    %179 = vector.load %arg11[%c0_128, %c146_129] : memref<32x640xbf16, #tpu.memory_space<vmem>>, vector<32x384xbf16>
    %c0_130 = arith.constant 0 : index
    %c7_131 = arith.constant 7 : index
    %180 = vector.load %arg7[%c0_130, %c7_131] : memref<32x9xf32, #tpu.memory_space<vmem>>, vector<32x1xf32>
    %181 = arith.extf %179 : vector<32x384xbf16> to vector<32x384xf32>
    %182 = vector.broadcast %180 : vector<32x1xf32> to vector<32x384xf32>
    %183 = arith.mulf %182, %181 : vector<32x384xf32>
    %184 = arith.addf %178, %183 : vector<32x384xf32>
    %c0_132 = arith.constant 0 : index
    %c147_133 = arith.constant 147 : index
    %185 = vector.load %arg11[%c0_132, %c147_133] : memref<32x640xbf16, #tpu.memory_space<vmem>>, vector<32x384xbf16>
    %c0_134 = arith.constant 0 : index
    %c8_135 = arith.constant 8 : index
    %186 = vector.load %arg7[%c0_134, %c8_135] : memref<32x9xf32, #tpu.memory_space<vmem>>, vector<32x1xf32>
    %187 = arith.extf %185 : vector<32x384xbf16> to vector<32x384xf32>
    %188 = vector.broadcast %186 : vector<32x1xf32> to vector<32x384xf32>
    %189 = arith.mulf %188, %187 : vector<32x384xf32>
    %190 = arith.addf %184, %189 : vector<32x384xf32>
    %cst_136 = arith.constant dense<0.000000e+00> : vector<384xf32>
    %191 = vector.multi_reduction <add>, %190, %cst_136 [0] : vector<32x384xf32> to vector<384xf32>
    %192 = vector.shape_cast %191 : vector<384xf32> to vector<1x384xf32>
    %c0_137 = arith.constant 0 : index
    %c0_138 = arith.constant 0 : index
    %193 = vector.load %arg8[%c0_137, %c0_138] : memref<1x1xf32, #tpu.memory_space<vmem>>, vector<1x1xf32>
    %194 = vector.broadcast %193 : vector<1x1xf32> to vector<1x384xf32>
    %195 = arith.addf %192, %194 : vector<1x384xf32>
    %cst_139 = arith.constant 0.000000e+00 : f32
    %196 = vector.broadcast %cst_139 : f32 to vector<1x384xf32>
    %197 = arith.maximumf %195, %196 : vector<1x384xf32>
    %198 = vector.shape_cast %197 : vector<1x384xf32> to vector<1x1x384xf32>
    %c0_140 = arith.constant 0 : index
    %c0_141 = arith.constant 0 : index
    %c0_142 = arith.constant 0 : index
    %199 = vector.load %arg9[%c0_140, %c0_141, %c0_142] : memref<1x1x384xf32, #tpu.memory_space<vmem>>, vector<1x1x384xf32>
    tpu.vector_store %arg9[%c0_140, %c0_141, %c0_142], %198 {strides = array<i32>} : memref<1x1x384xf32, #tpu.memory_space<vmem>>, vector<1x1x384xf32>,
    return
  }
  func.func @transform_0(%arg0: i32) -> (i32, i32, i32) {
    %c0_i32 = arith.constant 0 : i32
    %c0_i32_0 = arith.constant 0 : i32
    %c0_i32_1 = arith.constant 0 : i32
    return %arg0, %c0_i32, %c0_i32_0 : i32, i32, i32
  }
  func.func @transform_1(%arg0: i32) -> (i32, i32) {
    %c0_i32 = arith.constant 0 : i32
    %c0_i32_0 = arith.constant 0 : i32
    %c0_i32_1 = arith.constant 0 : i32
    return %c0_i32, %c0_i32_0 : i32, i32
  }
  func.func @transform_2(%arg0: i32) -> (i32, i32) {
    %c0_i32 = arith.constant 0 : i32
    %c0_i32_0 = arith.constant 0 : i32
    %c0_i32_1 = arith.constant 0 : i32
    return %c0_i32, %c0_i32_0 : i32, i32
  }
  func.func @transform_3(%arg0: i32) -> (i32, i32) {
    %c0_i32 = arith.constant 0 : i32
    %c0_i32_0 = arith.constant 0 : i32
    %c0_i32_1 = arith.constant 0 : i32
    return %c0_i32, %c0_i32_0 : i32, i32
  }
  func.func @transform_4(%arg0: i32) -> (i32, i32, i32) {
    %c0_i32 = arith.constant 0 : i32
    %c0_i32_0 = arith.constant 0 : i32
    %c0_i32_1 = arith.constant 0 : i32
    %c0_i32_2 = arith.constant 0 : i32
    return %c0_i32, %c0_i32_0, %c0_i32_1 : i32, i32, i32
  }
  func.func @transform_5(%arg0: i32) -> (i32, i32) {
    %c0_i32 = arith.constant 0 : i32
    %c0_i32_0 = arith.constant 0 : i32
    %c0_i32_1 = arith.constant 0 : i32
    return %c0_i32, %c0_i32_0 : i32, i32
  }
  func.func @transform_6(%arg0: i32) -> (i32, i32) {
    %c0_i32 = arith.constant 0 : i32
    %c0_i32_0 = arith.constant 0 : i32
    %c0_i32_1 = arith.constant 0 : i32
    return %c0_i32, %c0_i32_0 : i32, i32
  }
  func.func @transform_7(%arg0: i32) -> (i32, i32) {
    %c0_i32 = arith.constant 0 : i32
    %c0_i32_0 = arith.constant 0 : i32
    %c0_i32_1 = arith.constant 0 : i32
    return %c0_i32, %c0_i32_0 : i32, i32
  }
  func.func @transform_8(%arg0: i32) -> (i32, i32, i32) {
    %c0_i32 = arith.constant 0 : i32
    %c0_i32_0 = arith.constant 0 : i32
    %c0_i32_1 = arith.constant 0 : i32
    return %arg0, %c0_i32, %c0_i32_0 : i32, i32, i32
  }
}

</mosaic_0001>

<llo_original>
// kernel: squeeze.3
$region0: #{squeeze.3}
  %s0 = inlined_call_operand.vmem [shape: f32[2,288], index: 0, kind: input, shape index: {}]
  %s1 = inlined_call_operand.vmem [shape: f32[2,16,18], index: 1, kind: output, shape index: {}]
  $region1: #{squeeze.3} parent=0
    #allocation0 [shape = 'u8[12288]{0}', space=vmem, size = 0x3000, scoped, tag = 'scoped mem for input reshape']
    %s3 = sshllo.u32 0, 2
    %s4 = smul.addr 2, 2
    %s5 = scalar_lea.vmem %s0, %s4
    %v6 = vld [vmem:[%s5] sm:%s3]
    %s7 = scalar_lea.vmem [#allocation0], 16
    %8 = vst [vmem:[%s7] sm:%s3] %v6
    %s9 = scalar_lea.vmem %s0, 2
    %v10 = vld [vmem:[%s9] sm:%s3]
    %s11 = scalar_lea.vmem [#allocation0], 8
    %12 = vst [vmem:[%s11] sm:%s3] %v10
    %v13 = vld [vmem:[%s0] sm:%s3]
    %14 = vst [vmem:[#allocation0] sm:%s3] %v13
    %v15 = vld [vmem:[#allocation0] sm:$0x3]
    %vm16 = vcmask 146432
    %17 = vst.msk [vmem:[%s1] ss:$16 sm:$0x3] %vm16, %v15
    %s18 = scalar_lea.vmem [#allocation0], 16
    %v19 = vld [vmem:[%s18] sm:$0x3]
    %20 = vrot.lane.b32.xlu0 %v19, 114
    %v21 = vpop.permute.xlu0 %20
    %vm22 = vcmask 146432
    %s23 = scalar_lea.vmem %s1, 15
    %24 = vst.msk [vmem:[%s23] ss:$16 sm:$0x3] %vm22, %v21
    %s25 = scalar_lea.vmem [#allocation0], 8
    %v26 = vld [vmem:[%s25] sm:$0x3]
    %27 = vrot.lane.b32.xlu0 %v26, 112
    %v28 = vpop.permute.xlu0 %27
    %vm29 = vcmask 146432
    %s30 = scalar_lea.vmem %s1, 8
    %31 = vst.msk [vmem:[%s30] ss:$16 sm:$0x3] %vm29, %v28
    %v32 = vld [vmem:[#allocation0] sm:$0x3]
    %33 = vrot.lane.b32.xlu0 %v32, 110
    %v34 = vpop.permute.xlu0 %33
    %vm35 = vcmask 146432
    %s36 = scalar_lea.vmem %s1, 1
    %37 = vst.msk [vmem:[%s36] ss:$16 sm:$0x3] %vm35, %v34
    %s38 = scalar_lea.vmem [#allocation0], 8
    %v39 = vld [vmem:[%s38] sm:$0x3]
    %40 = vrot.lane.b32.xlu0 %v39, 94
    %v41 = vpop.permute.xlu0 %40
    %vm42 = vcmask 146432
    %s43 = scalar_lea.vmem %s1, 9
    %44 = vst.msk [vmem:[%s43] ss:$16 sm:$0x3] %vm42, %v41
    %v45 = vld [vmem:[#allocation0] sm:$0x3]
    %46 = vrot.lane.b32.xlu0 %v45, 92
    %v47 = vpop.permute.xlu0 %46
    %vm48 = vcmask 146432
    %s49 = scalar_lea.vmem %s1, 2
    %50 = vst.msk [vmem:[%s49] ss:$16 sm:$0x3] %vm48, %v47
    %s51 = scalar_lea.vmem [#allocation0], 8
    %v52 = vld [vmem:[%s51] sm:$0x3]
    %53 = vrot.lane.b32.xlu0 %v52, 76
    %v54 = vpop.permute.xlu0 %53
    %vm55 = vcmask 146432
    %s56 = scalar_lea.vmem %s1, 10
    %57 = vst.msk [vmem:[%s56] ss:$16 sm:$0x3] %vm55, %v54
    %v58 = vld [vmem:[#allocation0] sm:$0x3]
    %59 = vrot.lane.b32.xlu0 %v58, 74
    %v60 = vpop.permute.xlu0 %59
    %vm61 = vcmask 146432
    %s62 = scalar_lea.vmem %s1, 3
    %63 = vst.msk [vmem:[%s62] ss:$16 sm:$0x3] %vm61, %v60
    %s64 = scalar_lea.vmem [#allocation0], 8
    %v65 = vld [vmem:[%s64] sm:$0x3]
    %66 = vrot.lane.b32.xlu0 %v65, 58
    %v67 = vpop.permute.xlu0 %66
    %vm68 = vcmask 146432
    %s69 = scalar_lea.vmem %s1, 11
    %70 = vst.msk [vmem:[%s69] ss:$16 sm:$0x3] %vm68, %v67
    %v71 = vld [vmem:[#allocation0] sm:$0x3]
    %72 = vrot.lane.b32.xlu0 %v71, 56
    %v73 = vpop.permute.xlu0 %72
    %vm74 = vcmask 146432
    %s75 = scalar_lea.vmem %s1, 4
    %76 = vst.msk [vmem:[%s75] ss:$16 sm:$0x3] %vm74, %v73
    %s77 = scalar_lea.vmem [#allocation0], 8
    %v78 = vld [vmem:[%s77] sm:$0x3]
    %79 = vrot.lane.b32.xlu0 %v78, 40
    %v80 = vpop.permute.xlu0 %79
    %vm81 = vcmask 146432
    %s82 = scalar_lea.vmem %s1, 12
    %83 = vst.msk [vmem:[%s82] ss:$16 sm:$0x3] %vm81, %v80
    %v84 = vld [vmem:[#allocation0] sm:$0x3]
    %85 = vrot.lane.b32.xlu0 %v84, 38
    %v86 = vpop.permute.xlu0 %85
    %vm87 = vcmask 146432
    %s88 = scalar_lea.vmem %s1, 5
    %89 = vst.msk [vmem:[%s88] ss:$16 sm:$0x3] %vm87, %v86
    %s90 = scalar_lea.vmem [#allocation0], 8
    %v91 = vld [vmem:[%s90] sm:$0x3]
    %92 = vrot.lane.b32.xlu0 %v91, 22
    %v93 = vpop.permute.xlu0 %92
    %vm94 = vcmask 146432
    %s95 = scalar_lea.vmem %s1, 13
    %96 = vst.msk [vmem:[%s95] ss:$16 sm:$0x3] %vm94, %v93
    %v97 = vld [vmem:[#allocation0] sm:$0x3]
    %98 = vrot.lane.b32.xlu0 %v97, 20
    %v99 = vpop.permute.xlu0 %98
    %vm100 = vcmask 146432
    %s101 = scalar_lea.vmem %s1, 6
    %102 = vst.msk [vmem:[%s101] ss:$16 sm:$0x3] %vm100, %v99
    %s103 = scalar_lea.vmem [#allocation0], 8
    %v104 = vld [vmem:[%s103] sm:$0x3]
    %s105 = scalar_lea.vmem [#allocation0], 16
    %v106 = vld [vmem:[%s105] sm:$0x3]
    %vm107 = vcmask 1014784
    %v108 = vsel %vm107, %v106, %v104
    %109 = vrot.lane.b32.xlu0 %v108, 4
    %v110 = vpop.permute.xlu0 %109
    %vm111 = vcmask 31744
    %s112 = scalar_lea.vmem %s1, 14
    %113 = vst.msk [vmem:[%s112] ss:$16 sm:$0x3] %vm111, %v110
    %vm114 = vcmask 146464
    %s115 = scalar_lea.vmem %s1, 14
    %116 = vst.msk [vmem:[%s115] ss:$16 sm:$0x3] %vm114, %v110
    %v117 = vld [vmem:[#allocation0] sm:$0x3]
    %s118 = scalar_lea.vmem [#allocation0], 8
    %v119 = vld [vmem:[%s118] sm:$0x3]
    %vm120 = vcmask 1031168
    %v121 = vsel %vm120, %v119, %v117
    %122 = vrot.lane.b32.xlu0 %v121, 2
    %v123 = vpop.permute.xlu0 %122
    %vm124 = vcmask 15360
    %s125 = scalar_lea.vmem %s1, 7
    %126 = vst.msk [vmem:[%s125] ss:$16 sm:$0x3] %vm124, %v123
    %vm127 = vcmask 146448
    %s128 = scalar_lea.vmem %s1, 7
    %129 = vst.msk [vmem:[%s128] ss:$16 sm:$0x3] %vm127, %v123

// kernel: srcnn_forward_pallas.1
$region0: #{srcnn_forward_pallas.1}
  #allocation0 [shape = 'u32[]', space=smem, size = 0x4, offset = 0x4, fixed_abs, tag = 'smem constant byte address 0x4 - core index']
  #allocation1 [shape = 'u32[144,128]{1,0:T(1,128)}', space=vmem, size = 0x12000, scoped, tag = 'internal scratch']
  #allocation2 [shape = 'bf16[64,640]{1,0:T(16,128)(2,1)}', space=vmem, size = 0x14000, scoped, tag = 'scratch operand']
  #allocation3 [shape = 'bf16[32,640]{1,0:T(16,128)(2,1)}', space=vmem, size = 0xa000, scoped, tag = 'scratch operand']
  #allocation4 [shape = 'f32[1,1]{1,0:T(1,128)S(1)}', space=vmem, size = 0x200, scoped, tag = 'scoped memory for srcnn_forward_pallas.1']
  %s0 = inlined_call_operand.vmem [shape: f32[2,1,512], index: 0, kind: input, shape index: {}]
  %s1 = inlined_call_operand.vmem [shape: f32[1,384], index: 1, kind: input, shape index: {}]
  %s2 = inlined_call_operand.vmem [shape: f32[64,9], index: 2, kind: input, shape index: {}]
  %s3 = inlined_call_operand.vmem [shape: f32[64,1], index: 3, kind: input, shape index: {}]
  %s4 = inlined_call_operand.vmem [shape: bf16[9,32,64], index: 4, kind: input, shape index: {}]
  %s5 = inlined_call_operand.vmem [shape: f32[32,1], index: 5, kind: input, shape index: {}]
  %s6 = inlined_call_operand.vmem [shape: f32[32,9], index: 6, kind: input, shape index: {}]
  %s7 = inlined_call_operand.<no memory space> [shape: f32[1,1], index: 7, kind: input, shape index: {}]
  %s8 = inlined_call_operand.vmem [shape: f32[2,1,384], index: 8, kind: output, shape index: {}]
  %s9 = sld [smem:[#allocation0]]
  $region65: #{srcnn_forward_pallas.1} parent=0
    _
  %s11 = ssub.s32 1, %s9
  %s12 = scalar_select 0, %s11, %s9
  %v13 = vstv %s7
  %14 = vst [vmem:[#allocation4] sm:$0x1] %v13
  loop: start=0, step=1, limit=4
  $region2: #{srcnn_forward_pallas.1} parent=0 // loop_pre_header
    _
  $region3: #{srcnn_forward_pallas.1} parent=0 // loop_header
    %s16 = sphi 0, %s20
    %p17 = scmp.ge.s32.totalorder %s16, 4
    %s26 = sphi 0, %s28
    %s29 = sphi 0, %s26
    %s30 = sphi 0, %s29
    %s46 = sphi 0, %s30
    %s50 = sphi 0, %s50
    %s52 = sphi 0, %s50
    %s53 = sphi 0, %s52
    %s67 = sphi 0, %s53
    %s71 = sphi 0, %s71
    %s73 = sphi 0, %s71
    %s74 = sphi 0, %s73
    %s88 = sphi 0, %s74
    %s92 = sphi 0, %s92
    %s94 = sphi 0, %s92
    %s95 = sphi 0, %s94
    %s109 = sphi 0, %s95
    %s113 = sphi 0, %s113
    %s115 = sphi 0, %s113
    %s116 = sphi 0, %s115
    %s130 = sphi 0, %s116
    %s134 = sphi 0, %s134
    %s136 = sphi 0, %s134
    %s137 = sphi 0, %s136
    %s151 = sphi 0, %s137
    %s155 = sphi 0, %s155
    %s157 = sphi 0, %s155
    %s158 = sphi 0, %s157
    %s172 = sphi 0, %s158
    %s176 = sphi 0, %s176
    %s178 = sphi 0, %s176
    %s179 = sphi 0, %s178
    %s193 = sphi 0, %s179
    %s199 = sphi 0, %s201
    %s202 = sphi 0, %s199
    %s203 = sphi 0, %s202
    %s219 = sphi 0, %s203
  $region4: #{srcnn_forward_pallas.1} parent=0 // loop_header_branch
    %19 = sbr.rel (%p17) target = $region8
  $region5: #{srcnn_forward_pallas.1} parent=0 // loop_body
    %s21 = ssub.s32 %s16, 1
    %s22 = ssub.s32 %s16, 2
    %s23 = sadd.s32 %s16, 1
    %s24 = ssub.s32 %s16, %s23
    %p25 = scmp.eq.s32.totalorder %s24, 0
    %s27 = sadd.s32 %s26, 1
    %s28 = scalar_select %p25, %s26, %s27
    %p31 = pneg %p25
    %p32 = scmp.eq.s32.totalorder %s16, 1
    %p33 = por %p31, %p32
    %p34 = scmp.ne.s32.totalorder %s26, %s29
    %p35 = scmp.eq.s32.totalorder %s16, 0
    %p36 = por %p34, %p35
    %p37 = scmp.ne.s32.totalorder %s26, %s29
    %p38 = scmp.eq.s32.totalorder %s21, 1
    %p39 = por %p37, %p38
    %p40 = scmp.ne.s32.totalorder %s29, %s30
    %p41 = scmp.eq.s32.totalorder %s21, 0
    %p42 = por %p40, %p41
    %p43 = scmp.ne.s32.totalorder %s29, %s30
    %p44 = scmp.eq.s32.totalorder %s22, 1
    %p45 = por %p43, %p44
    %p47 = scmp.ne.s32.totalorder %s30, %s46
    %p48 = scmp.eq.s32.totalorder %s22, 0
    %p49 = por %p47, %p48
    %s51 = sadd.s32 %s50, 1
    %p54 = scmp.eq.s32.totalorder %s16, 1
    %p55 = scmp.ne.s32.totalorder %s50, %s52
    %p56 = scmp.eq.s32.totalorder %s16, 0
    %p57 = por %p55, %p56
    %p58 = scmp.ne.s32.totalorder %s50, %s52
    %p59 = scmp.eq.s32.totalorder %s21, 1
    %p60 = por %p58, %p59
    %p61 = scmp.ne.s32.totalorder %s52, %s53
    %p62 = scmp.eq.s32.totalorder %s21, 0
    %p63 = por %p61, %p62
    %p64 = scmp.ne.s32.totalorder %s52, %s53
    %p65 = scmp.eq.s32.totalorder %s22, 1
    %p66 = por %p64, %p65
    %p68 = scmp.ne.s32.totalorder %s53, %s67
    %p69 = scmp.eq.s32.totalorder %s22, 0
    %p70 = por %p68, %p69
    %s72 = sadd.s32 %s71, 1
    %p75 = scmp.eq.s32.totalorder %s16, 1
    %p76 = scmp.ne.s32.totalorder %s71, %s73
    %p77 = scmp.eq.s32.totalorder %s16, 0
    %p78 = por %p76, %p77
    %p79 = scmp.ne.s32.totalorder %s71, %s73
    %p80 = scmp.eq.s32.totalorder %s21, 1
    %p81 = por %p79, %p80
    %p82 = scmp.ne.s32.totalorder %s73, %s74
    %p83 = scmp.eq.s32.totalorder %s21, 0
    %p84 = por %p82, %p83
    %p85 = scmp.ne.s32.totalorder %s73, %s74
    %p86 = scmp.eq.s32.totalorder %s22, 1
    %p87 = por %p85, %p86
    %p89 = scmp.ne.s32.totalorder %s74, %s88
    %p90 = scmp.eq.s32.totalorder %s22, 0
    %p91 = por %p89, %p90
    %s93 = sadd.s32 %s92, 1
    %p96 = scmp.eq.s32.totalorder %s16, 1
    %p97 = scmp.ne.s32.totalorder %s92, %s94
    %p98 = scmp.eq.s32.totalorder %s16, 0
    %p99 = por %p97, %p98
    %p100 = scmp.ne.s32.totalorder %s92, %s94
    %p101 = scmp.eq.s32.totalorder %s21, 1
    %p102 = por %p100, %p101
    %p103 = scmp.ne.s32.totalorder %s94, %s95
    %p104 = scmp.eq.s32.totalorder %s21, 0
    %p105 = por %p103, %p104
    %p106 = scmp.ne.s32.totalorder %s94, %s95
    %p107 = scmp.eq.s32.totalorder %s22, 1
    %p108 = por %p106, %p107
    %p110 = scmp.ne.s32.totalorder %s95, %s109
    %p111 = scmp.eq.s32.totalorder %s22, 0
    %p112 = por %p110, %p111
    %s114 = sadd.s32 %s113, 1
    %p117 = scmp.eq.s32.totalorder %s16, 1
    %p118 = scmp.ne.s32.totalorder %s113, %s115
    %p119 = scmp.eq.s32.totalorder %s16, 0
    %p120 = por %p118, %p119
    %p121 = scmp.ne.s32.totalorder %s113, %s115
    %p122 = scmp.eq.s32.totalorder %s21, 1
    %p123 = por %p121, %p122
    %p124 = scmp.ne.s32.totalorder %s115, %s116
    %p125 = scmp.eq.s32.totalorder %s21, 0
    %p126 = por %p124, %p125
    %p127 = scmp.ne.s32.totalorder %s115, %s116
    %p128 = scmp.eq.s32.totalorder %s22, 1
    %p129 = por %p127, %p128
    %p131 = scmp.ne.s32.totalorder %s116, %s130
    %p132 = scmp.eq.s32.totalorder %s22, 0
    %p133 = por %p131, %p132
    %s135 = sadd.s32 %s134, 1
    %p138 = scmp.eq.s32.totalorder %s16, 1
    %p139 = scmp.ne.s32.totalorder %s134, %s136
    %p140 = scmp.eq.s32.totalorder %s16, 0
    %p141 = por %p139, %p140
    %p142 = scmp.ne.s32.totalorder %s134, %s136
    %p143 = scmp.eq.s32.totalorder %s21, 1
    %p144 = por %p142, %p143
    %p145 = scmp.ne.s32.totalorder %s136, %s137
    %p146 = scmp.eq.s32.totalorder %s21, 0
    %p147 = por %p145, %p146
    %p148 = scmp.ne.s32.totalorder %s136, %s137
    %p149 = scmp.eq.s32.totalorder %s22, 1
    %p150 = por %p148, %p149
    %p152 = scmp.ne.s32.totalorder %s137, %s151
    %p153 = scmp.eq.s32.totalorder %s22, 0
    %p154 = por %p152, %p153
    %s156 = sadd.s32 %s155, 1
    %p159 = scmp.eq.s32.totalorder %s16, 1
    %p160 = scmp.ne.s32.totalorder %s155, %s157
    %p161 = scmp.eq.s32.totalorder %s16, 0
    %p162 = por %p160, %p161
    %p163 = scmp.ne.s32.totalorder %s155, %s157
    %p164 = scmp.eq.s32.totalorder %s21, 1
    %p165 = por %p163, %p164
    %p166 = scmp.ne.s32.totalorder %s157, %s158
    %p167 = scmp.eq.s32.totalorder %s21, 0
    %p168 = por %p166, %p167
    %p169 = scmp.ne.s32.totalorder %s157, %s158
    %p170 = scmp.eq.s32.totalorder %s22, 1
    %p171 = por %p169, %p170
    %p173 = scmp.ne.s32.totalorder %s158, %s172
    %p174 = scmp.eq.s32.totalorder %s22, 0
    %p175 = por %p173, %p174
    %s177 = sadd.s32 %s176, 1
    %p180 = scmp.eq.s32.totalorder %s16, 1
    %p181 = scmp.ne.s32.totalorder %s176, %s178
    %p182 = scmp.eq.s32.totalorder %s16, 0
    %p183 = por %p181, %p182
    %p184 = scmp.ne.s32.totalorder %s176, %s178
    %p185 = scmp.eq.s32.totalorder %s21, 1
    %p186 = por %p184, %p185
    %p187 = scmp.ne.s32.totalorder %s178, %s179
    %p188 = scmp.eq.s32.totalorder %s21, 0
    %p189 = por %p187, %p188
    %p190 = scmp.ne.s32.totalorder %s178, %s179
    %p191 = scmp.eq.s32.totalorder %s22, 1
    %p192 = por %p190, %p191
    %p194 = scmp.ne.s32.totalorder %s179, %s193
    %p195 = scmp.eq.s32.totalorder %s22, 0
    %p196 = por %p194, %p195
    %s197 = ssub.s32 %s16, %s23
    %p198 = scmp.eq.s32.totalorder %s197, 0
    %s200 = sadd.s32 %s199, 1
    %s201 = scalar_select %p198, %s199, %s200
    %p204 = pneg %p198
    %p205 = scmp.eq.s32.totalorder %s16, 1
    %p206 = por %p204, %p205
    %p207 = scmp.ne.s32.totalorder %s199, %s202
    %p208 = scmp.eq.s32.totalorder %s16, 0
    %p209 = por %p207, %p208
    %p210 = scmp.ne.s32.totalorder %s199, %s202
    %p211 = scmp.eq.s32.totalorder %s21, 1
    %p212 = por %p210, %p211
    %p213 = scmp.ne.s32.totalorder %s202, %s203
    %p214 = scmp.eq.s32.totalorder %s21, 0
    %p215 = por %p213, %p214
    %p216 = scmp.ne.s32.totalorder %s202, %s203
    %p217 = scmp.eq.s32.totalorder %s22, 1
    %p218 = por %p216, %p217
    %p220 = scmp.ne.s32.totalorder %s203, %s219
    %p221 = scmp.eq.s32.totalorder %s22, 0
    %p222 = por %p220, %p221
    %p223 = scmp.le.s32.totalorder 1, %s16
    %p224 = scmp.lt.s32.totalorder %s16, 3
    %p225 = pnand %p223, %p224
    %p226 = pneg %p225
    // Predicated region
    $region9: #{srcnn_forward_pallas.1} parent=5 // pred_check
      _
    $region10: #{srcnn_forward_pallas.1} parent=5 // pred_check_branch
      %228 = sbr.rel (%p225) target = $region12
    $region11: #{srcnn_forward_pallas.1} parent=5 // pred_region
      %s229 = ssub.s32 %s16, 1
      // Predicated region
      $region13: #{srcnn_forward_pallas.1} parent=11 // pred_check
        %p230 = pneg %p63
      $region14: #{srcnn_forward_pallas.1} parent=11 // pred_check_branch
        %232 = sbr.rel (%p230) target = $region16
      $region15: #{srcnn_forward_pallas.1} parent=11 // pred_region
        _
      $region16: #{srcnn_forward_pallas.1} parent=11 // pred_fallthru
        _
      // Predicated region
      $region17: #{srcnn_forward_pallas.1} parent=11 // pred_check
        %p233 = pneg %p84
      $region18: #{srcnn_forward_pallas.1} parent=11 // pred_check_branch
        %235 = sbr.rel (%p233) target = $region20
      $region19: #{srcnn_forward_pallas.1} parent=11 // pred_region
        _
      $region20: #{srcnn_forward_pallas.1} parent=11 // pred_fallthru
        _
      // Predicated region
      $region21: #{srcnn_forward_pallas.1} parent=11 // pred_check
        %p236 = pneg %p105
      $region22: #{srcnn_forward_pallas.1} parent=11 // pred_check_branch
        %238 = sbr.rel (%p236) target = $region24
      $region23: #{srcnn_forward_pallas.1} parent=11 // pred_region
        _
      $region24: #{srcnn_forward_pallas.1} parent=11 // pred_fallthru
        _
      // Predicated region
      $region25: #{srcnn_forward_pallas.1} parent=11 // pred_check
        %p239 = pneg %p126
      $region26: #{srcnn_forward_pallas.1} parent=11 // pred_check_branch
        %241 = sbr.rel (%p239) target = $region28
      $region27: #{srcnn_forward_pallas.1} parent=11 // pred_region
        _
      $region28: #{srcnn_forward_pallas.1} parent=11 // pred_fallthru
        _
      // Predicated region
      $region29: #{srcnn_forward_pallas.1} parent=11 // pred_check
        %p242 = pneg %p147
      $region30: #{srcnn_forward_pallas.1} parent=11 // pred_check_branch
        %244 = sbr.rel (%p242) target = $region32
      $region31: #{srcnn_forward_pallas.1} parent=11 // pred_region
        _
      $region32: #{srcnn_forward_pallas.1} parent=11 // pred_fallthru
        _
      // Predicated region
      $region33: #{srcnn_forward_pallas.1} parent=11 // pred_check
        %p245 = pneg %p168
      $region34: #{srcnn_forward_pallas.1} parent=11 // pred_check_branch
        %247 = sbr.rel (%p245) target = $region36
      $region35: #{srcnn_forward_pallas.1} parent=11 // pred_region
        _
      $region36: #{srcnn_forward_pallas.1} parent=11 // pred_fallthru
        _
      // Predicated region
      $region37: #{srcnn_forward_pallas.1} parent=11 // pred_check
        %p248 = pneg %p189
      $region38: #{srcnn_forward_pallas.1} parent=11 // pred_check_branch
        %250 = sbr.rel (%p248) target = $region40
      $region39: #{srcnn_forward_pallas.1} parent=11 // pred_region
        _
      $region40: #{srcnn_forward_pallas.1} parent=11 // pred_fallthru
        _
    $region12: #{srcnn_forward_pallas.1} parent=5 // pred_fallthru
      _
    %p251 = scmp.lt.s32.totalorder %s16, 2
    // Predicated region
    $region41: #{srcnn_forward_pallas.1} parent=5 // pred_check
      %p252 = pneg %p251
    $region42: #{srcnn_forward_pallas.1} parent=5 // pred_check_branch
      %254 = sbr.rel (%p252) target = $region44
    $region43: #{srcnn_forward_pallas.1} parent=5 // pred_region
      // Predicated region
      $region45: #{srcnn_forward_pallas.1} parent=43 // pred_check
        %p255 = pneg %p36
      $region46: #{srcnn_forward_pallas.1} parent=43 // pred_check_branch
        %257 = sbr.rel (%p255) target = $region48
      $region47: #{srcnn_forward_pallas.1} parent=43 // pred_region
        %p258 = scmp.lt.s32.totalorder %s16, 1
        %s259 = scalar_select %p258, %s16, 1
        %s260 = smul.addr %s259, 4
        %s261 = scalar_lea.vmem %s0, %s260
      $region48: #{srcnn_forward_pallas.1} parent=43 // pred_fallthru
        _
    $region44: #{srcnn_forward_pallas.1} parent=5 // pred_fallthru
      _
    %p262 = scmp.le.s32.totalorder 1, %s16
    %p263 = scmp.lt.s32.totalorder %s16, 3
    %p264 = pnand %p262, %p263
    %p265 = pneg %p264
    // Predicated region
    $region49: #{srcnn_forward_pallas.1} parent=5 // pred_check
      _
    $region50: #{srcnn_forward_pallas.1} parent=5 // pred_check_branch
      %267 = sbr.rel (%p264) target = $region52
    $region51: #{srcnn_forward_pallas.1} parent=5 // pred_region
      %s268 = ssub.s32 %s16, 1
      %p269 = scmp.lt.s32.totalorder %s21, 1
      %s270 = scalar_select %p269, %s21, 1
      %s271 = smul.addr %s270, 4
      %s272 = scalar_lea.vmem %s0, %s271
      %p273 = pneg %p42
      %p274 = pneg %p39
      %p275 = pneg %p63
      %p276 = pneg %p60
      %p277 = pneg %p84
      %p278 = pneg %p81
      %p279 = pneg %p105
      %p280 = pneg %p102
      %p281 = pneg %p126
      %p282 = pneg %p123
      %p283 = pneg %p147
      %p284 = pneg %p144
      %p285 = pneg %p168
      %p286 = pneg %p165
      %p287 = pneg %p189
      %p288 = pneg %p186
      %p289 = pneg %p215
      %p290 = pneg %p212
      %p291 = scmp.lt.s32.totalorder %s21, 1
      %s292 = scalar_select %p291, %s21, 1
      %s293 = smul.addr %s292, 3
      %s294 = scalar_lea.vmem %s8, %s293
      %p295 = scmp.lt.s32.totalorder %s21, 1
      %s296 = scalar_select %p295, %s21, 1
      %s297 = smul.addr %s296, 4
      %s298 = scalar_lea.vmem %s0, %s297
      %p299 = scmp.lt.s32.totalorder %s21, 1
      %s300 = scalar_select %p299, %s21, 1
      %s301 = smul.addr %s300, 3
      %s302 = scalar_lea.vmem %s8, %s301
      %304 = vst [vmem:[#allocation2] sm:$0xff] 0
      %305 = vst [vmem:[#allocation2 + $0x28] sm:$0xff] 0
      %306 = vst [vmem:[#allocation2 + $0x50] sm:$0xff] 0
      %307 = vst [vmem:[#allocation2 + $0x78] sm:$0xff] 0
      %308 = vst [vmem:[#allocation2 + $0x20] sm:$0xff] 0
      %309 = vst [vmem:[#allocation2 + $0x48] sm:$0xff] 0
      %310 = vst [vmem:[#allocation2 + $0x70] sm:$0xff] 0
      %311 = vst [vmem:[#allocation2 + $0x98] sm:$0xff] 0
      %312 = vst [vmem:[#allocation3] sm:$0xff] 0
      %313 = vst [vmem:[#allocation3 + $0x28] sm:$0xff] 0
      %314 = vst [vmem:[#allocation3 + $0x20] sm:$0xff] 0
      %315 = vst [vmem:[#allocation3 + $0x48] sm:$0xff] 0
      %v316 = vld [vmem:[%s298] sm:$0x7]
      %v317 = vld [vmem:[%s2] sm:$0xff]
      %v318 = vld [vmem:[%s2 + $0x8] sm:$0xff]
      %v319 = vld [vmem:[%s2 + $0x10] sm:$0xff]
      %v320 = vld [vmem:[%s2 + $0x18] sm:$0xff]
      %v321 = vld [vmem:[%s2 + $0x20] sm:$0xff]
      %v322 = vld [vmem:[%s2 + $0x28] sm:$0xff]
      %v323 = vld [vmem:[%s2 + $0x30] sm:$0xff]
      %v324 = vld [vmem:[%s2 + $0x38] sm:$0xff]
      %326 = vset.pattern.permute.xlu0 0
      %327 = vperm.xlu0 %326, %v317
      %v328 = vpop.permute.xlu0 %327
      %331 = vset.pattern.permute.xlu0 0
      %332 = vperm.xlu0 %331, %v318
      %v333 = vpop.permute.xlu0 %332
      %336 = vset.pattern.permute.xlu0 0
      %337 = vperm.xlu0 %336, %v319
      %v338 = vpop.permute.xlu0 %337
      %341 = vset.pattern.permute.xlu0 0
      %342 = vperm.xlu0 %341, %v320
      %v343 = vpop.permute.xlu0 %342
      %346 = vset.pattern.permute.xlu0 0
      %347 = vperm.xlu0 %346, %v321
      %v348 = vpop.permute.xlu0 %347
      %351 = vset.pattern.permute.xlu0 0
      %352 = vperm.xlu0 %351, %v322
      %v353 = vpop.permute.xlu0 %352
      %356 = vset.pattern.permute.xlu0 0
      %357 = vperm.xlu0 %356, %v323
      %v358 = vpop.permute.xlu0 %357
      %361 = vset.pattern.permute.xlu0 0
      %362 = vperm.xlu0 %361, %v324
      %v363 = vpop.permute.xlu0 %362
      %v366 = vlaneseq
      %v367 = vshrl.u32 %v366, 7
      %v368 = vsub.s32 0, %v367
      %v369 = vrot.slane %v316, %v368
      %v370 = vlaneseq
      %v371 = vshrl.u32 %v370, 7
      %v372 = vsub.s32 1, %v371
      %v373 = vrot.slane %v316, %v372
      %v374 = vlaneseq
      %v375 = vshrl.u32 %v374, 7
      %v376 = vsub.s32 2, %v375
      %v377 = vrot.slane %v316, %v376
      %v381 = vmul.f32 %v328, %v369
      %v382 = vmul.f32 %v328, %v373
      %v383 = vmul.f32 %v328, %v377
      %v384 = vmul.f32 %v333, %v369
      %v385 = vmul.f32 %v333, %v373
      %v386 = vmul.f32 %v333, %v377
      %v387 = vmul.f32 %v338, %v369
      %v388 = vmul.f32 %v338, %v373
      %v389 = vmul.f32 %v338, %v377
      %v390 = vmul.f32 %v343, %v369
      %v391 = vmul.f32 %v343, %v373
      %v392 = vmul.f32 %v343, %v377
      %v393 = vmul.f32 %v348, %v369
      %v394 = vmul.f32 %v348, %v373
      %v395 = vmul.f32 %v348, %v377
      %v396 = vmul.f32 %v353, %v369
      %v397 = vmul.f32 %v353, %v373
      %v398 = vmul.f32 %v353, %v377
      %v399 = vmul.f32 %v358, %v369
      %v400 = vmul.f32 %v358, %v373
      %v401 = vmul.f32 %v358, %v377
      %v402 = vmul.f32 %v363, %v369
      %v403 = vmul.f32 %v363, %v373
      %v404 = vmul.f32 %v363, %v377
      %v405 = vadd.f32 %v381, 0.0
      %v406 = vadd.f32 %v382, 0.0
      %v407 = vadd.f32 %v383, 0.0
      %v408 = vadd.f32 %v384, 0.0
      %v409 = vadd.f32 %v385, 0.0
      %v410 = vadd.f32 %v386, 0.0
      %v411 = vadd.f32 %v387, 0.0
      %v412 = vadd.f32 %v388, 0.0
      %v413 = vadd.f32 %v389, 0.0
      %v414 = vadd.f32 %v390, 0.0
      %v415 = vadd.f32 %v391, 0.0
      %v416 = vadd.f32 %v392, 0.0
      %v417 = vadd.f32 %v393, 0.0
      %v418 = vadd.f32 %v394, 0.0
      %v419 = vadd.f32 %v395, 0.0
      %v420 = vadd.f32 %v396, 0.0
      %v421 = vadd.f32 %v397, 0.0
      %v422 = vadd.f32 %v398, 0.0
      %v423 = vadd.f32 %v399, 0.0
      %v424 = vadd.f32 %v400, 0.0
      %v425 = vadd.f32 %v401, 0.0
      %v426 = vadd.f32 %v402, 0.0
      %v427 = vadd.f32 %v403, 0.0
      %v428 = vadd.f32 %v404, 0.0
      %v429 = vld [vmem:[%s298] sm:$0xf]
      %430 = vset.pattern.permute.xlu0 1
      %431 = vperm.xlu0 %430, %v317
      %v432 = vpop.permute.xlu0 %431
      %434 = vset.pattern.permute.xlu0 1
      %435 = vperm.xlu0 %434, %v318
      %v436 = vpop.permute.xlu0 %435
      %438 = vset.pattern.permute.xlu0 1
      %439 = vperm.xlu0 %438, %v319
      %v440 = vpop.permute.xlu0 %439
      %442 = vset.pattern.permute.xlu0 1
      %443 = vperm.xlu0 %442, %v320
      %v444 = vpop.permute.xlu0 %443
      %446 = vset.pattern.permute.xlu0 1
      %447 = vperm.xlu0 %446, %v321
      %v448 = vpop.permute.xlu0 %447
      %450 = vset.pattern.permute.xlu0 1
      %451 = vperm.xlu0 %450, %v322
      %v452 = vpop.permute.xlu0 %451
      %454 = vset.pattern.permute.xlu0 1
      %455 = vperm.xlu0 %454, %v323
      %v456 = vpop.permute.xlu0 %455
      %458 = vset.pattern.permute.xlu0 1
      %459 = vperm.xlu0 %458, %v324
      %v460 = vpop.permute.xlu0 %459
      %v463 = vlaneseq
      %v464 = vshrl.u32 %v463, 7
      %v465 = vsub.s32 0, %v464
      %v466 = vrot.slane %v429, %v465
      %v467 = vlaneseq
      %v468 = vshrl.u32 %v467, 7
      %v469 = vsub.s32 1, %v468
      %v470 = vrot.slane %v429, %v469
      %v471 = vlaneseq
      %v472 = vshrl.u32 %v471, 7
      %v473 = vsub.s32 2, %v472
      %v474 = vrot.slane %v429, %v473
      %v475 = vlaneseq
      %v476 = vshrl.u32 %v475, 7
      %v477 = vsub.s32 3, %v476
      %v478 = vrot.slane %v429, %v477
      %v483 = vmul.f32 %v432, %v466
      %v484 = vmul.f32 %v432, %v470
      %v485 = vmul.f32 %v432, %v474
      %v486 = vmul.f32 %v432, %v478
      %v487 = vmul.f32 %v436, %v466
      %v488 = vmul.f32 %v436, %v470
      %v489 = vmul.f32 %v436, %v474
      %v490 = vmul.f32 %v436, %v478
      %v491 = vmul.f32 %v440, %v466
      %v492 = vmul.f32 %v440, %v470
      %v493 = vmul.f32 %v440, %v474
      %v494 = vmul.f32 %v440, %v478
      %v495 = vmul.f32 %v444, %v466
      %v496 = vmul.f32 %v444, %v470
      %v497 = vmul.f32 %v444, %v474
      %v498 = vmul.f32 %v444, %v478
      %v499 = vmul.f32 %v448, %v466
      %v500 = vmul.f32 %v448, %v470
      %v501 = vmul.f32 %v448, %v474
      %v502 = vmul.f32 %v448, %v478
      %v503 = vmul.f32 %v452, %v466
      %v504 = vmul.f32 %v452, %v470
      %v505 = vmul.f32 %v452, %v474
      %v506 = vmul.f32 %v452, %v478
      %v507 = vmul.f32 %v456, %v466
      %v508 = vmul.f32 %v456, %v470
      %v509 = vmul.f32 %v456, %v474
      %v510 = vmul.f32 %v456, %v478
      %v511 = vmul.f32 %v460, %v466
      %v512 = vmul.f32 %v460, %v470
      %v513 = vmul.f32 %v460, %v474
      %v514 = vmul.f32 %v460, %v478
      %547 = vrot.lane.b32.xlu0 %v483, 127
      %v548 = vpop.permute.xlu0 %547
      %549 = vrot.lane.b32.xlu0 %v484, 127
      %v550 = vpop.permute.xlu0 %549
      %551 = vrot.lane.b32.xlu0 %v485, 127
      %v552 = vpop.permute.xlu0 %551
      %553 = vrot.lane.b32.xlu0 %v486, 127
      %v554 = vpop.permute.xlu0 %553
      %555 = vrot.lane.b32.xlu0 %v487, 127
      %v556 = vpop.permute.xlu0 %555
      %557 = vrot.lane.b32.xlu0 %v488, 127
      %v558 = vpop.permute.xlu0 %557
      %559 = vrot.lane.b32.xlu0 %v489, 127
      %v560 = vpop.permute.xlu0 %559
      %561 = vrot.lane.b32.xlu0 %v490, 127
      %v562 = vpop.permute.xlu0 %561
      %563 = vrot.lane.b32.xlu0 %v491, 127
      %v564 = vpop.permute.xlu0 %563
      %565 = vrot.lane.b32.xlu0 %v492, 127
      %v566 = vpop.permute.xlu0 %565
      %567 = vrot.lane.b32.xlu0 %v493, 127
      %v568 = vpop.permute.xlu0 %567
      %569 = vrot.lane.b32.xlu0 %v494, 127
      %v570 = vpop.permute.xlu0 %569
      %571 = vrot.lane.b32.xlu0 %v495, 127
      %v572 = vpop.permute.xlu0 %571
      %573 = vrot.lane.b32.xlu0 %v496, 127
      %v574 = vpop.permute.xlu0 %573
      %575 = vrot.lane.b32.xlu0 %v497, 127
      %v576 = vpop.permute.xlu0 %575
      %577 = vrot.lane.b32.xlu0 %v498, 127
      %v578 = vpop.permute.xlu0 %577
      %579 = vrot.lane.b32.xlu0 %v499, 127
      %v580 = vpop.permute.xlu0 %579
      %581 = vrot.lane.b32.xlu0 %v500, 127
      %v582 = vpop.permute.xlu0 %581
      %583 = vrot.lane.b32.xlu0 %v501, 127
      %v584 = vpop.permute.xlu0 %583
      %585 = vrot.lane.b32.xlu0 %v502, 127
      %v586 = vpop.permute.xlu0 %585
      %587 = vrot.lane.b32.xlu0 %v503, 127
      %v588 = vpop.permute.xlu0 %587
      %589 = vrot.lane.b32.xlu0 %v504, 127
      %v590 = vpop.permute.xlu0 %589
      %591 = vrot.lane.b32.xlu0 %v505, 127
      %v592 = vpop.permute.xlu0 %591
      %593 = vrot.lane.b32.xlu0 %v506, 127
      %v594 = vpop.permute.xlu0 %593
      %595 = vrot.lane.b32.xlu0 %v507, 127
      %v596 = vpop.permute.xlu0 %595
      %597 = vrot.lane.b32.xlu0 %v508, 127
      %v598 = vpop.permute.xlu0 %597
      %599 = vrot.lane.b32.xlu0 %v509, 127
      %v600 = vpop.permute.xlu0 %599
      %601 = vrot.lane.b32.xlu0 %v510, 127
      %v602 = vpop.permute.xlu0 %601
      %603 = vrot.lane.b32.xlu0 %v511, 127
      %v604 = vpop.permute.xlu0 %603
      %605 = vrot.lane.b32.xlu0 %v512, 127
      %v606 = vpop.permute.xlu0 %605
      %607 = vrot.lane.b32.xlu0 %v513, 127
      %v608 = vpop.permute.xlu0 %607
      %609 = vrot.lane.b32.xlu0 %v514, 127
      %v610 = vpop.permute.xlu0 %609
      %vm611 = vcmask 1039360
      %v612 = vsel %vm611, %v548, %v550
      %v613 = vsel %vm611, %v550, %v552
      %v614 = vsel %vm611, %v552, %v554
      %v615 = vsel %vm611, %v556, %v558
      %v616 = vsel %vm611, %v558, %v560
      %v617 = vsel %vm611, %v560, %v562
      %v618 = vsel %vm611, %v564, %v566
      %v619 = vsel %vm611, %v566, %v568
      %v620 = vsel %vm611, %v568, %v570
      %v621 = vsel %vm611, %v572, %v574
      %v622 = vsel %vm611, %v574, %v576
      %v623 = vsel %vm611, %v576, %v578
      %v624 = vsel %vm611, %v580, %v582
      %v625 = vsel %vm611, %v582, %v584
      %v626 = vsel %vm611, %v584, %v586
      %v627 = vsel %vm611, %v588, %v590
      %v628 = vsel %vm611, %v590, %v592
      %v629 = vsel %vm611, %v592, %v594
      %v630 = vsel %vm611, %v596, %v598
      %v631 = vsel %vm611, %v598, %v600
      %v632 = vsel %vm611, %v600, %v602
      %v633 = vsel %vm611, %v604, %v606
      %v634 = vsel %vm611, %v606, %v608
      %v635 = vsel %vm611, %v608, %v610
      %v660 = vadd.f32 %v405, %v612
      %v661 = vadd.f32 %v406, %v613
      %v662 = vadd.f32 %v407, %v614
      %v663 = vadd.f32 %v408, %v615
      %v664 = vadd.f32 %v409, %v616
      %v665 = vadd.f32 %v410, %v617
      %v666 = vadd.f32 %v411, %v618
      %v667 = vadd.f32 %v412, %v619
      %v668 = vadd.f32 %v413, %v620
      %v669 = vadd.f32 %v414, %v621
      %v670 = vadd.f32 %v415, %v622
      %v671 = vadd.f32 %v416, %v623
      %v672 = vadd.f32 %v417, %v624
      %v673 = vadd.f32 %v418, %v625
      %v674 = vadd.f32 %v419, %v626
      %v675 = vadd.f32 %v420, %v627
      %v676 = vadd.f32 %v421, %v628
      %v677 = vadd.f32 %v422, %v629
      %v678 = vadd.f32 %v423, %v630
      %v679 = vadd.f32 %v424, %v631
      %v680 = vadd.f32 %v425, %v632
      %v681 = vadd.f32 %v426, %v633
      %v682 = vadd.f32 %v427, %v634
      %v683 = vadd.f32 %v428, %v635
      %684 = vset.pattern.permute.xlu0 2
      %685 = vperm.xlu0 %684, %v317
      %v686 = vpop.permute.xlu0 %685
      %688 = vset.pattern.permute.xlu0 2
      %689 = vperm.xlu0 %688, %v318
      %v690 = vpop.permute.xlu0 %689
      %692 = vset.pattern.permute.xlu0 2
      %693 = vperm.xlu0 %692, %v319
      %v694 = vpop.permute.xlu0 %693
      %696 = vset.pattern.permute.xlu0 2
      %697 = vperm.xlu0 %696, %v320
      %v698 = vpop.permute.xlu0 %697
      %700 = vset.pattern.permute.xlu0 2
      %701 = vperm.xlu0 %700, %v321
      %v702 = vpop.permute.xlu0 %701
      %704 = vset.pattern.permute.xlu0 2
      %705 = vperm.xlu0 %704, %v322
      %v706 = vpop.permute.xlu0 %705
      %708 = vset.pattern.permute.xlu0 2
      %709 = vperm.xlu0 %708, %v323
      %v710 = vpop.permute.xlu0 %709
      %712 = vset.pattern.permute.xlu0 2
      %713 = vperm.xlu0 %712, %v324
      %v714 = vpop.permute.xlu0 %713
      %v716 = vmul.f32 %v686, %v466
      %v717 = vmul.f32 %v686, %v470
      %v718 = vmul.f32 %v686, %v474
      %v719 = vmul.f32 %v686, %v478
      %v720 = vmul.f32 %v690, %v466
      %v721 = vmul.f32 %v690, %v470
      %v722 = vmul.f32 %v690, %v474
      %v723 = vmul.f32 %v690, %v478
      %v724 = vmul.f32 %v694, %v466
      %v725 = vmul.f32 %v694, %v470
      %v726 = vmul.f32 %v694, %v474
      %v727 = vmul.f32 %v694, %v478
      %v728 = vmul.f32 %v698, %v466
      %v729 = vmul.f32 %v698, %v470
      %v730 = vmul.f32 %v698, %v474
      %v731 = vmul.f32 %v698, %v478
      %v732 = vmul.f32 %v702, %v466
      %v733 = vmul.f32 %v702, %v470
      %v734 = vmul.f32 %v702, %v474
      %v735 = vmul.f32 %v702, %v478
      %v736 = vmul.f32 %v706, %v466
      %v737 = vmul.f32 %v706, %v470
      %v738 = vmul.f32 %v706, %v474
      %v739 = vmul.f32 %v706, %v478
      %v740 = vmul.f32 %v710, %v466
      %v741 = vmul.f32 %v710, %v470
      %v742 = vmul.f32 %v710, %v474
      %v743 = vmul.f32 %v710, %v478
      %v744 = vmul.f32 %v714, %v466
      %v745 = vmul.f32 %v714, %v470
      %v746 = vmul.f32 %v714, %v474
      %v747 = vmul.f32 %v714, %v478
      %780 = vrot.lane.b32.xlu0 %v716, 126
      %v781 = vpop.permute.xlu0 %780
      %782 = vrot.lane.b32.xlu0 %v717, 126
      %v783 = vpop.permute.xlu0 %782
      %784 = vrot.lane.b32.xlu0 %v718, 126
      %v785 = vpop.permute.xlu0 %784
      %786 = vrot.lane.b32.xlu0 %v719, 126
      %v787 = vpop.permute.xlu0 %786
      %788 = vrot.lane.b32.xlu0 %v720, 126
      %v789 = vpop.permute.xlu0 %788
      %790 = vrot.lane.b32.xlu0 %v721, 126
      %v791 = vpop.permute.xlu0 %790
      %792 = vrot.lane.b32.xlu0 %v722, 126
      %v793 = vpop.permute.xlu0 %792
      %794 = vrot.lane.b32.xlu0 %v723, 126
      %v795 = vpop.permute.xlu0 %794
      %796 = vrot.lane.b32.xlu0 %v724, 126
      %v797 = vpop.permute.xlu0 %796
      %798 = vrot.lane.b32.xlu0 %v725, 126
      %v799 = vpop.permute.xlu0 %798
      %800 = vrot.lane.b32.xlu0 %v726, 126
      %v801 = vpop.permute.xlu0 %800
      %802 = vrot.lane.b32.xlu0 %v727, 126
      %v803 = vpop.permute.xlu0 %802
      %804 = vrot.lane.b32.xlu0 %v728, 126
      %v805 = vpop.permute.xlu0 %804
      %806 = vrot.lane.b32.xlu0 %v729, 126
      %v807 = vpop.permute.xlu0 %806
      %808 = vrot.lane.b32.xlu0 %v730, 126
      %v809 = vpop.permute.xlu0 %808
      %810 = vrot.lane.b32.xlu0 %v731, 126
      %v811 = vpop.permute.xlu0 %810
      %812 = vrot.lane.b32.xlu0 %v732, 126
      %v813 = vpop.permute.xlu0 %812
      %814 = vrot.lane.b32.xlu0 %v733, 126
      %v815 = vpop.permute.xlu0 %814
      %816 = vrot.lane.b32.xlu0 %v734, 126
      %v817 = vpop.permute.xlu0 %816
      %818 = vrot.lane.b32.xlu0 %v735, 126
      %v819 = vpop.permute.xlu0 %818
      %820 = vrot.lane.b32.xlu0 %v736, 126
      %v821 = vpop.permute.xlu0 %820
      %822 = vrot.lane.b32.xlu0 %v737, 126
      %v823 = vpop.permute.xlu0 %822
      %824 = vrot.lane.b32.xlu0 %v738, 126
      %v825 = vpop.permute.xlu0 %824
      %826 = vrot.lane.b32.xlu0 %v739, 126
      %v827 = vpop.permute.xlu0 %826
      %828 = vrot.lane.b32.xlu0 %v740, 126
      %v829 = vpop.permute.xlu0 %828
      %830 = vrot.lane.b32.xlu0 %v741, 126
      %v831 = vpop.permute.xlu0 %830
      %832 = vrot.lane.b32.xlu0 %v742, 126
      %v833 = vpop.permute.xlu0 %832
      %834 = vrot.lane.b32.xlu0 %v743, 126
      %v835 = vpop.permute.xlu0 %834
      %836 = vrot.lane.b32.xlu0 %v744, 126
      %v837 = vpop.permute.xlu0 %836
      %838 = vrot.lane.b32.xlu0 %v745, 126
      %v839 = vpop.permute.xlu0 %838
      %840 = vrot.lane.b32.xlu0 %v746, 126
      %v841 = vpop.permute.xlu0 %840
      %842 = vrot.lane.b32.xlu0 %v747, 126
      %v843 = vpop.permute.xlu0 %842
      %vm844 = vcmask 1031168
      %v845 = vsel %vm844, %v781, %v783
      %v846 = vsel %vm844, %v783, %v785
      %v847 = vsel %vm844, %v785, %v787
      %v848 = vsel %vm844, %v789, %v791
      %v849 = vsel %vm844, %v791, %v793
      %v850 = vsel %vm844, %v793, %v795
      %v851 = vsel %vm844, %v797, %v799
      %v852 = vsel %vm844, %v799, %v801
      %v853 = vsel %vm844, %v801, %v803
      %v854 = vsel %vm844, %v805, %v807
      %v855 = vsel %vm844, %v807, %v809
      %v856 = vsel %vm844, %v809, %v811
      %v857 = vsel %vm844, %v813, %v815
      %v858 = vsel %vm844, %v815, %v817
      %v859 = vsel %vm844, %v817, %v819
      %v860 = vsel %vm844, %v821, %v823
      %v861 = vsel %vm844, %v823, %v825
      %v862 = vsel %vm844, %v825, %v827
      %v863 = vsel %vm844, %v829, %v831
      %v864 = vsel %vm844, %v831, %v833
      %v865 = vsel %vm844, %v833, %v835
      %v866 = vsel %vm844, %v837, %v839
      %v867 = vsel %vm844, %v839, %v841
      %v868 = vsel %vm844, %v841, %v843
      %v893 = vadd.f32 %v660, %v845
      %v894 = vadd.f32 %v661, %v846
      %v895 = vadd.f32 %v662, %v847
      %v896 = vadd.f32 %v663, %v848
      %v897 = vadd.f32 %v664, %v849
      %v898 = vadd.f32 %v665, %v850
      %v899 = vadd.f32 %v666, %v851
      %v900 = vadd.f32 %v667, %v852
      %v901 = vadd.f32 %v668, %v853
      %v902 = vadd.f32 %v669, %v854
      %v903 = vadd.f32 %v670, %v855
      %v904 = vadd.f32 %v671, %v856
      %v905 = vadd.f32 %v672, %v857
      %v906 = vadd.f32 %v673, %v858
      %v907 = vadd.f32 %v674, %v859
      %v908 = vadd.f32 %v675, %v860
      %v909 = vadd.f32 %v676, %v861
      %v910 = vadd.f32 %v677, %v862
      %v911 = vadd.f32 %v678, %v863
      %v912 = vadd.f32 %v679, %v864
      %v913 = vadd.f32 %v680, %v865
      %v914 = vadd.f32 %v681, %v866
      %v915 = vadd.f32 %v682, %v867
      %v916 = vadd.f32 %v683, %v868
      %917 = vset.pattern.permute.xlu0 3
      %918 = vperm.xlu0 %917, %v317
      %v919 = vpop.permute.xlu0 %918
      %921 = vset.pattern.permute.xlu0 3
      %922 = vperm.xlu0 %921, %v318
      %v923 = vpop.permute.xlu0 %922
      %925 = vset.pattern.permute.xlu0 3
      %926 = vperm.xlu0 %925, %v319
      %v927 = vpop.permute.xlu0 %926
      %929 = vset.pattern.permute.xlu0 3
      %930 = vperm.xlu0 %929, %v320
      %v931 = vpop.permute.xlu0 %930
      %933 = vset.pattern.permute.xlu0 3
      %934 = vperm.xlu0 %933, %v321
      %v935 = vpop.permute.xlu0 %934
      %937 = vset.pattern.permute.xlu0 3
      %938 = vperm.xlu0 %937, %v322
      %v939 = vpop.permute.xlu0 %938
      %941 = vset.pattern.permute.xlu0 3
      %942 = vperm.xlu0 %941, %v323
      %v943 = vpop.permute.xlu0 %942
      %945 = vset.pattern.permute.xlu0 3
      %946 = vperm.xlu0 %945, %v324
      %v947 = vpop.permute.xlu0 %946
      %v949 = vmul.f32 %v919, %v466
      %v950 = vmul.f32 %v919, %v470
      %v951 = vmul.f32 %v919, %v474
      %v952 = vmul.f32 %v919, %v478
      %v953 = vmul.f32 %v923, %v466
      %v954 = vmul.f32 %v923, %v470
      %v955 = vmul.f32 %v923, %v474
      %v956 = vmul.f32 %v923, %v478
      %v957 = vmul.f32 %v927, %v466
      %v958 = vmul.f32 %v927, %v470
      %v959 = vmul.f32 %v927, %v474
      %v960 = vmul.f32 %v927, %v478
      %v961 = vmul.f32 %v931, %v466
      %v962 = vmul.f32 %v931, %v470
      %v963 = vmul.f32 %v931, %v474
      %v964 = vmul.f32 %v931, %v478
      %v965 = vmul.f32 %v935, %v466
      %v966 = vmul.f32 %v935, %v470
      %v967 = vmul.f32 %v935, %v474
      %v968 = vmul.f32 %v935, %v478
      %v969 = vmul.f32 %v939, %v466
      %v970 = vmul.f32 %v939, %v470
      %v971 = vmul.f32 %v939, %v474
      %v972 = vmul.f32 %v939, %v478
      %v973 = vmul.f32 %v943, %v466
      %v974 = vmul.f32 %v943, %v470
      %v975 = vmul.f32 %v943, %v474
      %v976 = vmul.f32 %v943, %v478
      %v977 = vmul.f32 %v947, %v466
      %v978 = vmul.f32 %v947, %v470
      %v979 = vmul.f32 %v947, %v474
      %v980 = vmul.f32 %v947, %v478
      %1013 = vrot.lane.b32.xlu0 %v949, 110
      %v1014 = vpop.permute.xlu0 %1013
      %1015 = vrot.lane.b32.xlu0 %v950, 110
      %v1016 = vpop.permute.xlu0 %1015
      %1017 = vrot.lane.b32.xlu0 %v951, 110
      %v1018 = vpop.permute.xlu0 %1017
      %1019 = vrot.lane.b32.xlu0 %v952, 110
      %v1020 = vpop.permute.xlu0 %1019
      %1021 = vrot.lane.b32.xlu0 %v953, 110
      %v1022 = vpop.permute.xlu0 %1021
      %1023 = vrot.lane.b32.xlu0 %v954, 110
      %v1024 = vpop.permute.xlu0 %1023
      %1025 = vrot.lane.b32.xlu0 %v955, 110
      %v1026 = vpop.permute.xlu0 %1025
      %1027 = vrot.lane.b32.xlu0 %v956, 110
      %v1028 = vpop.permute.xlu0 %1027
      %1029 = vrot.lane.b32.xlu0 %v957, 110
      %v1030 = vpop.permute.xlu0 %1029
      %1031 = vrot.lane.b32.xlu0 %v958, 110
      %v1032 = vpop.permute.xlu0 %1031
      %1033 = vrot.lane.b32.xlu0 %v959, 110
      %v1034 = vpop.permute.xlu0 %1033
      %1035 = vrot.lane.b32.xlu0 %v960, 110
      %v1036 = vpop.permute.xlu0 %1035
      %1037 = vrot.lane.b32.xlu0 %v961, 110
      %v1038 = vpop.permute.xlu0 %1037
      %1039 = vrot.lane.b32.xlu0 %v962, 110
      %v1040 = vpop.permute.xlu0 %1039
      %1041 = vrot.lane.b32.xlu0 %v963, 110
      %v1042 = vpop.permute.xlu0 %1041
      %1043 = vrot.lane.b32.xlu0 %v964, 110
      %v1044 = vpop.permute.xlu0 %1043
      %1045 = vrot.lane.b32.xlu0 %v965, 110
      %v1046 = vpop.permute.xlu0 %1045
      %1047 = vrot.lane.b32.xlu0 %v966, 110
      %v1048 = vpop.permute.xlu0 %1047
      %1049 = vrot.lane.b32.xlu0 %v967, 110
      %v1050 = vpop.permute.xlu0 %1049
      %1051 = vrot.lane.b32.xlu0 %v968, 110
      %v1052 = vpop.permute.xlu0 %1051
      %1053 = vrot.lane.b32.xlu0 %v969, 110
      %v1054 = vpop.permute.xlu0 %1053
      %1055 = vrot.lane.b32.xlu0 %v970, 110
      %v1056 = vpop.permute.xlu0 %1055
      %1057 = vrot.lane.b32.xlu0 %v971, 110
      %v1058 = vpop.permute.xlu0 %1057
      %1059 = vrot.lane.b32.xlu0 %v972, 110
      %v1060 = vpop.permute.xlu0 %1059
      %1061 = vrot.lane.b32.xlu0 %v973, 110
      %v1062 = vpop.permute.xlu0 %1061
      %1063 = vrot.lane.b32.xlu0 %v974, 110
      %v1064 = vpop.permute.xlu0 %1063
      %1065 = vrot.lane.b32.xlu0 %v975, 110
      %v1066 = vpop.permute.xlu0 %1065
      %1067 = vrot.lane.b32.xlu0 %v976, 110
      %v1068 = vpop.permute.xlu0 %1067
      %1069 = vrot.lane.b32.xlu0 %v977, 110
      %v1070 = vpop.permute.xlu0 %1069
      %1071 = vrot.lane.b32.xlu0 %v978, 110
      %v1072 = vpop.permute.xlu0 %1071
      %1073 = vrot.lane.b32.xlu0 %v979, 110
      %v1074 = vpop.permute.xlu0 %1073
      %1075 = vrot.lane.b32.xlu0 %v980, 110
      %v1076 = vpop.permute.xlu0 %1075
      %vm1077 = vcmask 900096
      %v1078 = vsel %vm1077, %v1014, %v1016
      %v1079 = vsel %vm1077, %v1016, %v1018
      %v1080 = vsel %vm1077, %v1018, %v1020
      %v1081 = vsel %vm1077, %v1022, %v1024
      %v1082 = vsel %vm1077, %v1024, %v1026
      %v1083 = vsel %vm1077, %v1026, %v1028
      %v1084 = vsel %vm1077, %v1030, %v1032
      %v1085 = vsel %vm1077, %v1032, %v1034
      %v1086 = vsel %vm1077, %v1034, %v1036
      %v1087 = vsel %vm1077, %v1038, %v1040
      %v1088 = vsel %vm1077, %v1040, %v1042
      %v1089 = vsel %vm1077, %v1042, %v1044
      %v1090 = vsel %vm1077, %v1046, %v1048
      %v1091 = vsel %vm1077, %v1048, %v1050
      %v1092 = vsel %vm1077, %v1050, %v1052
      %v1093 = vsel %vm1077, %v1054, %v1056
      %v1094 = vsel %vm1077, %v1056, %v1058
      %v1095 = vsel %vm1077, %v1058, %v1060
      %v1096 = vsel %vm1077, %v1062, %v1064
      %v1097 = vsel %vm1077, %v1064, %v1066
      %v1098 = vsel %vm1077, %v1066, %v1068
      %v1099 = vsel %vm1077, %v1070, %v1072
      %v1100 = vsel %vm1077, %v1072, %v1074
      %v1101 = vsel %vm1077, %v1074, %v1076
      %v1126 = vadd.f32 %v893, %v1078
      %v1127 = vadd.f32 %v894, %v1079
      %v1128 = vadd.f32 %v895, %v1080
      %v1129 = vadd.f32 %v896, %v1081
      %v1130 = vadd.f32 %v897, %v1082
      %v1131 = vadd.f32 %v898, %v1083
      %v1132 = vadd.f32 %v899, %v1084
      %v1133 = vadd.f32 %v900, %v1085
      %v1134 = vadd.f32 %v901, %v1086
      %v1135 = vadd.f32 %v902, %v1087
      %v1136 = vadd.f32 %v903, %v1088
      %v1137 = vadd.f32 %v904, %v1089
      %v1138 = vadd.f32 %v905, %v1090
      %v1139 = vadd.f32 %v906, %v1091
      %v1140 = vadd.f32 %v907, %v1092
      %v1141 = vadd.f32 %v908, %v1093
      %v1142 = vadd.f32 %v909, %v1094
      %v1143 = vadd.f32 %v910, %v1095
      %v1144 = vadd.f32 %v911, %v1096
      %v1145 = vadd.f32 %v912, %v1097
      %v1146 = vadd.f32 %v913, %v1098
      %v1147 = vadd.f32 %v914, %v1099
      %v1148 = vadd.f32 %v915, %v1100
      %v1149 = vadd.f32 %v916, %v1101
      %1150 = vset.pattern.permute.xlu0 4
      %1151 = vperm.xlu0 %1150, %v317
      %v1152 = vpop.permute.xlu0 %1151
      %1154 = vset.pattern.permute.xlu0 4
      %1155 = vperm.xlu0 %1154, %v318
      %v1156 = vpop.permute.xlu0 %1155
      %1158 = vset.pattern.permute.xlu0 4
      %1159 = vperm.xlu0 %1158, %v319
      %v1160 = vpop.permute.xlu0 %1159
      %1162 = vset.pattern.permute.xlu0 4
      %1163 = vperm.xlu0 %1162, %v320
      %v1164 = vpop.permute.xlu0 %1163
      %1166 = vset.pattern.permute.xlu0 4
      %1167 = vperm.xlu0 %1166, %v321
      %v1168 = vpop.permute.xlu0 %1167
      %1170 = vset.pattern.permute.xlu0 4
      %1171 = vperm.xlu0 %1170, %v322
      %v1172 = vpop.permute.xlu0 %1171
      %1174 = vset.pattern.permute.xlu0 4
      %1175 = vperm.xlu0 %1174, %v323
      %v1176 = vpop.permute.xlu0 %1175
      %1178 = vset.pattern.permute.xlu0 4
      %1179 = vperm.xlu0 %1178, %v324
      %v1180 = vpop.permute.xlu0 %1179
      %v1182 = vmul.f32 %v1152, %v466
      %v1183 = vmul.f32 %v1152, %v470
      %v1184 = vmul.f32 %v1152, %v474
      %v1185 = vmul.f32 %v1152, %v478
      %v1186 = vmul.f32 %v1156, %v466
      %v1187 = vmul.f32 %v1156, %v470
      %v1188 = vmul.f32 %v1156, %v474
      %v1189 = vmul.f32 %v1156, %v478
      %v1190 = vmul.f32 %v1160, %v466
      %v1191 = vmul.f32 %v1160, %v470
      %v1192 = vmul.f32 %v1160, %v474
      %v1193 = vmul.f32 %v1160, %v478
      %v1194 = vmul.f32 %v1164, %v466
      %v1195 = vmul.f32 %v1164, %v470
      %v1196 = vmul.f32 %v1164, %v474
      %v1197 = vmul.f32 %v1164, %v478
      %v1198 = vmul.f32 %v1168, %v466
      %v1199 = vmul.f32 %v1168, %v470
      %v1200 = vmul.f32 %v1168, %v474
      %v1201 = vmul.f32 %v1168, %v478
      %v1202 = vmul.f32 %v1172, %v466
      %v1203 = vmul.f32 %v1172, %v470
      %v1204 = vmul.f32 %v1172, %v474
      %v1205 = vmul.f32 %v1172, %v478
      %v1206 = vmul.f32 %v1176, %v466
      %v1207 = vmul.f32 %v1176, %v470
      %v1208 = vmul.f32 %v1176, %v474
      %v1209 = vmul.f32 %v1176, %v478
      %v1210 = vmul.f32 %v1180, %v466
      %v1211 = vmul.f32 %v1180, %v470
      %v1212 = vmul.f32 %v1180, %v474
      %v1213 = vmul.f32 %v1180, %v478
      %1246 = vrot.lane.b32.xlu0 %v1182, 109
      %v1247 = vpop.permute.xlu0 %1246
      %1248 = vrot.lane.b32.xlu0 %v1183, 109
      %v1249 = vpop.permute.xlu0 %1248
      %1250 = vrot.lane.b32.xlu0 %v1184, 109
      %v1251 = vpop.permute.xlu0 %1250
      %1252 = vrot.lane.b32.xlu0 %v1185, 109
      %v1253 = vpop.permute.xlu0 %1252
      %1254 = vrot.lane.b32.xlu0 %v1186, 109
      %v1255 = vpop.permute.xlu0 %1254
      %1256 = vrot.lane.b32.xlu0 %v1187, 109
      %v1257 = vpop.permute.xlu0 %1256
      %1258 = vrot.lane.b32.xlu0 %v1188, 109
      %v1259 = vpop.permute.xlu0 %1258
      %1260 = vrot.lane.b32.xlu0 %v1189, 109
      %v1261 = vpop.permute.xlu0 %1260
      %1262 = vrot.lane.b32.xlu0 %v1190, 109
      %v1263 = vpop.permute.xlu0 %1262
      %1264 = vrot.lane.b32.xlu0 %v1191, 109
      %v1265 = vpop.permute.xlu0 %1264
      %1266 = vrot.lane.b32.xlu0 %v1192, 109
      %v1267 = vpop.permute.xlu0 %1266
      %1268 = vrot.lane.b32.xlu0 %v1193, 109
      %v1269 = vpop.permute.xlu0 %1268
      %1270 = vrot.lane.b32.xlu0 %v1194, 109
      %v1271 = vpop.permute.xlu0 %1270
      %1272 = vrot.lane.b32.xlu0 %v1195, 109
      %v1273 = vpop.permute.xlu0 %1272
      %1274 = vrot.lane.b32.xlu0 %v1196, 109
      %v1275 = vpop.permute.xlu0 %1274
      %1276 = vrot.lane.b32.xlu0 %v1197, 109
      %v1277 = vpop.permute.xlu0 %1276
      %1278 = vrot.lane.b32.xlu0 %v1198, 109
      %v1279 = vpop.permute.xlu0 %1278
      %1280 = vrot.lane.b32.xlu0 %v1199, 109
      %v1281 = vpop.permute.xlu0 %1280
      %1282 = vrot.lane.b32.xlu0 %v1200, 109
      %v1283 = vpop.permute.xlu0 %1282
      %1284 = vrot.lane.b32.xlu0 %v1201, 109
      %v1285 = vpop.permute.xlu0 %1284
      %1286 = vrot.lane.b32.xlu0 %v1202, 109
      %v1287 = vpop.permute.xlu0 %1286
      %1288 = vrot.lane.b32.xlu0 %v1203, 109
      %v1289 = vpop.permute.xlu0 %1288
      %1290 = vrot.lane.b32.xlu0 %v1204, 109
      %v1291 = vpop.permute.xlu0 %1290
      %1292 = vrot.lane.b32.xlu0 %v1205, 109
      %v1293 = vpop.permute.xlu0 %1292
      %1294 = vrot.lane.b32.xlu0 %v1206, 109
      %v1295 = vpop.permute.xlu0 %1294
      %1296 = vrot.lane.b32.xlu0 %v1207, 109
      %v1297 = vpop.permute.xlu0 %1296
      %1298 = vrot.lane.b32.xlu0 %v1208, 109
      %v1299 = vpop.permute.xlu0 %1298
      %1300 = vrot.lane.b32.xlu0 %v1209, 109
      %v1301 = vpop.permute.xlu0 %1300
      %1302 = vrot.lane.b32.xlu0 %v1210, 109
      %v1303 = vpop.permute.xlu0 %1302
      %1304 = vrot.lane.b32.xlu0 %v1211, 109
      %v1305 = vpop.permute.xlu0 %1304
      %1306 = vrot.lane.b32.xlu0 %v1212, 109
      %v1307 = vpop.permute.xlu0 %1306
      %1308 = vrot.lane.b32.xlu0 %v1213, 109
      %v1309 = vpop.permute.xlu0 %1308
      %vm1310 = vcmask 891904
      %v1311 = vsel %vm1310, %v1247, %v1249
      %v1312 = vsel %vm1310, %v1249, %v1251
      %v1313 = vsel %vm1310, %v1251, %v1253
      %v1314 = vsel %vm1310, %v1255, %v1257
      %v1315 = vsel %vm1310, %v1257, %v1259
      %v1316 = vsel %vm1310, %v1259, %v1261
      %v1317 = vsel %vm1310, %v1263, %v1265
      %v1318 = vsel %vm1310, %v1265, %v1267
      %v1319 = vsel %vm1310, %v1267, %v1269
      %v1320 = vsel %vm1310, %v1271, %v1273
      %v1321 = vsel %vm1310, %v1273, %v1275
      %v1322 = vsel %vm1310, %v1275, %v1277
      %v1323 = vsel %vm1310, %v1279, %v1281
      %v1324 = vsel %vm1310, %v1281, %v1283
      %v1325 = vsel %vm1310, %v1283, %v1285
      %v1326 = vsel %vm1310, %v1287, %v1289
      %v1327 = vsel %vm1310, %v1289, %v1291
      %v1328 = vsel %vm1310, %v1291, %v1293
      %v1329 = vsel %vm1310, %v1295, %v1297
      %v1330 = vsel %vm1310, %v1297, %v1299
      %v1331 = vsel %vm1310, %v1299, %v1301
      %v1332 = vsel %vm1310, %v1303, %v1305
      %v1333 = vsel %vm1310, %v1305, %v1307
      %v1334 = vsel %vm1310, %v1307, %v1309
      %v1359 = vadd.f32 %v1126, %v1311
      %v1360 = vadd.f32 %v1127, %v1312
      %v1361 = vadd.f32 %v1128, %v1313
      %v1362 = vadd.f32 %v1129, %v1314
      %v1363 = vadd.f32 %v1130, %v1315
      %v1364 = vadd.f32 %v1131, %v1316
      %v1365 = vadd.f32 %v1132, %v1317
      %v1366 = vadd.f32 %v1133, %v1318
      %v1367 = vadd.f32 %v1134, %v1319
      %v1368 = vadd.f32 %v1135, %v1320
      %v1369 = vadd.f32 %v1136, %v1321
      %v1370 = vadd.f32 %v1137, %v1322
      %v1371 = vadd.f32 %v1138, %v1323
      %v1372 = vadd.f32 %v1139, %v1324
      %v1373 = vadd.f32 %v1140, %v1325
      %v1374 = vadd.f32 %v1141, %v1326
      %v1375 = vadd.f32 %v1142, %v1327
      %v1376 = vadd.f32 %v1143, %v1328
      %v1377 = vadd.f32 %v1144, %v1329
      %v1378 = vadd.f32 %v1145, %v1330
      %v1379 = vadd.f32 %v1146, %v1331
      %v1380 = vadd.f32 %v1147, %v1332
      %v1381 = vadd.f32 %v1148, %v1333
      %v1382 = vadd.f32 %v1149, %v1334
      %1383 = vset.pattern.permute.xlu0 5
      %1384 = vperm.xlu0 %1383, %v317
      %v1385 = vpop.permute.xlu0 %1384
      %1387 = vset.pattern.permute.xlu0 5
      %1388 = vperm.xlu0 %1387, %v318
      %v1389 = vpop.permute.xlu0 %1388
      %1391 = vset.pattern.permute.xlu0 5
      %1392 = vperm.xlu0 %1391, %v319
      %v1393 = vpop.permute.xlu0 %1392
      %1395 = vset.pattern.permute.xlu0 5
      %1396 = vperm.xlu0 %1395, %v320
      %v1397 = vpop.permute.xlu0 %1396
      %1399 = vset.pattern.permute.xlu0 5
      %1400 = vperm.xlu0 %1399, %v321
      %v1401 = vpop.permute.xlu0 %1400
      %1403 = vset.pattern.permute.xlu0 5
      %1404 = vperm.xlu0 %1403, %v322
      %v1405 = vpop.permute.xlu0 %1404
      %1407 = vset.pattern.permute.xlu0 5
      %1408 = vperm.xlu0 %1407, %v323
      %v1409 = vpop.permute.xlu0 %1408
      %1411 = vset.pattern.permute.xlu0 5
      %1412 = vperm.xlu0 %1411, %v324
      %v1413 = vpop.permute.xlu0 %1412
      %v1415 = vmul.f32 %v1385, %v466
      %v1416 = vmul.f32 %v1385, %v470
      %v1417 = vmul.f32 %v1385, %v474
      %v1418 = vmul.f32 %v1385, %v478
      %v1419 = vmul.f32 %v1389, %v466
      %v1420 = vmul.f32 %v1389, %v470
      %v1421 = vmul.f32 %v1389, %v474
      %v1422 = vmul.f32 %v1389, %v478
      %v1423 = vmul.f32 %v1393, %v466
      %v1424 = vmul.f32 %v1393, %v470
      %v1425 = vmul.f32 %v1393, %v474
      %v1426 = vmul.f32 %v1393, %v478
      %v1427 = vmul.f32 %v1397, %v466
      %v1428 = vmul.f32 %v1397, %v470
      %v1429 = vmul.f32 %v1397, %v474
      %v1430 = vmul.f32 %v1397, %v478
      %v1431 = vmul.f32 %v1401, %v466
      %v1432 = vmul.f32 %v1401, %v470
      %v1433 = vmul.f32 %v1401, %v474
      %v1434 = vmul.f32 %v1401, %v478
      %v1435 = vmul.f32 %v1405, %v466
      %v1436 = vmul.f32 %v1405, %v470
      %v1437 = vmul.f32 %v1405, %v474
      %v1438 = vmul.f32 %v1405, %v478
      %v1439 = vmul.f32 %v1409, %v466
      %v1440 = vmul.f32 %v1409, %v470
      %v1441 = vmul.f32 %v1409, %v474
      %v1442 = vmul.f32 %v1409, %v478
      %v1443 = vmul.f32 %v1413, %v466
      %v1444 = vmul.f32 %v1413, %v470
      %v1445 = vmul.f32 %v1413, %v474
      %v1446 = vmul.f32 %v1413, %v478
      %1479 = vrot.lane.b32.xlu0 %v1415, 108
      %v1480 = vpop.permute.xlu0 %1479
      %1481 = vrot.lane.b32.xlu0 %v1416, 108
      %v1482 = vpop.permute.xlu0 %1481
      %1483 = vrot.lane.b32.xlu0 %v1417, 108
      %v1484 = vpop.permute.xlu0 %1483
      %1485 = vrot.lane.b32.xlu0 %v1418, 108
      %v1486 = vpop.permute.xlu0 %1485
      %1487 = vrot.lane.b32.xlu0 %v1419, 108
      %v1488 = vpop.permute.xlu0 %1487
      %1489 = vrot.lane.b32.xlu0 %v1420, 108
      %v1490 = vpop.permute.xlu0 %1489
      %1491 = vrot.lane.b32.xlu0 %v1421, 108
      %v1492 = vpop.permute.xlu0 %1491
      %1493 = vrot.lane.b32.xlu0 %v1422, 108
      %v1494 = vpop.permute.xlu0 %1493
      %1495 = vrot.lane.b32.xlu0 %v1423, 108
      %v1496 = vpop.permute.xlu0 %1495
      %1497 = vrot.lane.b32.xlu0 %v1424, 108
      %v1498 = vpop.permute.xlu0 %1497
      %1499 = vrot.lane.b32.xlu0 %v1425, 108
      %v1500 = vpop.permute.xlu0 %1499
      %1501 = vrot.lane.b32.xlu0 %v1426, 108
      %v1502 = vpop.permute.xlu0 %1501
      %1503 = vrot.lane.b32.xlu0 %v1427, 108
      %v1504 = vpop.permute.xlu0 %1503
      %1505 = vrot.lane.b32.xlu0 %v1428, 108
      %v1506 = vpop.permute.xlu0 %1505
      %1507 = vrot.lane.b32.xlu0 %v1429, 108
      %v1508 = vpop.permute.xlu0 %1507
      %1509 = vrot.lane.b32.xlu0 %v1430, 108
      %v1510 = vpop.permute.xlu0 %1509
      %1511 = vrot.lane.b32.xlu0 %v1431, 108
      %v1512 = vpop.permute.xlu0 %1511
      %1513 = vrot.lane.b32.xlu0 %v1432, 108
      %v1514 = vpop.permute.xlu0 %1513
      %1515 = vrot.lane.b32.xlu0 %v1433, 108
      %v1516 = vpop.permute.xlu0 %1515
      %1517 = vrot.lane.b32.xlu0 %v1434, 108
      %v1518 = vpop.permute.xlu0 %1517
      %1519 = vrot.lane.b32.xlu0 %v1435, 108
      %v1520 = vpop.permute.xlu0 %1519
      %1521 = vrot.lane.b32.xlu0 %v1436, 108
      %v1522 = vpop.permute.xlu0 %1521
      %1523 = vrot.lane.b32.xlu0 %v1437, 108
      %v1524 = vpop.permute.xlu0 %1523
      %1525 = vrot.lane.b32.xlu0 %v1438, 108
      %v1526 = vpop.permute.xlu0 %1525
      %1527 = vrot.lane.b32.xlu0 %v1439, 108
      %v1528 = vpop.permute.xlu0 %1527
      %1529 = vrot.lane.b32.xlu0 %v1440, 108
      %v1530 = vpop.permute.xlu0 %1529
      %1531 = vrot.lane.b32.xlu0 %v1441, 108
      %v1532 = vpop.permute.xlu0 %1531
      %1533 = vrot.lane.b32.xlu0 %v1442, 108
      %v1534 = vpop.permute.xlu0 %1533
      %1535 = vrot.lane.b32.xlu0 %v1443, 108
      %v1536 = vpop.permute.xlu0 %1535
      %1537 = vrot.lane.b32.xlu0 %v1444, 108
      %v1538 = vpop.permute.xlu0 %1537
      %1539 = vrot.lane.b32.xlu0 %v1445, 108
      %v1540 = vpop.permute.xlu0 %1539
      %1541 = vrot.lane.b32.xlu0 %v1446, 108
      %v1542 = vpop.permute.xlu0 %1541
      %vm1543 = vcmask 883712
      %v1544 = vsel %vm1543, %v1480, %v1482
      %v1545 = vsel %vm1543, %v1482, %v1484
      %v1546 = vsel %vm1543, %v1484, %v1486
      %v1547 = vsel %vm1543, %v1488, %v1490
      %v1548 = vsel %vm1543, %v1490, %v1492
      %v1549 = vsel %vm1543, %v1492, %v1494
      %v1550 = vsel %vm1543, %v1496, %v1498
      %v1551 = vsel %vm1543, %v1498, %v1500
      %v1552 = vsel %vm1543, %v1500, %v1502
      %v1553 = vsel %vm1543, %v1504, %v1506
      %v1554 = vsel %vm1543, %v1506, %v1508
      %v1555 = vsel %vm1543, %v1508, %v1510
      %v1556 = vsel %vm1543, %v1512, %v1514
      %v1557 = vsel %vm1543, %v1514, %v1516
      %v1558 = vsel %vm1543, %v1516, %v1518
      %v1559 = vsel %vm1543, %v1520, %v1522
      %v1560 = vsel %vm1543, %v1522, %v1524
      %v1561 = vsel %vm1543, %v1524, %v1526
      %v1562 = vsel %vm1543, %v1528, %v1530
      %v1563 = vsel %vm1543, %v1530, %v1532
      %v1564 = vsel %vm1543, %v1532, %v1534
      %v1565 = vsel %vm1543, %v1536, %v1538
      %v1566 = vsel %vm1543, %v1538, %v1540
      %v1567 = vsel %vm1543, %v1540, %v1542
      %v1592 = vadd.f32 %v1359, %v1544
      %v1593 = vadd.f32 %v1360, %v1545
      %v1594 = vadd.f32 %v1361, %v1546
      %v1595 = vadd.f32 %v1362, %v1547
      %v1596 = vadd.f32 %v1363, %v1548
      %v1597 = vadd.f32 %v1364, %v1549
      %v1598 = vadd.f32 %v1365, %v1550
      %v1599 = vadd.f32 %v1366, %v1551
      %v1600 = vadd.f32 %v1367, %v1552
      %v1601 = vadd.f32 %v1368, %v1553
      %v1602 = vadd.f32 %v1369, %v1554
      %v1603 = vadd.f32 %v1370, %v1555
      %v1604 = vadd.f32 %v1371, %v1556
      %v1605 = vadd.f32 %v1372, %v1557
      %v1606 = vadd.f32 %v1373, %v1558
      %v1607 = vadd.f32 %v1374, %v1559
      %v1608 = vadd.f32 %v1375, %v1560
      %v1609 = vadd.f32 %v1376, %v1561
      %v1610 = vadd.f32 %v1377, %v1562
      %v1611 = vadd.f32 %v1378, %v1563
      %v1612 = vadd.f32 %v1379, %v1564
      %v1613 = vadd.f32 %v1380, %v1565
      %v1614 = vadd.f32 %v1381, %v1566
      %v1615 = vadd.f32 %v1382, %v1567
      %1616 = vset.pattern.permute.xlu0 6
      %1617 = vperm.xlu0 %1616, %v317
      %v1618 = vpop.permute.xlu0 %1617
      %1620 = vset.pattern.permute.xlu0 6
      %1621 = vperm.xlu0 %1620, %v318
      %v1622 = vpop.permute.xlu0 %1621
      %1624 = vset.pattern.permute.xlu0 6
      %1625 = vperm.xlu0 %1624, %v319
      %v1626 = vpop.permute.xlu0 %1625
      %1628 = vset.pattern.permute.xlu0 6
      %1629 = vperm.xlu0 %1628, %v320
      %v1630 = vpop.permute.xlu0 %1629
      %1632 = vset.pattern.permute.xlu0 6
      %1633 = vperm.xlu0 %1632, %v321
      %v1634 = vpop.permute.xlu0 %1633
      %1636 = vset.pattern.permute.xlu0 6
      %1637 = vperm.xlu0 %1636, %v322
      %v1638 = vpop.permute.xlu0 %1637
      %1640 = vset.pattern.permute.xlu0 6
      %1641 = vperm.xlu0 %1640, %v323
      %v1642 = vpop.permute.xlu0 %1641
      %1644 = vset.pattern.permute.xlu0 6
      %1645 = vperm.xlu0 %1644, %v324
      %v1646 = vpop.permute.xlu0 %1645
      %v1648 = vmul.f32 %v1618, %v466
      %v1649 = vmul.f32 %v1618, %v470
      %v1650 = vmul.f32 %v1618, %v474
      %v1651 = vmul.f32 %v1618, %v478
      %v1652 = vmul.f32 %v1622, %v466
      %v1653 = vmul.f32 %v1622, %v470
      %v1654 = vmul.f32 %v1622, %v474
      %v1655 = vmul.f32 %v1622, %v478
      %v1656 = vmul.f32 %v1626, %v466
      %v1657 = vmul.f32 %v1626, %v470
      %v1658 = vmul.f32 %v1626, %v474
      %v1659 = vmul.f32 %v1626, %v478
      %v1660 = vmul.f32 %v1630, %v466
      %v1661 = vmul.f32 %v1630, %v470
      %v1662 = vmul.f32 %v1630, %v474
      %v1663 = vmul.f32 %v1630, %v478
      %v1664 = vmul.f32 %v1634, %v466
      %v1665 = vmul.f32 %v1634, %v470
      %v1666 = vmul.f32 %v1634, %v474
      %v1667 = vmul.f32 %v1634, %v478
      %v1668 = vmul.f32 %v1638, %v466
      %v1669 = vmul.f32 %v1638, %v470
      %v1670 = vmul.f32 %v1638, %v474
      %v1671 = vmul.f32 %v1638, %v478
      %v1672 = vmul.f32 %v1642, %v466
      %v1673 = vmul.f32 %v1642, %v470
      %v1674 = vmul.f32 %v1642, %v474
      %v1675 = vmul.f32 %v1642, %v478
      %v1676 = vmul.f32 %v1646, %v466
      %v1677 = vmul.f32 %v1646, %v470
      %v1678 = vmul.f32 %v1646, %v474
      %v1679 = vmul.f32 %v1646, %v478
      %1712 = vrot.lane.b32.xlu0 %v1648, 92
      %v1713 = vpop.permute.xlu0 %1712
      %1714 = vrot.lane.b32.xlu0 %v1649, 92
      %v1715 = vpop.permute.xlu0 %1714
      %1716 = vrot.lane.b32.xlu0 %v1650, 92
      %v1717 = vpop.permute.xlu0 %1716
      %1718 = vrot.lane.b32.xlu0 %v1651, 92
      %v1719 = vpop.permute.xlu0 %1718
      %1720 = vrot.lane.b32.xlu0 %v1652, 92
      %v1721 = vpop.permute.xlu0 %1720
      %1722 = vrot.lane.b32.xlu0 %v1653, 92
      %v1723 = vpop.permute.xlu0 %1722
      %1724 = vrot.lane.b32.xlu0 %v1654, 92
      %v1725 = vpop.permute.xlu0 %1724
      %1726 = vrot.lane.b32.xlu0 %v1655, 92
      %v1727 = vpop.permute.xlu0 %1726
      %1728 = vrot.lane.b32.xlu0 %v1656, 92
      %v1729 = vpop.permute.xlu0 %1728
      %1730 = vrot.lane.b32.xlu0 %v1657, 92
      %v1731 = vpop.permute.xlu0 %1730
      %1732 = vrot.lane.b32.xlu0 %v1658, 92
      %v1733 = vpop.permute.xlu0 %1732
      %1734 = vrot.lane.b32.xlu0 %v1659, 92
      %v1735 = vpop.permute.xlu0 %1734
      %1736 = vrot.lane.b32.xlu0 %v1660, 92
      %v1737 = vpop.permute.xlu0 %1736
      %1738 = vrot.lane.b32.xlu0 %v1661, 92
      %v1739 = vpop.permute.xlu0 %1738
      %1740 = vrot.lane.b32.xlu0 %v1662, 92
      %v1741 = vpop.permute.xlu0 %1740
      %1742 = vrot.lane.b32.xlu0 %v1663, 92
      %v1743 = vpop.permute.xlu0 %1742
      %1744 = vrot.lane.b32.xlu0 %v1664, 92
      %v1745 = vpop.permute.xlu0 %1744
      %1746 = vrot.lane.b32.xlu0 %v1665, 92
      %v1747 = vpop.permute.xlu0 %1746
      %1748 = vrot.lane.b32.xlu0 %v1666, 92
      %v1749 = vpop.permute.xlu0 %1748
      %1750 = vrot.lane.b32.xlu0 %v1667, 92
      %v1751 = vpop.permute.xlu0 %1750
      %1752 = vrot.lane.b32.xlu0 %v1668, 92
      %v1753 = vpop.permute.xlu0 %1752
      %1754 = vrot.lane.b32.xlu0 %v1669, 92
      %v1755 = vpop.permute.xlu0 %1754
      %1756 = vrot.lane.b32.xlu0 %v1670, 92
      %v1757 = vpop.permute.xlu0 %1756
      %1758 = vrot.lane.b32.xlu0 %v1671, 92
      %v1759 = vpop.permute.xlu0 %1758
      %1760 = vrot.lane.b32.xlu0 %v1672, 92
      %v1761 = vpop.permute.xlu0 %1760
      %1762 = vrot.lane.b32.xlu0 %v1673, 92
      %v1763 = vpop.permute.xlu0 %1762
      %1764 = vrot.lane.b32.xlu0 %v1674, 92
      %v1765 = vpop.permute.xlu0 %1764
      %1766 = vrot.lane.b32.xlu0 %v1675, 92
      %v1767 = vpop.permute.xlu0 %1766
      %1768 = vrot.lane.b32.xlu0 %v1676, 92
      %v1769 = vpop.permute.xlu0 %1768
      %1770 = vrot.lane.b32.xlu0 %v1677, 92
      %v1771 = vpop.permute.xlu0 %1770
      %1772 = vrot.lane.b32.xlu0 %v1678, 92
      %v1773 = vpop.permute.xlu0 %1772
      %1774 = vrot.lane.b32.xlu0 %v1679, 92
      %v1775 = vpop.permute.xlu0 %1774
      %vm1776 = vcmask 752640
      %v1777 = vsel %vm1776, %v1713, %v1715
      %v1778 = vsel %vm1776, %v1715, %v1717
      %v1779 = vsel %vm1776, %v1717, %v1719
      %v1780 = vsel %vm1776, %v1721, %v1723
      %v1781 = vsel %vm1776, %v1723, %v1725
      %v1782 = vsel %vm1776, %v1725, %v1727
      %v1783 = vsel %vm1776, %v1729, %v1731
      %v1784 = vsel %vm1776, %v1731, %v1733
      %v1785 = vsel %vm1776, %v1733, %v1735
      %v1786 = vsel %vm1776, %v1737, %v1739
      %v1787 = vsel %vm1776, %v1739, %v1741
      %v1788 = vsel %vm1776, %v1741, %v1743
      %v1789 = vsel %vm1776, %v1745, %v1747
      %v1790 = vsel %vm1776, %v1747, %v1749
      %v1791 = vsel %vm1776, %v1749, %v1751
      %v1792 = vsel %vm1776, %v1753, %v1755
      %v1793 = vsel %vm1776, %v1755, %v1757
      %v1794 = vsel %vm1776, %v1757, %v1759
      %v1795 = vsel %vm1776, %v1761, %v1763
      %v1796 = vsel %vm1776, %v1763, %v1765
      %v1797 = vsel %vm1776, %v1765, %v1767
      %v1798 = vsel %vm1776, %v1769, %v1771
      %v1799 = vsel %vm1776, %v1771, %v1773
      %v1800 = vsel %vm1776, %v1773, %v1775
      %v1825 = vadd.f32 %v1592, %v1777
      %v1826 = vadd.f32 %v1593, %v1778
      %v1827 = vadd.f32 %v1594, %v1779
      %v1828 = vadd.f32 %v1595, %v1780
      %v1829 = vadd.f32 %v1596, %v1781
      %v1830 = vadd.f32 %v1597, %v1782
      %v1831 = vadd.f32 %v1598, %v1783
      %v1832 = vadd.f32 %v1599, %v1784
      %v1833 = vadd.f32 %v1600, %v1785
      %v1834 = vadd.f32 %v1601, %v1786
      %v1835 = vadd.f32 %v1602, %v1787
      %v1836 = vadd.f32 %v1603, %v1788
      %v1837 = vadd.f32 %v1604, %v1789
      %v1838 = vadd.f32 %v1605, %v1790
      %v1839 = vadd.f32 %v1606, %v1791
      %v1840 = vadd.f32 %v1607, %v1792
      %v1841 = vadd.f32 %v1608, %v1793
      %v1842 = vadd.f32 %v1609, %v1794
      %v1843 = vadd.f32 %v1610, %v1795
      %v1844 = vadd.f32 %v1611, %v1796
      %v1845 = vadd.f32 %v1612, %v1797
      %v1846 = vadd.f32 %v1613, %v1798
      %v1847 = vadd.f32 %v1614, %v1799
      %v1848 = vadd.f32 %v1615, %v1800
      %1849 = vset.pattern.permute.xlu0 7
      %1850 = vperm.xlu0 %1849, %v317
      %v1851 = vpop.permute.xlu0 %1850
      %1853 = vset.pattern.permute.xlu0 7
      %1854 = vperm.xlu0 %1853, %v318
      %v1855 = vpop.permute.xlu0 %1854
      %1857 = vset.pattern.permute.xlu0 7
      %1858 = vperm.xlu0 %1857, %v319
      %v1859 = vpop.permute.xlu0 %1858
      %1861 = vset.pattern.permute.xlu0 7
      %1862 = vperm.xlu0 %1861, %v320
      %v1863 = vpop.permute.xlu0 %1862
      %1865 = vset.pattern.permute.xlu0 7
      %1866 = vperm.xlu0 %1865, %v321
      %v1867 = vpop.permute.xlu0 %1866
      %1869 = vset.pattern.permute.xlu0 7
      %1870 = vperm.xlu0 %1869, %v322
      %v1871 = vpop.permute.xlu0 %1870
      %1873 = vset.pattern.permute.xlu0 7
      %1874 = vperm.xlu0 %1873, %v323
      %v1875 = vpop.permute.xlu0 %1874
      %1877 = vset.pattern.permute.xlu0 7
      %1878 = vperm.xlu0 %1877, %v324
      %v1879 = vpop.permute.xlu0 %1878
      %v1881 = vmul.f32 %v1851, %v466
      %v1882 = vmul.f32 %v1851, %v470
      %v1883 = vmul.f32 %v1851, %v474
      %v1884 = vmul.f32 %v1851, %v478
      %v1885 = vmul.f32 %v1855, %v466
      %v1886 = vmul.f32 %v1855, %v470
      %v1887 = vmul.f32 %v1855, %v474
      %v1888 = vmul.f32 %v1855, %v478
      %v1889 = vmul.f32 %v1859, %v466
      %v1890 = vmul.f32 %v1859, %v470
      %v1891 = vmul.f32 %v1859, %v474
      %v1892 = vmul.f32 %v1859, %v478
      %v1893 = vmul.f32 %v1863, %v466
      %v1894 = vmul.f32 %v1863, %v470
      %v1895 = vmul.f32 %v1863, %v474
      %v1896 = vmul.f32 %v1863, %v478
      %v1897 = vmul.f32 %v1867, %v466
      %v1898 = vmul.f32 %v1867, %v470
      %v1899 = vmul.f32 %v1867, %v474
      %v1900 = vmul.f32 %v1867, %v478
      %v1901 = vmul.f32 %v1871, %v466
      %v1902 = vmul.f32 %v1871, %v470
      %v1903 = vmul.f32 %v1871, %v474
      %v1904 = vmul.f32 %v1871, %v478
      %v1905 = vmul.f32 %v1875, %v466
      %v1906 = vmul.f32 %v1875, %v470
      %v1907 = vmul.f32 %v1875, %v474
      %v1908 = vmul.f32 %v1875, %v478
      %v1909 = vmul.f32 %v1879, %v466
      %v1910 = vmul.f32 %v1879, %v470
      %v1911 = vmul.f32 %v1879, %v474
      %v1912 = vmul.f32 %v1879, %v478
      %1945 = vrot.lane.b32.xlu0 %v1881, 91
      %v1946 = vpop.permute.xlu0 %1945
      %1947 = vrot.lane.b32.xlu0 %v1882, 91
      %v1948 = vpop.permute.xlu0 %1947
      %1949 = vrot.lane.b32.xlu0 %v1883, 91
      %v1950 = vpop.permute.xlu0 %1949
      %1951 = vrot.lane.b32.xlu0 %v1884, 91
      %v1952 = vpop.permute.xlu0 %1951
      %1953 = vrot.lane.b32.xlu0 %v1885, 91
      %v1954 = vpop.permute.xlu0 %1953
      %1955 = vrot.lane.b32.xlu0 %v1886, 91
      %v1956 = vpop.permute.xlu0 %1955
      %1957 = vrot.lane.b32.xlu0 %v1887, 91
      %v1958 = vpop.permute.xlu0 %1957
      %1959 = vrot.lane.b32.xlu0 %v1888, 91
      %v1960 = vpop.permute.xlu0 %1959
      %1961 = vrot.lane.b32.xlu0 %v1889, 91
      %v1962 = vpop.permute.xlu0 %1961
      %1963 = vrot.lane.b32.xlu0 %v1890, 91
      %v1964 = vpop.permute.xlu0 %1963
      %1965 = vrot.lane.b32.xlu0 %v1891, 91
      %v1966 = vpop.permute.xlu0 %1965
      %1967 = vrot.lane.b32.xlu0 %v1892, 91
      %v1968 = vpop.permute.xlu0 %1967
      %1969 = vrot.lane.b32.xlu0 %v1893, 91
      %v1970 = vpop.permute.xlu0 %1969
      %1971 = vrot.lane.b32.xlu0 %v1894, 91
      %v1972 = vpop.permute.xlu0 %1971
      %1973 = vrot.lane.b32.xlu0 %v1895, 91
      %v1974 = vpop.permute.xlu0 %1973
      %1975 = vrot.lane.b32.xlu0 %v1896, 91
      %v1976 = vpop.permute.xlu0 %1975
      %1977 = vrot.lane.b32.xlu0 %v1897, 91
      %v1978 = vpop.permute.xlu0 %1977
      %1979 = vrot.lane.b32.xlu0 %v1898, 91
      %v1980 = vpop.permute.xlu0 %1979
      %1981 = vrot.lane.b32.xlu0 %v1899, 91
      %v1982 = vpop.permute.xlu0 %1981
      %1983 = vrot.lane.b32.xlu0 %v1900, 91
      %v1984 = vpop.permute.xlu0 %1983
      %1985 = vrot.lane.b32.xlu0 %v1901, 91
      %v1986 = vpop.permute.xlu0 %1985
      %1987 = vrot.lane.b32.xlu0 %v1902, 91
      %v1988 = vpop.permute.xlu0 %1987
      %1989 = vrot.lane.b32.xlu0 %v1903, 91
      %v1990 = vpop.permute.xlu0 %1989
      %1991 = vrot.lane.b32.xlu0 %v1904, 91
      %v1992 = vpop.permute.xlu0 %1991
      %1993 = vrot.lane.b32.xlu0 %v1905, 91
      %v1994 = vpop.permute.xlu0 %1993
      %1995 = vrot.lane.b32.xlu0 %v1906, 91
      %v1996 = vpop.permute.xlu0 %1995
      %1997 = vrot.lane.b32.xlu0 %v1907, 91
      %v1998 = vpop.permute.xlu0 %1997
      %1999 = vrot.lane.b32.xlu0 %v1908, 91
      %v2000 = vpop.permute.xlu0 %1999
      %2001 = vrot.lane.b32.xlu0 %v1909, 91
      %v2002 = vpop.permute.xlu0 %2001
      %2003 = vrot.lane.b32.xlu0 %v1910, 91
      %v2004 = vpop.permute.xlu0 %2003
      %2005 = vrot.lane.b32.xlu0 %v1911, 91
      %v2006 = vpop.permute.xlu0 %2005
      %2007 = vrot.lane.b32.xlu0 %v1912, 91
      %v2008 = vpop.permute.xlu0 %2007
      %vm2009 = vcmask 744448
      %v2010 = vsel %vm2009, %v1946, %v1948
      %v2011 = vsel %vm2009, %v1948, %v1950
      %v2012 = vsel %vm2009, %v1950, %v1952
      %v2013 = vsel %vm2009, %v1954, %v1956
      %v2014 = vsel %vm2009, %v1956, %v1958
      %v2015 = vsel %vm2009, %v1958, %v1960
      %v2016 = vsel %vm2009, %v1962, %v1964
      %v2017 = vsel %vm2009, %v1964, %v1966
      %v2018 = vsel %vm2009, %v1966, %v1968
      %v2019 = vsel %vm2009, %v1970, %v1972
      %v2020 = vsel %vm2009, %v1972, %v1974
      %v2021 = vsel %vm2009, %v1974, %v1976
      %v2022 = vsel %vm2009, %v1978, %v1980
      %v2023 = vsel %vm2009, %v1980, %v1982
      %v2024 = vsel %vm2009, %v1982, %v1984
      %v2025 = vsel %vm2009, %v1986, %v1988
      %v2026 = vsel %vm2009, %v1988, %v1990
      %v2027 = vsel %vm2009, %v1990, %v1992
      %v2028 = vsel %vm2009, %v1994, %v1996
      %v2029 = vsel %vm2009, %v1996, %v1998
      %v2030 = vsel %vm2009, %v1998, %v2000
      %v2031 = vsel %vm2009, %v2002, %v2004
      %v2032 = vsel %vm2009, %v2004, %v2006
      %v2033 = vsel %vm2009, %v2006, %v2008
      %v2058 = vadd.f32 %v1825, %v2010
      %v2059 = vadd.f32 %v1826, %v2011
      %v2060 = vadd.f32 %v1827, %v2012
      %v2061 = vadd.f32 %v1828, %v2013
      %v2062 = vadd.f32 %v1829, %v2014
      %v2063 = vadd.f32 %v1830, %v2015
      %v2064 = vadd.f32 %v1831, %v2016
      %v2065 = vadd.f32 %v1832, %v2017
      %v2066 = vadd.f32 %v1833, %v2018
      %v2067 = vadd.f32 %v1834, %v2019
      %v2068 = vadd.f32 %v1835, %v2020
      %v2069 = vadd.f32 %v1836, %v2021
      %v2070 = vadd.f32 %v1837, %v2022
      %v2071 = vadd.f32 %v1838, %v2023
      %v2072 = vadd.f32 %v1839, %v2024
      %v2073 = vadd.f32 %v1840, %v2025
      %v2074 = vadd.f32 %v1841, %v2026
      %v2075 = vadd.f32 %v1842, %v2027
      %v2076 = vadd.f32 %v1843, %v2028
      %v2077 = vadd.f32 %v1844, %v2029
      %v2078 = vadd.f32 %v1845, %v2030
      %v2079 = vadd.f32 %v1846, %v2031
      %v2080 = vadd.f32 %v1847, %v2032
      %v2081 = vadd.f32 %v1848, %v2033
      %2082 = vset.pattern.permute.xlu0 8
      %2083 = vperm.xlu0 %2082, %v317
      %v2084 = vpop.permute.xlu0 %2083
      %2086 = vset.pattern.permute.xlu0 8
      %2087 = vperm.xlu0 %2086, %v318
      %v2088 = vpop.permute.xlu0 %2087
      %2090 = vset.pattern.permute.xlu0 8
      %2091 = vperm.xlu0 %2090, %v319
      %v2092 = vpop.permute.xlu0 %2091
      %2094 = vset.pattern.permute.xlu0 8
      %2095 = vperm.xlu0 %2094, %v320
      %v2096 = vpop.permute.xlu0 %2095
      %2098 = vset.pattern.permute.xlu0 8
      %2099 = vperm.xlu0 %2098, %v321
      %v2100 = vpop.permute.xlu0 %2099
      %2102 = vset.pattern.permute.xlu0 8
      %2103 = vperm.xlu0 %2102, %v322
      %v2104 = vpop.permute.xlu0 %2103
      %2106 = vset.pattern.permute.xlu0 8
      %2107 = vperm.xlu0 %2106, %v323
      %v2108 = vpop.permute.xlu0 %2107
      %2110 = vset.pattern.permute.xlu0 8
      %2111 = vperm.xlu0 %2110, %v324
      %v2112 = vpop.permute.xlu0 %2111
      %v2114 = vmul.f32 %v2084, %v466
      %v2115 = vmul.f32 %v2084, %v470
      %v2116 = vmul.f32 %v2084, %v474
      %v2117 = vmul.f32 %v2084, %v478
      %v2118 = vmul.f32 %v2088, %v466
      %v2119 = vmul.f32 %v2088, %v470
      %v2120 = vmul.f32 %v2088, %v474
      %v2121 = vmul.f32 %v2088, %v478
      %v2122 = vmul.f32 %v2092, %v466
      %v2123 = vmul.f32 %v2092, %v470
      %v2124 = vmul.f32 %v2092, %v474
      %v2125 = vmul.f32 %v2092, %v478
      %v2126 = vmul.f32 %v2096, %v466
      %v2127 = vmul.f32 %v2096, %v470
      %v2128 = vmul.f32 %v2096, %v474
      %v2129 = vmul.f32 %v2096, %v478
      %v2130 = vmul.f32 %v2100, %v466
      %v2131 = vmul.f32 %v2100, %v470
      %v2132 = vmul.f32 %v2100, %v474
      %v2133 = vmul.f32 %v2100, %v478
      %v2134 = vmul.f32 %v2104, %v466
      %v2135 = vmul.f32 %v2104, %v470
      %v2136 = vmul.f32 %v2104, %v474
      %v2137 = vmul.f32 %v2104, %v478
      %v2138 = vmul.f32 %v2108, %v466
      %v2139 = vmul.f32 %v2108, %v470
      %v2140 = vmul.f32 %v2108, %v474
      %v2141 = vmul.f32 %v2108, %v478
      %v2142 = vmul.f32 %v2112, %v466
      %v2143 = vmul.f32 %v2112, %v470
      %v2144 = vmul.f32 %v2112, %v474
      %v2145 = vmul.f32 %v2112, %v478
      %2178 = vrot.lane.b32.xlu0 %v2114, 90
      %v2179 = vpop.permute.xlu0 %2178
      %2180 = vrot.lane.b32.xlu0 %v2115, 90
      %v2181 = vpop.permute.xlu0 %2180
      %2182 = vrot.lane.b32.xlu0 %v2116, 90
      %v2183 = vpop.permute.xlu0 %2182
      %2184 = vrot.lane.b32.xlu0 %v2117, 90
      %v2185 = vpop.permute.xlu0 %2184
      %2186 = vrot.lane.b32.xlu0 %v2118, 90
      %v2187 = vpop.permute.xlu0 %2186
      %2188 = vrot.lane.b32.xlu0 %v2119, 90
      %v2189 = vpop.permute.xlu0 %2188
      %2190 = vrot.lane.b32.xlu0 %v2120, 90
      %v2191 = vpop.permute.xlu0 %2190
      %2192 = vrot.lane.b32.xlu0 %v2121, 90
      %v2193 = vpop.permute.xlu0 %2192
      %2194 = vrot.lane.b32.xlu0 %v2122, 90
      %v2195 = vpop.permute.xlu0 %2194
      %2196 = vrot.lane.b32.xlu0 %v2123, 90
      %v2197 = vpop.permute.xlu0 %2196
      %2198 = vrot.lane.b32.xlu0 %v2124, 90
      %v2199 = vpop.permute.xlu0 %2198
      %2200 = vrot.lane.b32.xlu0 %v2125, 90
      %v2201 = vpop.permute.xlu0 %2200
      %2202 = vrot.lane.b32.xlu0 %v2126, 90
      %v2203 = vpop.permute.xlu0 %2202
      %2204 = vrot.lane.b32.xlu0 %v2127, 90
      %v2205 = vpop.permute.xlu0 %2204
      %2206 = vrot.lane.b32.xlu0 %v2128, 90
      %v2207 = vpop.permute.xlu0 %2206
      %2208 = vrot.lane.b32.xlu0 %v2129, 90
      %v2209 = vpop.permute.xlu0 %2208
      %2210 = vrot.lane.b32.xlu0 %v2130, 90
      %v2211 = vpop.permute.xlu0 %2210
      %2212 = vrot.lane.b32.xlu0 %v2131, 90
      %v2213 = vpop.permute.xlu0 %2212
      %2214 = vrot.lane.b32.xlu0 %v2132, 90
      %v2215 = vpop.permute.xlu0 %2214
      %2216 = vrot.lane.b32.xlu0 %v2133, 90
      %v2217 = vpop.permute.xlu0 %2216
      %2218 = vrot.lane.b32.xlu0 %v2134, 90
      %v2219 = vpop.permute.xlu0 %2218
      %2220 = vrot.lane.b32.xlu0 %v2135, 90
      %v2221 = vpop.permute.xlu0 %2220
      %2222 = vrot.lane.b32.xlu0 %v2136, 90
      %v2223 = vpop.permute.xlu0 %2222
      %2224 = vrot.lane.b32.xlu0 %v2137, 90
      %v2225 = vpop.permute.xlu0 %2224
      %2226 = vrot.lane.b32.xlu0 %v2138, 90
      %v2227 = vpop.permute.xlu0 %2226
      %2228 = vrot.lane.b32.xlu0 %v2139, 90
      %v2229 = vpop.permute.xlu0 %2228
      %2230 = vrot.lane.b32.xlu0 %v2140, 90
      %v2231 = vpop.permute.xlu0 %2230
      %2232 = vrot.lane.b32.xlu0 %v2141, 90
      %v2233 = vpop.permute.xlu0 %2232
      %2234 = vrot.lane.b32.xlu0 %v2142, 90
      %v2235 = vpop.permute.xlu0 %2234
      %2236 = vrot.lane.b32.xlu0 %v2143, 90
      %v2237 = vpop.permute.xlu0 %2236
      %2238 = vrot.lane.b32.xlu0 %v2144, 90
      %v2239 = vpop.permute.xlu0 %2238
      %2240 = vrot.lane.b32.xlu0 %v2145, 90
      %v2241 = vpop.permute.xlu0 %2240
      %vm2242 = vcmask 736256
      %v2243 = vsel %vm2242, %v2179, %v2181
      %v2244 = vsel %vm2242, %v2181, %v2183
      %v2245 = vsel %vm2242, %v2183, %v2185
      %v2246 = vsel %vm2242, %v2187, %v2189
      %v2247 = vsel %vm2242, %v2189, %v2191
      %v2248 = vsel %vm2242, %v2191, %v2193
      %v2249 = vsel %vm2242, %v2195, %v2197
      %v2250 = vsel %vm2242, %v2197, %v2199
      %v2251 = vsel %vm2242, %v2199, %v2201
      %v2252 = vsel %vm2242, %v2203, %v2205
      %v2253 = vsel %vm2242, %v2205, %v2207
      %v2254 = vsel %vm2242, %v2207, %v2209
      %v2255 = vsel %vm2242, %v2211, %v2213
      %v2256 = vsel %vm2242, %v2213, %v2215
      %v2257 = vsel %vm2242, %v2215, %v2217
      %v2258 = vsel %vm2242, %v2219, %v2221
      %v2259 = vsel %vm2242, %v2221, %v2223
      %v2260 = vsel %vm2242, %v2223, %v2225
      %v2261 = vsel %vm2242, %v2227, %v2229
      %v2262 = vsel %vm2242, %v2229, %v2231
      %v2263 = vsel %vm2242, %v2231, %v2233
      %v2264 = vsel %vm2242, %v2235, %v2237
      %v2265 = vsel %vm2242, %v2237, %v2239
      %v2266 = vsel %vm2242, %v2239, %v2241
      %v2291 = vadd.f32 %v2058, %v2243
      %v2292 = vadd.f32 %v2059, %v2244
      %v2293 = vadd.f32 %v2060, %v2245
      %v2294 = vadd.f32 %v2061, %v2246
      %v2295 = vadd.f32 %v2062, %v2247
      %v2296 = vadd.f32 %v2063, %v2248
      %v2297 = vadd.f32 %v2064, %v2249
      %v2298 = vadd.f32 %v2065, %v2250
      %v2299 = vadd.f32 %v2066, %v2251
      %v2300 = vadd.f32 %v2067, %v2252
      %v2301 = vadd.f32 %v2068, %v2253
      %v2302 = vadd.f32 %v2069, %v2254
      %v2303 = vadd.f32 %v2070, %v2255
      %v2304 = vadd.f32 %v2071, %v2256
      %v2305 = vadd.f32 %v2072, %v2257
      %v2306 = vadd.f32 %v2073, %v2258
      %v2307 = vadd.f32 %v2074, %v2259
      %v2308 = vadd.f32 %v2075, %v2260
      %v2309 = vadd.f32 %v2076, %v2261
      %v2310 = vadd.f32 %v2077, %v2262
      %v2311 = vadd.f32 %v2078, %v2263
      %v2312 = vadd.f32 %v2079, %v2264
      %v2313 = vadd.f32 %v2080, %v2265
      %v2314 = vadd.f32 %v2081, %v2266
      %v2315 = vld [vmem:[%s1] sm:$0x7]
      %v2316 = vld [vmem:[%s3] sm:$0xff]
      %v2317 = vld [vmem:[%s3 + $0x8] sm:$0xff]
      %v2318 = vld [vmem:[%s3 + $0x10] sm:$0xff]
      %v2319 = vld [vmem:[%s3 + $0x18] sm:$0xff]
      %v2320 = vld [vmem:[%s3 + $0x20] sm:$0xff]
      %v2321 = vld [vmem:[%s3 + $0x28] sm:$0xff]
      %v2322 = vld [vmem:[%s3 + $0x30] sm:$0xff]
      %v2323 = vld [vmem:[%s3 + $0x38] sm:$0xff]
      %2325 = vset.pattern.permute.xlu0 0
      %2326 = vperm.xlu0 %2325, %v2316
      %v2327 = vpop.permute.xlu0 %2326
      %2330 = vset.pattern.permute.xlu0 0
      %2331 = vperm.xlu0 %2330, %v2317
      %v2332 = vpop.permute.xlu0 %2331
      %2335 = vset.pattern.permute.xlu0 0
      %2336 = vperm.xlu0 %2335, %v2318
      %v2337 = vpop.permute.xlu0 %2336
      %2340 = vset.pattern.permute.xlu0 0
      %2341 = vperm.xlu0 %2340, %v2319
      %v2342 = vpop.permute.xlu0 %2341
      %2345 = vset.pattern.permute.xlu0 0
      %2346 = vperm.xlu0 %2345, %v2320
      %v2347 = vpop.permute.xlu0 %2346
      %2350 = vset.pattern.permute.xlu0 0
      %2351 = vperm.xlu0 %2350, %v2321
      %v2352 = vpop.permute.xlu0 %2351
      %2355 = vset.pattern.permute.xlu0 0
      %2356 = vperm.xlu0 %2355, %v2322
      %v2357 = vpop.permute.xlu0 %2356
      %2360 = vset.pattern.permute.xlu0 0
      %2361 = vperm.xlu0 %2360, %v2323
      %v2362 = vpop.permute.xlu0 %2361
      %v2364 = vadd.f32 %v2291, %v2327
      %v2365 = vadd.f32 %v2292, %v2327
      %v2366 = vadd.f32 %v2293, %v2327
      %v2367 = vadd.f32 %v2294, %v2332
      %v2368 = vadd.f32 %v2295, %v2332
      %v2369 = vadd.f32 %v2296, %v2332
      %v2370 = vadd.f32 %v2297, %v2337
      %v2371 = vadd.f32 %v2298, %v2337
      %v2372 = vadd.f32 %v2299, %v2337
      %v2373 = vadd.f32 %v2300, %v2342
      %v2374 = vadd.f32 %v2301, %v2342
      %v2375 = vadd.f32 %v2302, %v2342
      %v2376 = vadd.f32 %v2303, %v2347
      %v2377 = vadd.f32 %v2304, %v2347
      %v2378 = vadd.f32 %v2305, %v2347
      %v2379 = vadd.f32 %v2306, %v2352
      %v2380 = vadd.f32 %v2307, %v2352
      %v2381 = vadd.f32 %v2308, %v2352
      %v2382 = vadd.f32 %v2309, %v2357
      %v2383 = vadd.f32 %v2310, %v2357
      %v2384 = vadd.f32 %v2311, %v2357
      %v2385 = vadd.f32 %v2312, %v2362
      %v2386 = vadd.f32 %v2313, %v2362
      %v2387 = vadd.f32 %v2314, %v2362
      %v2388 = vmax.f32 %v2364, 0.0
      %v2389 = vmax.f32 %v2365, 0.0
      %v2390 = vmax.f32 %v2366, 0.0
      %v2391 = vmax.f32 %v2367, 0.0
      %v2392 = vmax.f32 %v2368, 0.0
      %v2393 = vmax.f32 %v2369, 0.0
      %v2394 = vmax.f32 %v2370, 0.0
      %v2395 = vmax.f32 %v2371, 0.0
      %v2396 = vmax.f32 %v2372, 0.0
      %v2397 = vmax.f32 %v2373, 0.0
      %v2398 = vmax.f32 %v2374, 0.0
      %v2399 = vmax.f32 %v2375, 0.0
      %v2400 = vmax.f32 %v2376, 0.0
      %v2401 = vmax.f32 %v2377, 0.0
      %v2402 = vmax.f32 %v2378, 0.0
      %v2403 = vmax.f32 %v2379, 0.0
      %v2404 = vmax.f32 %v2380, 0.0
      %v2405 = vmax.f32 %v2381, 0.0
      %v2406 = vmax.f32 %v2382, 0.0
      %v2407 = vmax.f32 %v2383, 0.0
      %v2408 = vmax.f32 %v2384, 0.0
      %v2409 = vmax.f32 %v2385, 0.0
      %v2410 = vmax.f32 %v2386, 0.0
      %v2411 = vmax.f32 %v2387, 0.0
      %v2413 = vlaneseq
      %v2414 = vshrl.u32 %v2413, 7
      %v2415 = vsub.s32 0, %v2414
      %v2416 = vrot.slane %v2315, %v2415
      %v2417 = vlaneseq
      %v2418 = vshrl.u32 %v2417, 7
      %v2419 = vsub.s32 1, %v2418
      %v2420 = vrot.slane %v2315, %v2419
      %v2421 = vlaneseq
      %v2422 = vshrl.u32 %v2421, 7
      %v2423 = vsub.s32 2, %v2422
      %v2424 = vrot.slane %v2315, %v2423
      %v2428 = vmul.f32 %v2388, %v2416
      %v2429 = vmul.f32 %v2389, %v2420
      %v2430 = vmul.f32 %v2390, %v2424
      %v2431 = vmul.f32 %v2391, %v2416
      %v2432 = vmul.f32 %v2392, %v2420
      %v2433 = vmul.f32 %v2393, %v2424
      %v2434 = vmul.f32 %v2394, %v2416
      %v2435 = vmul.f32 %v2395, %v2420
      %v2436 = vmul.f32 %v2396, %v2424
      %v2437 = vmul.f32 %v2397, %v2416
      %v2438 = vmul.f32 %v2398, %v2420
      %v2439 = vmul.f32 %v2399, %v2424
      %v2440 = vmul.f32 %v2400, %v2416
      %v2441 = vmul.f32 %v2401, %v2420
      %v2442 = vmul.f32 %v2402, %v2424
      %v2443 = vmul.f32 %v2403, %v2416
      %v2444 = vmul.f32 %v2404, %v2420
      %v2445 = vmul.f32 %v2405, %v2424
      %v2446 = vmul.f32 %v2406, %v2416
      %v2447 = vmul.f32 %v2407, %v2420
      %v2448 = vmul.f32 %v2408, %v2424
      %v2449 = vmul.f32 %v2409, %v2416
      %v2450 = vmul.f32 %v2410, %v2420
      %v2451 = vmul.f32 %v2411, %v2424
      %v2452 = vpack.c.bf16 %v2431, %v2428
      %v2453 = vpack.c.bf16 %v2432, %v2429
      %v2454 = vpack.c.bf16 %v2433, %v2430
      %v2455 = vpack.c.bf16 %v2437, %v2434
      %v2456 = vpack.c.bf16 %v2438, %v2435
      %v2457 = vpack.c.bf16 %v2439, %v2436
      %v2458 = vpack.c.bf16 %v2443, %v2440
      %v2459 = vpack.c.bf16 %v2444, %v2441
      %v2460 = vpack.c.bf16 %v2445, %v2442
      %v2461 = vpack.c.bf16 %v2449, %v2446
      %v2462 = vpack.c.bf16 %v2450, %v2447
      %v2463 = vpack.c.bf16 %v2451, %v2448
      %2464 = vst [vmem:[#allocation2 + $0x8] sm:$0xff] %v2452
      %2465 = vst [vmem:[#allocation2 + $0x10] sm:$0xff] %v2453
      %2466 = vst [vmem:[#allocation2 + $0x18] sm:$0xff] %v2454
      %2467 = vst [vmem:[#allocation2 + $0x30] sm:$0xff] %v2455
      %2468 = vst [vmem:[#allocation2 + $0x38] sm:$0xff] %v2456
      %2469 = vst [vmem:[#allocation2 + $0x40] sm:$0xff] %v2457
      %2470 = vst [vmem:[#allocation2 + $0x58] sm:$0xff] %v2458
      %2471 = vst [vmem:[#allocation2 + $0x60] sm:$0xff] %v2459
      %2472 = vst [vmem:[#allocation2 + $0x68] sm:$0xff] %v2460
      %2473 = vst [vmem:[#allocation2 + $0x80] sm:$0xff] %v2461
      %2474 = vst [vmem:[#allocation2 + $0x88] sm:$0xff] %v2462
      %2475 = vst [vmem:[#allocation2 + $0x90] sm:$0xff] %v2463
      %v2476 = vld [vmem:[#allocation2] sm:$0xff]
      %v2477 = vld [vmem:[#allocation2 + $0x8] sm:$0xff]
      %v2478 = vld [vmem:[#allocation2 + $0x10] sm:$0xff]
      %v2479 = vld [vmem:[#allocation2 + $0x18] sm:$0xff]
      %v2480 = vld [vmem:[#allocation2 + $0x28] sm:$0xff]
      %v2481 = vld [vmem:[#allocation2 + $0x30] sm:$0xff]
      %v2482 = vld [vmem:[#allocation2 + $0x38] sm:$0xff]
      %v2483 = vld [vmem:[#allocation2 + $0x40] sm:$0xff]
      %v2484 = vld [vmem:[#allocation2 + $0x50] sm:$0xff]
      %v2485 = vld [vmem:[#allocation2 + $0x58] sm:$0xff]
      %v2486 = vld [vmem:[#allocation2 + $0x60] sm:$0xff]
      %v2487 = vld [vmem:[#allocation2 + $0x68] sm:$0xff]
      %v2488 = vld [vmem:[#allocation2 + $0x78] sm:$0xff]
      %v2489 = vld [vmem:[#allocation2 + $0x80] sm:$0xff]
      %v2490 = vld [vmem:[#allocation2 + $0x88] sm:$0xff]
      %v2491 = vld [vmem:[#allocation2 + $0x90] sm:$0xff]
      %v2492 = vld [vmem:[%s4] sm:$0xf]
      %v2493 = vld [vmem:[%s4 + $0x4] sm:$0xf]
      %v2494 = vld [vmem:[%s4 + $0x8] sm:$0xf]
      %v2495 = vld [vmem:[%s4 + $0xc] sm:$0xf]
      %s2496 = scalar_lea.vmem %s4, 16
      %v2497 = vld [vmem:[%s2496] sm:$0xf]
      %v2498 = vld [vmem:[%s2496 + $0x4] sm:$0xf]
      %v2499 = vld [vmem:[%s2496 + $0x8] sm:$0xf]
      %v2500 = vld [vmem:[%s2496 + $0xc] sm:$0xf]
      %v2505 = vunpack.c.l.b16 %v2497
      %v2506 = vunpack.c.l.b16 %v2498
      %v2507 = vunpack.c.l.b16 %v2499
      %v2508 = vunpack.c.l.b16 %v2500
      %v2509 = vpack.c.b16 %v2506, %v2505
      %v2510 = vpack.c.b16 %v2508, %v2507
      %2527 = vrot.lane.b32.xlu0 %v2476, 18
      %v2528 = vpop.permute.xlu0 %2527
      %2529 = vrot.lane.b32.xlu0 %v2477, 18
      %v2530 = vpop.permute.xlu0 %2529
      %2531 = vrot.lane.b32.xlu0 %v2478, 18
      %v2532 = vpop.permute.xlu0 %2531
      %2533 = vrot.lane.b32.xlu0 %v2479, 18
      %v2534 = vpop.permute.xlu0 %2533
      %2535 = vrot.lane.b32.xlu0 %v2480, 18
      %v2536 = vpop.permute.xlu0 %2535
      %2537 = vrot.lane.b32.xlu0 %v2481, 18
      %v2538 = vpop.permute.xlu0 %2537
      %2539 = vrot.lane.b32.xlu0 %v2482, 18
      %v2540 = vpop.permute.xlu0 %2539
      %2541 = vrot.lane.b32.xlu0 %v2483, 18
      %v2542 = vpop.permute.xlu0 %2541
      %2543 = vrot.lane.b32.xlu0 %v2484, 18
      %v2544 = vpop.permute.xlu0 %2543
      %2545 = vrot.lane.b32.xlu0 %v2485, 18
      %v2546 = vpop.permute.xlu0 %2545
      %2547 = vrot.lane.b32.xlu0 %v2486, 18
      %v2548 = vpop.permute.xlu0 %2547
      %2549 = vrot.lane.b32.xlu0 %v2487, 18
      %v2550 = vpop.permute.xlu0 %2549
      %2551 = vrot.lane.b32.xlu0 %v2488, 18
      %v2552 = vpop.permute.xlu0 %2551
      %2553 = vrot.lane.b32.xlu0 %v2489, 18
      %v2554 = vpop.permute.xlu0 %2553
      %2555 = vrot.lane.b32.xlu0 %v2490, 18
      %v2556 = vpop.permute.xlu0 %2555
      %2557 = vrot.lane.b32.xlu0 %v2491, 18
      %v2558 = vpop.permute.xlu0 %2557
      %vm2559 = vcmask 146432
      %v2560 = vsel %vm2559, %v2528, %v2530
      %v2561 = vsel %vm2559, %v2530, %v2532
      %v2562 = vsel %vm2559, %v2532, %v2534
      %v2563 = vsel %vm2559, %v2536, %v2538
      %v2564 = vsel %vm2559, %v2538, %v2540
      %v2565 = vsel %vm2559, %v2540, %v2542
      %v2566 = vsel %vm2559, %v2544, %v2546
      %v2567 = vsel %vm2559, %v2546, %v2548
      %v2568 = vsel %vm2559, %v2548, %v2550
      %v2569 = vsel %vm2559, %v2552, %v2554
      %v2570 = vsel %vm2559, %v2554, %v2556
      %v2571 = vsel %vm2559, %v2556, %v2558
      %vm2584 = vcmask 523264
      %v2586 = vsel %vm2584, %v2509, 0
      %v2589 = vsel %vm2584, %v2510, 0
      %2591 = vmatprep.subr.bf16.mxu0 %v2561
      %2592 = vmatpush1.bf16.msra.mxu0 %v2560
      %2593 = vmatprep.subr.bf16.mxu0 %v2564
      %2594 = vmatpush1.bf16.msra.mxu0 %v2563
      %2595 = vmatprep.subr.bf16.mxu0 %v2567
      %2596 = vmatpush1.bf16.msra.mxu0 %v2566
      %2597 = vmatprep.subr.bf16.mxu0 %v2570
      %2598 = vmatpush1.bf16.msra.mxu0 %v2569
      %2599 = vmatprep.subr.bf16.mxu0 0
      %2600 = vmatpush1.bf16.msra.mxu0 0
      %2601 = vmatprep.subr.bf16.mxu0 0
      %2602 = vmatpush1.bf16.msra.mxu0 0
      %2603 = vmatprep.subr.bf16.mxu0 0
      %2604 = vmatpush1.bf16.msra.mxu0 0
      %2605 = vmatprep.subr.bf16.mxu0 0
      %2606 = vmatpush1.bf16.msra.mxu0 0
      %2607 = vmatprep.subr.bf16.mxu0 0
      %2608 = vmatpush1.bf16.msra.mxu0 0
      %2609 = vmatprep.subr.bf16.mxu0 0
      %2610 = vmatpush1.bf16.msra.mxu0 0
      %2611 = vmatprep.subr.bf16.mxu0 0
      %2612 = vmatpush1.bf16.msra.mxu0 0
      %2613 = vmatprep.subr.bf16.mxu0 0
      %2614 = vmatpush1.bf16.msra.mxu0 0
      %2615 = vmatprep.subr.bf16.mxu0 0
      %2616 = vmatpush1.bf16.msra.mxu0 0
      %2617 = vmatprep.subr.bf16.mxu0 0
      %2618 = vmatpush1.bf16.msra.mxu0 0
      %2619 = vmatprep.subr.bf16.mxu0 0
      %2620 = vmatpush1.bf16.msra.mxu0 0
      %2621 = vmatprep.subr.bf16.mxu0 0
      %2622 = vmatpush1.bf16.msra.mxu0 0
      %2623 = vmatprep.mubr.bf16.mxu0 0
      %2624 = vmatmul.mubr.bf16.gmra.mrb[0].mxu0 %v2586
      %v2625 = vpop.f32.mrb[0].mxu0
      %v2626 = vadd.f32 0.0, %v2625
      %v2627 = vpop.f32.mrb[0].mxu0
      %v2628 = vadd.f32 0.0, %v2627
      %v2629 = vpop.f32.mrb[0].mxu0
      %v2630 = vadd.f32 0.0, %v2629
      %v2631 = vpop.f32.mrb[0].mxu0
      %v2632 = vadd.f32 0.0, %v2631
      %2633 = vmatprep.mubr.bf16.mxu0 0
      %2634 = vmatmul.mubr.bf16.gmra.mrb[0].mxu0 %v2589
      %v2635 = vpop.f32.mrb[0].mxu0
      %v2636 = vadd.f32 0.0, %v2635
      %v2637 = vpop.f32.mrb[0].mxu0
      %v2638 = vadd.f32 0.0, %v2637
      %v2639 = vpop.f32.mrb[0].mxu0
      %v2640 = vadd.f32 0.0, %v2639
      %v2641 = vpop.f32.mrb[0].mxu0
      %v2642 = vadd.f32 0.0, %v2641
      %2643 = vdwg.mxu0
      %2644 = vmatprep.subr.bf16.mxu0 0
      %2645 = vmatpush1.bf16.msra.mxu0 %v2562
      %2646 = vmatprep.subr.bf16.mxu0 0
      %2647 = vmatpush1.bf16.msra.mxu0 %v2565
      %2648 = vmatprep.subr.bf16.mxu0 0
      %2649 = vmatpush1.bf16.msra.mxu0 %v2568
      %2650 = vmatprep.subr.bf16.mxu0 0
      %2651 = vmatpush1.bf16.msra.mxu0 %v2571
      %2652 = vmatprep.subr.bf16.mxu0 0
      %2653 = vmatpush1.bf16.msra.mxu0 0
      %2654 = vmatprep.subr.bf16.mxu0 0
      %2655 = vmatpush1.bf16.msra.mxu0 0
      %2656 = vmatprep.subr.bf16.mxu0 0
      %2657 = vmatpush1.bf16.msra.mxu0 0
      %2658 = vmatprep.subr.bf16.mxu0 0
      %2659 = vmatpush1.bf16.msra.mxu0 0
      %2660 = vmatprep.subr.bf16.mxu0 0
      %2661 = vmatpush1.bf16.msra.mxu0 0
      %2662 = vmatprep.subr.bf16.mxu0 0
      %2663 = vmatpush1.bf16.msra.mxu0 0
      %2664 = vmatprep.subr.bf16.mxu0 0
      %2665 = vmatpush1.bf16.msra.mxu0 0
      %2666 = vmatprep.subr.bf16.mxu0 0
      %2667 = vmatpush1.bf16.msra.mxu0 0
      %2668 = vmatprep.subr.bf16.mxu0 0
      %2669 = vmatpush1.bf16.msra.mxu0 0
      %2670 = vmatprep.subr.bf16.mxu0 0
      %2671 = vmatpush1.bf16.msra.mxu0 0
      %2672 = vmatprep.subr.bf16.mxu0 0
      %2673 = vmatpush1.bf16.msra.mxu0 0
      %2674 = vmatprep.subr.bf16.mxu0 0
      %2675 = vmatpush1.bf16.msra.mxu0 0
      %2676 = vmatprep.mubr.bf16.mxu0 0
      %2677 = vmatmul.mubr.bf16.gmra.mrb[0].mxu0 %v2586
      %v2678 = vpop.f32.mrb[0].mxu0
      %v2679 = vadd.f32 0.0, %v2678
      %v2680 = vpop.f32.mrb[0].mxu0
      %v2681 = vpop.f32.mrb[0].mxu0
      %v2682 = vadd.f32 0.0, %v2681
      %v2683 = vpop.f32.mrb[0].mxu0
      %2684 = vmatprep.mubr.bf16.mxu0 0
      %2685 = vmatmul.mubr.bf16.gmra.mrb[0].mxu0 %v2589
      %v2686 = vpop.f32.mrb[0].mxu0
      %v2687 = vadd.f32 0.0, %v2686
      %v2688 = vpop.f32.mrb[0].mxu0
      %v2689 = vpop.f32.mrb[0].mxu0
      %v2690 = vadd.f32 0.0, %v2689
      %v2691 = vpop.f32.mrb[0].mxu0
      %2692 = vdwg.mxu0
      %v2697 = vunpack.c.l.b16 %v2492
      %v2698 = vunpack.c.l.b16 %v2493
      %v2699 = vunpack.c.l.b16 %v2494
      %v2700 = vunpack.c.l.b16 %v2495
      %v2701 = vpack.c.b16 %v2698, %v2697
      %v2702 = vpack.c.b16 %v2700, %v2699
      %2703 = vrot.lane.b32.xlu0 %v2476, 19
      %v2704 = vpop.permute.xlu0 %2703
      %2705 = vrot.lane.b32.xlu0 %v2477, 19
      %v2706 = vpop.permute.xlu0 %2705
      %2707 = vrot.lane.b32.xlu0 %v2478, 19
      %v2708 = vpop.permute.xlu0 %2707
      %2709 = vrot.lane.b32.xlu0 %v2479, 19
      %v2710 = vpop.permute.xlu0 %2709
      %2711 = vrot.lane.b32.xlu0 %v2480, 19
      %v2712 = vpop.permute.xlu0 %2711
      %2713 = vrot.lane.b32.xlu0 %v2481, 19
      %v2714 = vpop.permute.xlu0 %2713
      %2715 = vrot.lane.b32.xlu0 %v2482, 19
      %v2716 = vpop.permute.xlu0 %2715
      %2717 = vrot.lane.b32.xlu0 %v2483, 19
      %v2718 = vpop.permute.xlu0 %2717
      %2719 = vrot.lane.b32.xlu0 %v2484, 19
      %v2720 = vpop.permute.xlu0 %2719
      %2721 = vrot.lane.b32.xlu0 %v2485, 19
      %v2722 = vpop.permute.xlu0 %2721
      %2723 = vrot.lane.b32.xlu0 %v2486, 19
      %v2724 = vpop.permute.xlu0 %2723
      %2725 = vrot.lane.b32.xlu0 %v2487, 19
      %v2726 = vpop.permute.xlu0 %2725
      %2727 = vrot.lane.b32.xlu0 %v2488, 19
      %v2728 = vpop.permute.xlu0 %2727
      %2729 = vrot.lane.b32.xlu0 %v2489, 19
      %v2730 = vpop.permute.xlu0 %2729
      %2731 = vrot.lane.b32.xlu0 %v2490, 19
      %v2732 = vpop.permute.xlu0 %2731
      %2733 = vrot.lane.b32.xlu0 %v2491, 19
      %v2734 = vpop.permute.xlu0 %2733
      %vm2735 = vcmask 154624
      %v2736 = vsel %vm2735, %v2704, %v2706
      %v2737 = vsel %vm2735, %v2706, %v2708
      %v2738 = vsel %vm2735, %v2708, %v2710
      %v2739 = vsel %vm2735, %v2712, %v2714
      %v2740 = vsel %vm2735, %v2714, %v2716
      %v2741 = vsel %vm2735, %v2716, %v2718
      %v2742 = vsel %vm2735, %v2720, %v2722
      %v2743 = vsel %vm2735, %v2722, %v2724
      %v2744 = vsel %vm2735, %v2724, %v2726
      %v2745 = vsel %vm2735, %v2728, %v2730
      %v2746 = vsel %vm2735, %v2730, %v2732
      %v2747 = vsel %vm2735, %v2732, %v2734
      %v2761 = vsel %vm2584, %v2701, 0
      %v2764 = vsel %vm2584, %v2702, 0
      %2766 = vmatprep.subr.bf16.mxu0 %v2737
      %2767 = vmatpush1.bf16.msra.mxu0 %v2736
      %2768 = vmatprep.subr.bf16.mxu0 %v2740
      %2769 = vmatpush1.bf16.msra.mxu0 %v2739
      %2770 = vmatprep.subr.bf16.mxu0 %v2743
      %2771 = vmatpush1.bf16.msra.mxu0 %v2742
      %2772 = vmatprep.subr.bf16.mxu0 %v2746
      %2773 = vmatpush1.bf16.msra.mxu0 %v2745
      %2774 = vmatprep.subr.bf16.mxu0 0
      %2775 = vmatpush1.bf16.msra.mxu0 0
      %2776 = vmatprep.subr.bf16.mxu0 0
      %2777 = vmatpush1.bf16.msra.mxu0 0
      %2778 = vmatprep.subr.bf16.mxu0 0
      %2779 = vmatpush1.bf16.msra.mxu0 0
      %2780 = vmatprep.subr.bf16.mxu0 0
      %2781 = vmatpush1.bf16.msra.mxu0 0
      %2782 = vmatprep.subr.bf16.mxu0 0
      %2783 = vmatpush1.bf16.msra.mxu0 0
      %2784 = vmatprep.subr.bf16.mxu0 0
      %2785 = vmatpush1.bf16.msra.mxu0 0
      %2786 = vmatprep.subr.bf16.mxu0 0
      %2787 = vmatpush1.bf16.msra.mxu0 0
      %2788 = vmatprep.subr.bf16.mxu0 0
      %2789 = vmatpush1.bf16.msra.mxu0 0
      %2790 = vmatprep.subr.bf16.mxu0 0
      %2791 = vmatpush1.bf16.msra.mxu0 0
      %2792 = vmatprep.subr.bf16.mxu0 0
      %2793 = vmatpush1.bf16.msra.mxu0 0
      %2794 = vmatprep.subr.bf16.mxu0 0
      %2795 = vmatpush1.bf16.msra.mxu0 0
      %2796 = vmatprep.subr.bf16.mxu0 0
      %2797 = vmatpush1.bf16.msra.mxu0 0
      %2798 = vmatprep.mubr.bf16.mxu0 0
      %2799 = vmatmul.mubr.bf16.gmra.mrb[0].mxu0 %v2761
      %v2800 = vpop.f32.mrb[0].mxu0
      %v2801 = vadd.f32 %v2626, %v2800
      %v2802 = vpop.f32.mrb[0].mxu0
      %v2803 = vadd.f32 %v2628, %v2802
      %v2804 = vpop.f32.mrb[0].mxu0
      %v2805 = vadd.f32 %v2630, %v2804
      %v2806 = vpop.f32.mrb[0].mxu0
      %v2807 = vadd.f32 %v2632, %v2806
      %2808 = vmatprep.mubr.bf16.mxu0 0
      %2809 = vmatmul.mubr.bf16.gmra.mrb[0].mxu0 %v2764
      %v2810 = vpop.f32.mrb[0].mxu0
      %v2811 = vadd.f32 %v2636, %v2810
      %v2812 = vpop.f32.mrb[0].mxu0
      %v2813 = vadd.f32 %v2638, %v2812
      %v2814 = vpop.f32.mrb[0].mxu0
      %v2815 = vadd.f32 %v2640, %v2814
      %v2816 = vpop.f32.mrb[0].mxu0
      %v2817 = vadd.f32 %v2642, %v2816
      %2818 = vdwg.mxu0
      %2819 = vmatprep.subr.bf16.mxu0 0
      %2820 = vmatpush1.bf16.msra.mxu0 %v2738
      %2821 = vmatprep.subr.bf16.mxu0 0
      %2822 = vmatpush1.bf16.msra.mxu0 %v2741
      %2823 = vmatprep.subr.bf16.mxu0 0
      %2824 = vmatpush1.bf16.msra.mxu0 %v2744
      %2825 = vmatprep.subr.bf16.mxu0 0
      %2826 = vmatpush1.bf16.msra.mxu0 %v2747
      %2827 = vmatprep.subr.bf16.mxu0 0
      %2828 = vmatpush1.bf16.msra.mxu0 0
      %2829 = vmatprep.subr.bf16.mxu0 0
      %2830 = vmatpush1.bf16.msra.mxu0 0
      %2831 = vmatprep.subr.bf16.mxu0 0
      %2832 = vmatpush1.bf16.msra.mxu0 0
      %2833 = vmatprep.subr.bf16.mxu0 0
      %2834 = vmatpush1.bf16.msra.mxu0 0
      %2835 = vmatprep.subr.bf16.mxu0 0
      %2836 = vmatpush1.bf16.msra.mxu0 0
      %2837 = vmatprep.subr.bf16.mxu0 0
      %2838 = vmatpush1.bf16.msra.mxu0 0
      %2839 = vmatprep.subr.bf16.mxu0 0
      %2840 = vmatpush1.bf16.msra.mxu0 0
      %2841 = vmatprep.subr.bf16.mxu0 0
      %2842 = vmatpush1.bf16.msra.mxu0 0
      %2843 = vmatprep.subr.bf16.mxu0 0
      %2844 = vmatpush1.bf16.msra.mxu0 0
      %2845 = vmatprep.subr.bf16.mxu0 0
      %2846 = vmatpush1.bf16.msra.mxu0 0
      %2847 = vmatprep.subr.bf16.mxu0 0
      %2848 = vmatpush1.bf16.msra.mxu0 0
      %2849 = vmatprep.subr.bf16.mxu0 0
      %2850 = vmatpush1.bf16.msra.mxu0 0
      %2851 = vmatprep.mubr.bf16.mxu0 0
      %2852 = vmatmul.mubr.bf16.gmra.mrb[0].mxu0 %v2761
      %v2853 = vpop.f32.mrb[0].mxu0
      %v2854 = vadd.f32 %v2679, %v2853
      %v2855 = vpop.f32.mrb[0].mxu0
      %v2856 = vpop.f32.mrb[0].mxu0
      %v2857 = vadd.f32 %v2682, %v2856
      %v2858 = vpop.f32.mrb[0].mxu0
      %2859 = vmatprep.mubr.bf16.mxu0 0
      %2860 = vmatmul.mubr.bf16.gmra.mrb[0].mxu0 %v2764
      %v2861 = vpop.f32.mrb[0].mxu0
      %v2862 = vadd.f32 %v2687, %v2861
      %v2863 = vpop.f32.mrb[0].mxu0
      %v2864 = vpop.f32.mrb[0].mxu0
      %v2865 = vadd.f32 %v2690, %v2864
      %v2866 = vpop.f32.mrb[0].mxu0
      %2867 = vdwg.mxu0
      %s2868 = scalar_lea.vmem %s4, 32
      %v2869 = vld [vmem:[%s2868] sm:$0xf]
      %v2870 = vld [vmem:[%s2868 + $0x4] sm:$0xf]
      %v2871 = vld [vmem:[%s2868 + $0x8] sm:$0xf]
      %v2872 = vld [vmem:[%s2868 + $0xc] sm:$0xf]
      %v2877 = vunpack.c.l.b16 %v2869
      %v2878 = vunpack.c.l.b16 %v2870
      %v2879 = vunpack.c.l.b16 %v2871
      %v2880 = vunpack.c.l.b16 %v2872
      %v2881 = vpack.c.b16 %v2878, %v2877
      %v2882 = vpack.c.b16 %v2880, %v2879
      %2883 = vrot.lane.b32.xlu0 %v2476, 17
      %v2884 = vpop.permute.xlu0 %2883
      %2885 = vrot.lane.b32.xlu0 %v2477, 17
      %v2886 = vpop.permute.xlu0 %2885
      %2887 = vrot.lane.b32.xlu0 %v2478, 17
      %v2888 = vpop.permute.xlu0 %2887
      %2889 = vrot.lane.b32.xlu0 %v2479, 17
      %v2890 = vpop.permute.xlu0 %2889
      %2891 = vrot.lane.b32.xlu0 %v2480, 17
      %v2892 = vpop.permute.xlu0 %2891
      %2893 = vrot.lane.b32.xlu0 %v2481, 17
      %v2894 = vpop.permute.xlu0 %2893
      %2895 = vrot.lane.b32.xlu0 %v2482, 17
      %v2896 = vpop.permute.xlu0 %2895
      %2897 = vrot.lane.b32.xlu0 %v2483, 17
      %v2898 = vpop.permute.xlu0 %2897
      %2899 = vrot.lane.b32.xlu0 %v2484, 17
      %v2900 = vpop.permute.xlu0 %2899
      %2901 = vrot.lane.b32.xlu0 %v2485, 17
      %v2902 = vpop.permute.xlu0 %2901
      %2903 = vrot.lane.b32.xlu0 %v2486, 17
      %v2904 = vpop.permute.xlu0 %2903
      %2905 = vrot.lane.b32.xlu0 %v2487, 17
      %v2906 = vpop.permute.xlu0 %2905
      %2907 = vrot.lane.b32.xlu0 %v2488, 17
      %v2908 = vpop.permute.xlu0 %2907
      %2909 = vrot.lane.b32.xlu0 %v2489, 17
      %v2910 = vpop.permute.xlu0 %2909
      %2911 = vrot.lane.b32.xlu0 %v2490, 17
      %v2912 = vpop.permute.xlu0 %2911
      %2913 = vrot.lane.b32.xlu0 %v2491, 17
      %v2914 = vpop.permute.xlu0 %2913
      %vm2915 = vcmask 138240
      %v2916 = vsel %vm2915, %v2884, %v2886
      %v2917 = vsel %vm2915, %v2886, %v2888
      %v2918 = vsel %vm2915, %v2888, %v2890
      %v2919 = vsel %vm2915, %v2892, %v2894
      %v2920 = vsel %vm2915, %v2894, %v2896
      %v2921 = vsel %vm2915, %v2896, %v2898
      %v2922 = vsel %vm2915, %v2900, %v2902
      %v2923 = vsel %vm2915, %v2902, %v2904
      %v2924 = vsel %vm2915, %v2904, %v2906
      %v2925 = vsel %vm2915, %v2908, %v2910
      %v2926 = vsel %vm2915, %v2910, %v2912
      %v2927 = vsel %vm2915, %v2912, %v2914
      %v2941 = vsel %vm2584, %v2881, 0
      %v2944 = vsel %vm2584, %v2882, 0
      %2946 = vmatprep.subr.bf16.mxu0 %v2917
      %2947 = vmatpush1.bf16.msra.mxu0 %v2916
      %2948 = vmatprep.subr.bf16.mxu0 %v2920
      %2949 = vmatpush1.bf16.msra.mxu0 %v2919
      %2950 = vmatprep.subr.bf16.mxu0 %v2923
      %2951 = vmatpush1.bf16.msra.mxu0 %v2922
      %2952 = vmatprep.subr.bf16.mxu0 %v2926
      %2953 = vmatpush1.bf16.msra.mxu0 %v2925
      %2954 = vmatprep.subr.bf16.mxu0 0
      %2955 = vmatpush1.bf16.msra.mxu0 0
      %2956 = vmatprep.subr.bf16.mxu0 0
      %2957 = vmatpush1.bf16.msra.mxu0 0
      %2958 = vmatprep.subr.bf16.mxu0 0
      %2959 = vmatpush1.bf16.msra.mxu0 0
      %2960 = vmatprep.subr.bf16.mxu0 0
      %2961 = vmatpush1.bf16.msra.mxu0 0
      %2962 = vmatprep.subr.bf16.mxu0 0
      %2963 = vmatpush1.bf16.msra.mxu0 0
      %2964 = vmatprep.subr.bf16.mxu0 0
      %2965 = vmatpush1.bf16.msra.mxu0 0
      %2966 = vmatprep.subr.bf16.mxu0 0
      %2967 = vmatpush1.bf16.msra.mxu0 0
      %2968 = vmatprep.subr.bf16.mxu0 0
      %2969 = vmatpush1.bf16.msra.mxu0 0
      %2970 = vmatprep.subr.bf16.mxu0 0
      %2971 = vmatpush1.bf16.msra.mxu0 0
      %2972 = vmatprep.subr.bf16.mxu0 0
      %2973 = vmatpush1.bf16.msra.mxu0 0
      %2974 = vmatprep.subr.bf16.mxu0 0
      %2975 = vmatpush1.bf16.msra.mxu0 0
      %2976 = vmatprep.subr.bf16.mxu0 0
      %2977 = vmatpush1.bf16.msra.mxu0 0
      %2978 = vmatprep.mubr.bf16.mxu0 0
      %2979 = vmatmul.mubr.bf16.gmra.mrb[0].mxu0 %v2941
      %v2980 = vpop.f32.mrb[0].mxu0
      %v2981 = vadd.f32 0.0, %v2980
      %v2982 = vpop.f32.mrb[0].mxu0
      %v2983 = vadd.f32 0.0, %v2982
      %v2984 = vpop.f32.mrb[0].mxu0
      %v2985 = vadd.f32 0.0, %v2984
      %v2986 = vpop.f32.mrb[0].mxu0
      %v2987 = vadd.f32 0.0, %v2986
      %2988 = vmatprep.mubr.bf16.mxu0 0
      %2989 = vmatmul.mubr.bf16.gmra.mrb[0].mxu0 %v2944
      %v2990 = vpop.f32.mrb[0].mxu0
      %v2991 = vadd.f32 0.0, %v2990
      %v2992 = vpop.f32.mrb[0].mxu0
      %v2993 = vadd.f32 0.0, %v2992
      %v2994 = vpop.f32.mrb[0].mxu0
      %v2995 = vadd.f32 0.0, %v2994
      %v2996 = vpop.f32.mrb[0].mxu0
      %v2997 = vadd.f32 0.0, %v2996
      %2998 = vdwg.mxu0
      %2999 = vmatprep.subr.bf16.mxu0 0
      %3000 = vmatpush1.bf16.msra.mxu0 %v2918
      %3001 = vmatprep.subr.bf16.mxu0 0
      %3002 = vmatpush1.bf16.msra.mxu0 %v2921
      %3003 = vmatprep.subr.bf16.mxu0 0
      %3004 = vmatpush1.bf16.msra.mxu0 %v2924
      %3005 = vmatprep.subr.bf16.mxu0 0
      %3006 = vmatpush1.bf16.msra.mxu0 %v2927
      %3007 = vmatprep.subr.bf16.mxu0 0
      %3008 = vmatpush1.bf16.msra.mxu0 0
      %3009 = vmatprep.subr.bf16.mxu0 0
      %3010 = vmatpush1.bf16.msra.mxu0 0
      %3011 = vmatprep.subr.bf16.mxu0 0
      %3012 = vmatpush1.bf16.msra.mxu0 0
      %3013 = vmatprep.subr.bf16.mxu0 0
      %3014 = vmatpush1.bf16.msra.mxu0 0
      %3015 = vmatprep.subr.bf16.mxu0 0
      %3016 = vmatpush1.bf16.msra.mxu0 0
      %3017 = vmatprep.subr.bf16.mxu0 0
      %3018 = vmatpush1.bf16.msra.mxu0 0
      %3019 = vmatprep.subr.bf16.mxu0 0
      %3020 = vmatpush1.bf16.msra.mxu0 0
      %3021 = vmatprep.subr.bf16.mxu0 0
      %3022 = vmatpush1.bf16.msra.mxu0 0
      %3023 = vmatprep.subr.bf16.mxu0 0
      %3024 = vmatpush1.bf16.msra.mxu0 0
      %3025 = vmatprep.subr.bf16.mxu0 0
      %3026 = vmatpush1.bf16.msra.mxu0 0
      %3027 = vmatprep.subr.bf16.mxu0 0
      %3028 = vmatpush1.bf16.msra.mxu0 0
      %3029 = vmatprep.subr.bf16.mxu0 0
      %3030 = vmatpush1.bf16.msra.mxu0 0
      %3031 = vmatprep.mubr.bf16.mxu0 0
      %3032 = vmatmul.mubr.bf16.gmra.mrb[0].mxu0 %v2941
      %v3033 = vpop.f32.mrb[0].mxu0
      %v3034 = vadd.f32 0.0, %v3033
      %v3035 = vpop.f32.mrb[0].mxu0
      %v3036 = vpop.f32.mrb[0].mxu0
      %v3037 = vadd.f32 0.0, %v3036
      %v3038 = vpop.f32.mrb[0].mxu0
      %3039 = vmatprep.mubr.bf16.mxu0 0
      %3040 = vmatmul.mubr.bf16.gmra.mrb[0].mxu0 %v2944
      %v3041 = vpop.f32.mrb[0].mxu0
      %v3042 = vadd.f32 0.0, %v3041
      %v3043 = vpop.f32.mrb[0].mxu0
      %v3044 = vpop.f32.mrb[0].mxu0
      %v3045 = vadd.f32 0.0, %v3044
      %v3046 = vpop.f32.mrb[0].mxu0
      %3047 = vdwg.mxu0
      %v3048 = vadd.f32 %v2801, %v2981
      %v3049 = vadd.f32 %v2803, %v2983
      %v3050 = vadd.f32 %v2854, %v3034
      %v3051 = vadd.f32 %v2805, %v2985
      %v3052 = vadd.f32 %v2807, %v2987
      %v3053 = vadd.f32 %v2857, %v3037
      %v3054 = vadd.f32 %v2811, %v2991
      %v3055 = vadd.f32 %v2813, %v2993
      %v3056 = vadd.f32 %v2862, %v3042
      %v3057 = vadd.f32 %v2815, %v2995
      %v3058 = vadd.f32 %v2817, %v2997
      %v3059 = vadd.f32 %v2865, %v3045
      %s3060 = scalar_lea.vmem %s4, 48
      %v3061 = vld [vmem:[%s3060] sm:$0xf]
      %v3062 = vld [vmem:[%s3060 + $0x4] sm:$0xf]
      %v3063 = vld [vmem:[%s3060 + $0x8] sm:$0xf]
      %v3064 = vld [vmem:[%s3060 + $0xc] sm:$0xf]
      %v3069 = vunpack.c.l.b16 %v3061
      %v3070 = vunpack.c.l.b16 %v3062
      %v3071 = vunpack.c.l.b16 %v3063
      %v3072 = vunpack.c.l.b16 %v3064
      %v3073 = vpack.c.b16 %v3070, %v3069
      %v3074 = vpack.c.b16 %v3072, %v3071
      %3075 = vrot.lane.b32.xlu0 %v2476, 1
      %v3076 = vpop.permute.xlu0 %3075
      %3077 = vrot.lane.b32.xlu0 %v2477, 1
      %v3078 = vpop.permute.xlu0 %3077
      %3079 = vrot.lane.b32.xlu0 %v2478, 1
      %v3080 = vpop.permute.xlu0 %3079
      %3081 = vrot.lane.b32.xlu0 %v2479, 1
      %v3082 = vpop.permute.xlu0 %3081
      %3083 = vrot.lane.b32.xlu0 %v2480, 1
      %v3084 = vpop.permute.xlu0 %3083
      %3085 = vrot.lane.b32.xlu0 %v2481, 1
      %v3086 = vpop.permute.xlu0 %3085
      %3087 = vrot.lane.b32.xlu0 %v2482, 1
      %v3088 = vpop.permute.xlu0 %3087
      %3089 = vrot.lane.b32.xlu0 %v2483, 1
      %v3090 = vpop.permute.xlu0 %3089
      %3091 = vrot.lane.b32.xlu0 %v2484, 1
      %v3092 = vpop.permute.xlu0 %3091
      %3093 = vrot.lane.b32.xlu0 %v2485, 1
      %v3094 = vpop.permute.xlu0 %3093
      %3095 = vrot.lane.b32.xlu0 %v2486, 1
      %v3096 = vpop.permute.xlu0 %3095
      %3097 = vrot.lane.b32.xlu0 %v2487, 1
      %v3098 = vpop.permute.xlu0 %3097
      %3099 = vrot.lane.b32.xlu0 %v2488, 1
      %v3100 = vpop.permute.xlu0 %3099
      %3101 = vrot.lane.b32.xlu0 %v2489, 1
      %v3102 = vpop.permute.xlu0 %3101
      %3103 = vrot.lane.b32.xlu0 %v2490, 1
      %v3104 = vpop.permute.xlu0 %3103
      %3105 = vrot.lane.b32.xlu0 %v2491, 1
      %v3106 = vpop.permute.xlu0 %3105
      %vm3107 = vcmask 7168
      %v3108 = vsel %vm3107, %v3076, %v3078
      %v3109 = vsel %vm3107, %v3078, %v3080
      %v3110 = vsel %vm3107, %v3080, %v3082
      %v3111 = vsel %vm3107, %v3084, %v3086
      %v3112 = vsel %vm3107, %v3086, %v3088
      %v3113 = vsel %vm3107, %v3088, %v3090
      %v3114 = vsel %vm3107, %v3092, %v3094
      %v3115 = vsel %vm3107, %v3094, %v3096
      %v3116 = vsel %vm3107, %v3096, %v3098
      %v3117 = vsel %vm3107, %v3100, %v3102
      %v3118 = vsel %vm3107, %v3102, %v3104
      %v3119 = vsel %vm3107, %v3104, %v3106
      %v3133 = vsel %vm2584, %v3073, 0
      %v3136 = vsel %vm2584, %v3074, 0
      %3138 = vmatprep.subr.bf16.mxu0 %v3109
      %3139 = vmatpush1.bf16.msra.mxu0 %v3108
      %3140 = vmatprep.subr.bf16.mxu0 %v3112
      %3141 = vmatpush1.bf16.msra.mxu0 %v3111
      %3142 = vmatprep.subr.bf16.mxu0 %v3115
      %3143 = vmatpush1.bf16.msra.mxu0 %v3114
      %3144 = vmatprep.subr.bf16.mxu0 %v3118
      %3145 = vmatpush1.bf16.msra.mxu0 %v3117
      %3146 = vmatprep.subr.bf16.mxu0 0
      %3147 = vmatpush1.bf16.msra.mxu0 0
      %3148 = vmatprep.subr.bf16.mxu0 0
      %3149 = vmatpush1.bf16.msra.mxu0 0
      %3150 = vmatprep.subr.bf16.mxu0 0
      %3151 = vmatpush1.bf16.msra.mxu0 0
      %3152 = vmatprep.subr.bf16.mxu0 0
      %3153 = vmatpush1.bf16.msra.mxu0 0
      %3154 = vmatprep.subr.bf16.mxu0 0
      %3155 = vmatpush1.bf16.msra.mxu0 0
      %3156 = vmatprep.subr.bf16.mxu0 0
      %3157 = vmatpush1.bf16.msra.mxu0 0
      %3158 = vmatprep.subr.bf16.mxu0 0
      %3159 = vmatpush1.bf16.msra.mxu0 0
      %3160 = vmatprep.subr.bf16.mxu0 0
      %3161 = vmatpush1.bf16.msra.mxu0 0
      %3162 = vmatprep.subr.bf16.mxu0 0
      %3163 = vmatpush1.bf16.msra.mxu0 0
      %3164 = vmatprep.subr.bf16.mxu0 0
      %3165 = vmatpush1.bf16.msra.mxu0 0
      %3166 = vmatprep.subr.bf16.mxu0 0
      %3167 = vmatpush1.bf16.msra.mxu0 0
      %3168 = vmatprep.subr.bf16.mxu0 0
      %3169 = vmatpush1.bf16.msra.mxu0 0
      %3170 = vmatprep.mubr.bf16.mxu0 0
      %3171 = vmatmul.mubr.bf16.gmra.mrb[0].mxu0 %v3133
      %v3172 = vpop.f32.mrb[0].mxu0
      %v3173 = vadd.f32 0.0, %v3172
      %v3174 = vpop.f32.mrb[0].mxu0
      %v3175 = vadd.f32 0.0, %v3174
      %v3176 = vpop.f32.mrb[0].mxu0
      %v3177 = vadd.f32 0.0, %v3176
      %v3178 = vpop.f32.mrb[0].mxu0
      %v3179 = vadd.f32 0.0, %v3178
      %3180 = vmatprep.mubr.bf16.mxu0 0
      %3181 = vmatmul.mubr.bf16.gmra.mrb[0].mxu0 %v3136
      %v3182 = vpop.f32.mrb[0].mxu0
      %v3183 = vadd.f32 0.0, %v3182
      %v3184 = vpop.f32.mrb[0].mxu0
      %v3185 = vadd.f32 0.0, %v3184
      %v3186 = vpop.f32.mrb[0].mxu0
      %v3187 = vadd.f32 0.0, %v3186
      %v3188 = vpop.f32.mrb[0].mxu0
      %v3189 = vadd.f32 0.0, %v3188
      %3190 = vdwg.mxu0
      %3191 = vmatprep.subr.bf16.mxu0 0
      %3192 = vmatpush1.bf16.msra.mxu0 %v3110
      %3193 = vmatprep.subr.bf16.mxu0 0
      %3194 = vmatpush1.bf16.msra.mxu0 %v3113
      %3195 = vmatprep.subr.bf16.mxu0 0
      %3196 = vmatpush1.bf16.msra.mxu0 %v3116
      %3197 = vmatprep.subr.bf16.mxu0 0
      %3198 = vmatpush1.bf16.msra.mxu0 %v3119
      %3199 = vmatprep.subr.bf16.mxu0 0
      %3200 = vmatpush1.bf16.msra.mxu0 0
      %3201 = vmatprep.subr.bf16.mxu0 0
      %3202 = vmatpush1.bf16.msra.mxu0 0
      %3203 = vmatprep.subr.bf16.mxu0 0
      %3204 = vmatpush1.bf16.msra.mxu0 0
      %3205 = vmatprep.subr.bf16.mxu0 0
      %3206 = vmatpush1.bf16.msra.mxu0 0
      %3207 = vmatprep.subr.bf16.mxu0 0
      %3208 = vmatpush1.bf16.msra.mxu0 0
      %3209 = vmatprep.subr.bf16.mxu0 0
      %3210 = vmatpush1.bf16.msra.mxu0 0
      %3211 = vmatprep.subr.bf16.mxu0 0
      %3212 = vmatpush1.bf16.msra.mxu0 0
      %3213 = vmatprep.subr.bf16.mxu0 0
      %3214 = vmatpush1.bf16.msra.mxu0 0
      %3215 = vmatprep.subr.bf16.mxu0 0
      %3216 = vmatpush1.bf16.msra.mxu0 0
      %3217 = vmatprep.subr.bf16.mxu0 0
      %3218 = vmatpush1.bf16.msra.mxu0 0
      %3219 = vmatprep.subr.bf16.mxu0 0
      %3220 = vmatpush1.bf16.msra.mxu0 0
      %3221 = vmatprep.subr.bf16.mxu0 0
      %3222 = vmatpush1.bf16.msra.mxu0 0
      %3223 = vmatprep.mubr.bf16.mxu0 0
      %3224 = vmatmul.mubr.bf16.gmra.mrb[0].mxu0 %v3133
      %v3225 = vpop.f32.mrb[0].mxu0
      %v3226 = vadd.f32 0.0, %v3225
      %v3227 = vpop.f32.mrb[0].mxu0
      %v3228 = vpop.f32.mrb[0].mxu0
      %v3229 = vadd.f32 0.0, %v3228
      %v3230 = vpop.f32.mrb[0].mxu0
      %3231 = vmatprep.mubr.bf16.mxu0 0
      %3232 = vmatmul.mubr.bf16.gmra.mrb[0].mxu0 %v3136
      %v3233 = vpop.f32.mrb[0].mxu0
      %v3234 = vadd.f32 0.0, %v3233
      %v3235 = vpop.f32.mrb[0].mxu0
      %v3236 = vpop.f32.mrb[0].mxu0
      %v3237 = vadd.f32 0.0, %v3236
      %v3238 = vpop.f32.mrb[0].mxu0
      %3239 = vdwg.mxu0
      %v3240 = vadd.f32 %v3048, %v3173
      %v3241 = vadd.f32 %v3049, %v3175
      %v3242 = vadd.f32 %v3050, %v3226
      %v3243 = vadd.f32 %v3051, %v3177
      %v3244 = vadd.f32 %v3052, %v3179
      %v3245 = vadd.f32 %v3053, %v3229
      %v3246 = vadd.f32 %v3054, %v3183
      %v3247 = vadd.f32 %v3055, %v3185
      %v3248 = vadd.f32 %v3056, %v3234
      %v3249 = vadd.f32 %v3057, %v3187
      %v3250 = vadd.f32 %v3058, %v3189
      %v3251 = vadd.f32 %v3059, %v3237
      %s3252 = scalar_lea.vmem %s4, 64
      %v3253 = vld [vmem:[%s3252] sm:$0xf]
      %v3254 = vld [vmem:[%s3252 + $0x4] sm:$0xf]
      %v3255 = vld [vmem:[%s3252 + $0x8] sm:$0xf]
      %v3256 = vld [vmem:[%s3252 + $0xc] sm:$0xf]
      %v3261 = vunpack.c.l.b16 %v3253
      %v3262 = vunpack.c.l.b16 %v3254
      %v3263 = vunpack.c.l.b16 %v3255
      %v3264 = vunpack.c.l.b16 %v3256
      %v3265 = vpack.c.b16 %v3262, %v3261
      %v3266 = vpack.c.b16 %v3264, %v3263
      %v3268 = vsel %vm2584, %v3265, 0
      %v3271 = vsel %vm2584, %v3266, 0
      %3273 = vmatprep.subr.bf16.mxu0 %v2478
      %3274 = vmatpush1.bf16.msra.mxu0 %v2477
      %3275 = vmatprep.subr.bf16.mxu0 %v2482
      %3276 = vmatpush1.bf16.msra.mxu0 %v2481
      %3277 = vmatprep.subr.bf16.mxu0 %v2486
      %3278 = vmatpush1.bf16.msra.mxu0 %v2485
      %3279 = vmatprep.subr.bf16.mxu0 %v2490
      %3280 = vmatpush1.bf16.msra.mxu0 %v2489
      %3281 = vmatprep.subr.bf16.mxu0 0
      %3282 = vmatpush1.bf16.msra.mxu0 0
      %3283 = vmatprep.subr.bf16.mxu0 0
      %3284 = vmatpush1.bf16.msra.mxu0 0
      %3285 = vmatprep.subr.bf16.mxu0 0
      %3286 = vmatpush1.bf16.msra.mxu0 0
      %3287 = vmatprep.subr.bf16.mxu0 0
      %3288 = vmatpush1.bf16.msra.mxu0 0
      %3289 = vmatprep.subr.bf16.mxu0 0
      %3290 = vmatpush1.bf16.msra.mxu0 0
      %3291 = vmatprep.subr.bf16.mxu0 0
      %3292 = vmatpush1.bf16.msra.mxu0 0
      %3293 = vmatprep.subr.bf16.mxu0 0
      %3294 = vmatpush1.bf16.msra.mxu0 0
      %3295 = vmatprep.subr.bf16.mxu0 0
      %3296 = vmatpush1.bf16.msra.mxu0 0
      %3297 = vmatprep.subr.bf16.mxu0 0
      %3298 = vmatpush1.bf16.msra.mxu0 0
      %3299 = vmatprep.subr.bf16.mxu0 0
      %3300 = vmatpush1.bf16.msra.mxu0 0
      %3301 = vmatprep.subr.bf16.mxu0 0
      %3302 = vmatpush1.bf16.msra.mxu0 0
      %3303 = vmatprep.subr.bf16.mxu0 0
      %3304 = vmatpush1.bf16.msra.mxu0 0
      %3305 = vmatprep.mubr.bf16.mxu0 0
      %3306 = vmatmul.mubr.bf16.gmra.mrb[0].mxu0 %v3268
      %v3307 = vpop.f32.mrb[0].mxu0
      %v3308 = vadd.f32 0.0, %v3307
      %v3309 = vpop.f32.mrb[0].mxu0
      %v3310 = vadd.f32 0.0, %v3309
      %v3311 = vpop.f32.mrb[0].mxu0
      %v3312 = vadd.f32 0.0, %v3311
      %v3313 = vpop.f32.mrb[0].mxu0
      %v3314 = vadd.f32 0.0, %v3313
      %3315 = vmatprep.mubr.bf16.mxu0 0
      %3316 = vmatmul.mubr.bf16.gmra.mrb[0].mxu0 %v3271
      %v3317 = vpop.f32.mrb[0].mxu0
      %v3318 = vadd.f32 0.0, %v3317
      %v3319 = vpop.f32.mrb[0].mxu0
      %v3320 = vadd.f32 0.0, %v3319
      %v3321 = vpop.f32.mrb[0].mxu0
      %v3322 = vadd.f32 0.0, %v3321
      %v3323 = vpop.f32.mrb[0].mxu0
      %v3324 = vadd.f32 0.0, %v3323
      %3325 = vdwg.mxu0
      %3326 = vmatprep.subr.bf16.mxu0 0
      %3327 = vmatpush1.bf16.msra.mxu0 %v2479
      %3328 = vmatprep.subr.bf16.mxu0 0
      %3329 = vmatpush1.bf16.msra.mxu0 %v2483
      %3330 = vmatprep.subr.bf16.mxu0 0
      %3331 = vmatpush1.bf16.msra.mxu0 %v2487
      %3332 = vmatprep.subr.bf16.mxu0 0
      %3333 = vmatpush1.bf16.msra.mxu0 %v2491
      %3334 = vmatprep.subr.bf16.mxu0 0
      %3335 = vmatpush1.bf16.msra.mxu0 0
      %3336 = vmatprep.subr.bf16.mxu0 0
      %3337 = vmatpush1.bf16.msra.mxu0 0
      %3338 = vmatprep.subr.bf16.mxu0 0
      %3339 = vmatpush1.bf16.msra.mxu0 0
      %3340 = vmatprep.subr.bf16.mxu0 0
      %3341 = vmatpush1.bf16.msra.mxu0 0
      %3342 = vmatprep.subr.bf16.mxu0 0
      %3343 = vmatpush1.bf16.msra.mxu0 0
      %3344 = vmatprep.subr.bf16.mxu0 0
      %3345 = vmatpush1.bf16.msra.mxu0 0
      %3346 = vmatprep.subr.bf16.mxu0 0
      %3347 = vmatpush1.bf16.msra.mxu0 0
      %3348 = vmatprep.subr.bf16.mxu0 0
      %3349 = vmatpush1.bf16.msra.mxu0 0
      %3350 = vmatprep.subr.bf16.mxu0 0
      %3351 = vmatpush1.bf16.msra.mxu0 0
      %3352 = vmatprep.subr.bf16.mxu0 0
      %3353 = vmatpush1.bf16.msra.mxu0 0
      %3354 = vmatprep.subr.bf16.mxu0 0
      %3355 = vmatpush1.bf16.msra.mxu0 0
      %3356 = vmatprep.subr.bf16.mxu0 0
      %3357 = vmatpush1.bf16.msra.mxu0 0
      %3358 = vmatprep.mubr.bf16.mxu0 0
      %3359 = vmatmul.mubr.bf16.gmra.mrb[0].mxu0 %v3268
      %v3360 = vpop.f32.mrb[0].mxu0
      %v3361 = vadd.f32 0.0, %v3360
      %v3362 = vpop.f32.mrb[0].mxu0
      %v3363 = vpop.f32.mrb[0].mxu0
      %v3364 = vadd.f32 0.0, %v3363
      %v3365 = vpop.f32.mrb[0].mxu0
      %3366 = vmatprep.mubr.bf16.mxu0 0
      %3367 = vmatmul.mubr.bf16.gmra.mrb[0].mxu0 %v3271
      %v3368 = vpop.f32.mrb[0].mxu0
      %v3369 = vadd.f32 0.0, %v3368
      %v3370 = vpop.f32.mrb[0].mxu0
      %v3371 = vpop.f32.mrb[0].mxu0
      %v3372 = vadd.f32 0.0, %v3371
      %v3373 = vpop.f32.mrb[0].mxu0
      %3374 = vdwg.mxu0
      %v3375 = vadd.f32 %v3240, %v3308
      %v3376 = vadd.f32 %v3241, %v3310
      %v3377 = vadd.f32 %v3242, %v3361
      %v3378 = vadd.f32 %v3243, %v3312
      %v3379 = vadd.f32 %v3244, %v3314
      %v3380 = vadd.f32 %v3245, %v3364
      %v3381 = vadd.f32 %v3246, %v3318
      %v3382 = vadd.f32 %v3247, %v3320
      %v3383 = vadd.f32 %v3248, %v3369
      %v3384 = vadd.f32 %v3249, %v3322
      %v3385 = vadd.f32 %v3250, %v3324
      %v3386 = vadd.f32 %v3251, %v3372
      %v3387 = vld [vmem:[#allocation2 + $0x8] sm:$0xff]
      %v3388 = vld [vmem:[#allocation2 + $0x10] sm:$0xff]
      %v3389 = vld [vmem:[#allocation2 + $0x18] sm:$0xff]
      %v3390 = vld [vmem:[#allocation2 + $0x20] sm:$0xff]
      %v3391 = vld [vmem:[#allocation2 + $0x30] sm:$0xff]
      %v3392 = vld [vmem:[#allocation2 + $0x38] sm:$0xff]
      %v3393 = vld [vmem:[#allocation2 + $0x40] sm:$0xff]
      %v3394 = vld [vmem:[#allocation2 + $0x48] sm:$0xff]
      %v3395 = vld [vmem:[#allocation2 + $0x58] sm:$0xff]
      %v3396 = vld [vmem:[#allocation2 + $0x60] sm:$0xff]
      %v3397 = vld [vmem:[#allocation2 + $0x68] sm:$0xff]
      %v3398 = vld [vmem:[#allocation2 + $0x70] sm:$0xff]
      %v3399 = vld [vmem:[#allocation2 + $0x80] sm:$0xff]
      %v3400 = vld [vmem:[#allocation2 + $0x88] sm:$0xff]
      %v3401 = vld [vmem:[#allocation2 + $0x90] sm:$0xff]
      %v3402 = vld [vmem:[#allocation2 + $0x98] sm:$0xff]
      %s3403 = scalar_lea.vmem %s4, 80
      %v3404 = vld [vmem:[%s3403] sm:$0xf]
      %v3405 = vld [vmem:[%s3403 + $0x4] sm:$0xf]
      %v3406 = vld [vmem:[%s3403 + $0x8] sm:$0xf]
      %v3407 = vld [vmem:[%s3403 + $0xc] sm:$0xf]
      %v3412 = vunpack.c.l.b16 %v3404
      %v3413 = vunpack.c.l.b16 %v3405
      %v3414 = vunpack.c.l.b16 %v3406
      %v3415 = vunpack.c.l.b16 %v3407
      %v3416 = vpack.c.b16 %v3413, %v3412
      %v3417 = vpack.c.b16 %v3415, %v3414
      %3434 = vrot.lane.b32.xlu0 %v3387, 127
      %v3435 = vpop.permute.xlu0 %3434
      %3436 = vrot.lane.b32.xlu0 %v3388, 127
      %v3437 = vpop.permute.xlu0 %3436
      %3438 = vrot.lane.b32.xlu0 %v3389, 127
      %v3439 = vpop.permute.xlu0 %3438
      %3440 = vrot.lane.b32.xlu0 %v3390, 127
      %v3441 = vpop.permute.xlu0 %3440
      %3442 = vrot.lane.b32.xlu0 %v3391, 127
      %v3443 = vpop.permute.xlu0 %3442
      %3444 = vrot.lane.b32.xlu0 %v3392, 127
      %v3445 = vpop.permute.xlu0 %3444
      %3446 = vrot.lane.b32.xlu0 %v3393, 127
      %v3447 = vpop.permute.xlu0 %3446
      %3448 = vrot.lane.b32.xlu0 %v3394, 127
      %v3449 = vpop.permute.xlu0 %3448
      %3450 = vrot.lane.b32.xlu0 %v3395, 127
      %v3451 = vpop.permute.xlu0 %3450
      %3452 = vrot.lane.b32.xlu0 %v3396, 127
      %v3453 = vpop.permute.xlu0 %3452
      %3454 = vrot.lane.b32.xlu0 %v3397, 127
      %v3455 = vpop.permute.xlu0 %3454
      %3456 = vrot.lane.b32.xlu0 %v3398, 127
      %v3457 = vpop.permute.xlu0 %3456
      %3458 = vrot.lane.b32.xlu0 %v3399, 127
      %v3459 = vpop.permute.xlu0 %3458
      %3460 = vrot.lane.b32.xlu0 %v3400, 127
      %v3461 = vpop.permute.xlu0 %3460
      %3462 = vrot.lane.b32.xlu0 %v3401, 127
      %v3463 = vpop.permute.xlu0 %3462
      %3464 = vrot.lane.b32.xlu0 %v3402, 127
      %v3465 = vpop.permute.xlu0 %3464
      %vm3466 = vcmask 1039360
      %v3467 = vsel %vm3466, %v3435, %v3437
      %v3468 = vsel %vm3466, %v3437, %v3439
      %v3469 = vsel %vm3466, %v3439, %v3441
      %v3470 = vsel %vm3466, %v3443, %v3445
      %v3471 = vsel %vm3466, %v3445, %v3447
      %v3472 = vsel %vm3466, %v3447, %v3449
      %v3473 = vsel %vm3466, %v3451, %v3453
      %v3474 = vsel %vm3466, %v3453, %v3455
      %v3475 = vsel %vm3466, %v3455, %v3457
      %v3476 = vsel %vm3466, %v3459, %v3461
      %v3477 = vsel %vm3466, %v3461, %v3463
      %v3478 = vsel %vm3466, %v3463, %v3465
      %v3492 = vsel %vm2584, %v3416, 0
      %v3495 = vsel %vm2584, %v3417, 0
      %3497 = vmatprep.subr.bf16.mxu0 %v3468
      %3498 = vmatpush1.bf16.msra.mxu0 %v3467
      %3499 = vmatprep.subr.bf16.mxu0 %v3471
      %3500 = vmatpush1.bf16.msra.mxu0 %v3470
      %3501 = vmatprep.subr.bf16.mxu0 %v3474
      %3502 = vmatpush1.bf16.msra.mxu0 %v3473
      %3503 = vmatprep.subr.bf16.mxu0 %v3477
      %3504 = vmatpush1.bf16.msra.mxu0 %v3476
      %3505 = vmatprep.subr.bf16.mxu0 0
      %3506 = vmatpush1.bf16.msra.mxu0 0
      %3507 = vmatprep.subr.bf16.mxu0 0
      %3508 = vmatpush1.bf16.msra.mxu0 0
      %3509 = vmatprep.subr.bf16.mxu0 0
      %3510 = vmatpush1.bf16.msra.mxu0 0
      %3511 = vmatprep.subr.bf16.mxu0 0
      %3512 = vmatpush1.bf16.msra.mxu0 0
      %3513 = vmatprep.subr.bf16.mxu0 0
      %3514 = vmatpush1.bf16.msra.mxu0 0
      %3515 = vmatprep.subr.bf16.mxu0 0
      %3516 = vmatpush1.bf16.msra.mxu0 0
      %3517 = vmatprep.subr.bf16.mxu0 0
      %3518 = vmatpush1.bf16.msra.mxu0 0
      %3519 = vmatprep.subr.bf16.mxu0 0
      %3520 = vmatpush1.bf16.msra.mxu0 0
      %3521 = vmatprep.subr.bf16.mxu0 0
      %3522 = vmatpush1.bf16.msra.mxu0 0
      %3523 = vmatprep.subr.bf16.mxu0 0
      %3524 = vmatpush1.bf16.msra.mxu0 0
      %3525 = vmatprep.subr.bf16.mxu0 0
      %3526 = vmatpush1.bf16.msra.mxu0 0
      %3527 = vmatprep.subr.bf16.mxu0 0
      %3528 = vmatpush1.bf16.msra.mxu0 0
      %3529 = vmatprep.mubr.bf16.mxu0 0
      %3530 = vmatmul.mubr.bf16.gmra.mrb[0].mxu0 %v3492
      %v3531 = vpop.f32.mrb[0].mxu0
      %v3532 = vadd.f32 0.0, %v3531
      %v3533 = vpop.f32.mrb[0].mxu0
      %v3534 = vadd.f32 0.0, %v3533
      %v3535 = vpop.f32.mrb[0].mxu0
      %v3536 = vadd.f32 0.0, %v3535
      %v3537 = vpop.f32.mrb[0].mxu0
      %v3538 = vadd.f32 0.0, %v3537
      %3539 = vmatprep.mubr.bf16.mxu0 0
      %3540 = vmatmul.mubr.bf16.gmra.mrb[0].mxu0 %v3495
      %v3541 = vpop.f32.mrb[0].mxu0
      %v3542 = vadd.f32 0.0, %v3541
      %v3543 = vpop.f32.mrb[0].mxu0
      %v3544 = vadd.f32 0.0, %v3543
      %v3545 = vpop.f32.mrb[0].mxu0
      %v3546 = vadd.f32 0.0, %v3545
      %v3547 = vpop.f32.mrb[0].mxu0
      %v3548 = vadd.f32 0.0, %v3547
      %3549 = vdwg.mxu0
      %3550 = vmatprep.subr.bf16.mxu0 0
      %3551 = vmatpush1.bf16.msra.mxu0 %v3469
      %3552 = vmatprep.subr.bf16.mxu0 0
      %3553 = vmatpush1.bf16.msra.mxu0 %v3472
      %3554 = vmatprep.subr.bf16.mxu0 0
      %3555 = vmatpush1.bf16.msra.mxu0 %v3475
      %3556 = vmatprep.subr.bf16.mxu0 0
      %3557 = vmatpush1.bf16.msra.mxu0 %v3478
      %3558 = vmatprep.subr.bf16.mxu0 0
      %3559 = vmatpush1.bf16.msra.mxu0 0
      %3560 = vmatprep.subr.bf16.mxu0 0
      %3561 = vmatpush1.bf16.msra.mxu0 0
      %3562 = vmatprep.subr.bf16.mxu0 0
      %3563 = vmatpush1.bf16.msra.mxu0 0
      %3564 = vmatprep.subr.bf16.mxu0 0
      %3565 = vmatpush1.bf16.msra.mxu0 0
      %3566 = vmatprep.subr.bf16.mxu0 0
      %3567 = vmatpush1.bf16.msra.mxu0 0
      %3568 = vmatprep.subr.bf16.mxu0 0
      %3569 = vmatpush1.bf16.msra.mxu0 0
      %3570 = vmatprep.subr.bf16.mxu0 0
      %3571 = vmatpush1.bf16.msra.mxu0 0
      %3572 = vmatprep.subr.bf16.mxu0 0
      %3573 = vmatpush1.bf16.msra.mxu0 0
      %3574 = vmatprep.subr.bf16.mxu0 0
      %3575 = vmatpush1.bf16.msra.mxu0 0
      %3576 = vmatprep.subr.bf16.mxu0 0
      %3577 = vmatpush1.bf16.msra.mxu0 0
      %3578 = vmatprep.subr.bf16.mxu0 0
      %3579 = vmatpush1.bf16.msra.mxu0 0
      %3580 = vmatprep.subr.bf16.mxu0 0
      %3581 = vmatpush1.bf16.msra.mxu0 0
      %3582 = vmatprep.mubr.bf16.mxu0 0
      %3583 = vmatmul.mubr.bf16.gmra.mrb[0].mxu0 %v3492
      %v3584 = vpop.f32.mrb[0].mxu0
      %v3585 = vadd.f32 0.0, %v3584
      %v3586 = vpop.f32.mrb[0].mxu0
      %v3587 = vpop.f32.mrb[0].mxu0
      %v3588 = vadd.f32 0.0, %v3587
      %v3589 = vpop.f32.mrb[0].mxu0
      %3590 = vmatprep.mubr.bf16.mxu0 0
      %3591 = vmatmul.mubr.bf16.gmra.mrb[0].mxu0 %v3495
      %v3592 = vpop.f32.mrb[0].mxu0
      %v3593 = vadd.f32 0.0, %v3592
      %v3594 = vpop.f32.mrb[0].mxu0
      %v3595 = vpop.f32.mrb[0].mxu0
      %v3596 = vadd.f32 0.0, %v3595
      %v3597 = vpop.f32.mrb[0].mxu0
      %3598 = vdwg.mxu0
      %v3599 = vadd.f32 %v3375, %v3532
      %v3600 = vadd.f32 %v3376, %v3534
      %v3601 = vadd.f32 %v3377, %v3585
      %v3602 = vadd.f32 %v3378, %v3536
      %v3603 = vadd.f32 %v3379, %v3538
      %v3604 = vadd.f32 %v3380, %v3588
      %v3605 = vadd.f32 %v3381, %v3542
      %v3606 = vadd.f32 %v3382, %v3544
      %v3607 = vadd.f32 %v3383, %v3593
      %v3608 = vadd.f32 %v3384, %v3546
      %v3609 = vadd.f32 %v3385, %v3548
      %v3610 = vadd.f32 %v3386, %v3596
      %s3611 = scalar_lea.vmem %s4, 96
      %v3612 = vld [vmem:[%s3611] sm:$0xf]
      %v3613 = vld [vmem:[%s3611 + $0x4] sm:$0xf]
      %v3614 = vld [vmem:[%s3611 + $0x8] sm:$0xf]
      %v3615 = vld [vmem:[%s3611 + $0xc] sm:$0xf]
      %v3620 = vunpack.c.l.b16 %v3612
      %v3621 = vunpack.c.l.b16 %v3613
      %v3622 = vunpack.c.l.b16 %v3614
      %v3623 = vunpack.c.l.b16 %v3615
      %v3624 = vpack.c.b16 %v3621, %v3620
      %v3625 = vpack.c.b16 %v3623, %v3622
      %3626 = vrot.lane.b32.xlu0 %v3387, 111
      %v3627 = vpop.permute.xlu0 %3626
      %3628 = vrot.lane.b32.xlu0 %v3388, 111
      %v3629 = vpop.permute.xlu0 %3628
      %3630 = vrot.lane.b32.xlu0 %v3389, 111
      %v3631 = vpop.permute.xlu0 %3630
      %3632 = vrot.lane.b32.xlu0 %v3390, 111
      %v3633 = vpop.permute.xlu0 %3632
      %3634 = vrot.lane.b32.xlu0 %v3391, 111
      %v3635 = vpop.permute.xlu0 %3634
      %3636 = vrot.lane.b32.xlu0 %v3392, 111
      %v3637 = vpop.permute.xlu0 %3636
      %3638 = vrot.lane.b32.xlu0 %v3393, 111
      %v3639 = vpop.permute.xlu0 %3638
      %3640 = vrot.lane.b32.xlu0 %v3394, 111
      %v3641 = vpop.permute.xlu0 %3640
      %3642 = vrot.lane.b32.xlu0 %v3395, 111
      %v3643 = vpop.permute.xlu0 %3642
      %3644 = vrot.lane.b32.xlu0 %v3396, 111
      %v3645 = vpop.permute.xlu0 %3644
      %3646 = vrot.lane.b32.xlu0 %v3397, 111
      %v3647 = vpop.permute.xlu0 %3646
      %3648 = vrot.lane.b32.xlu0 %v3398, 111
      %v3649 = vpop.permute.xlu0 %3648
      %3650 = vrot.lane.b32.xlu0 %v3399, 111
      %v3651 = vpop.permute.xlu0 %3650
      %3652 = vrot.lane.b32.xlu0 %v3400, 111
      %v3653 = vpop.permute.xlu0 %3652
      %3654 = vrot.lane.b32.xlu0 %v3401, 111
      %v3655 = vpop.permute.xlu0 %3654
      %3656 = vrot.lane.b32.xlu0 %v3402, 111
      %v3657 = vpop.permute.xlu0 %3656
      %vm3658 = vcmask 908288
      %v3659 = vsel %vm3658, %v3627, %v3629
      %v3660 = vsel %vm3658, %v3629, %v3631
      %v3661 = vsel %vm3658, %v3631, %v3633
      %v3662 = vsel %vm3658, %v3635, %v3637
      %v3663 = vsel %vm3658, %v3637, %v3639
      %v3664 = vsel %vm3658, %v3639, %v3641
      %v3665 = vsel %vm3658, %v3643, %v3645
      %v3666 = vsel %vm3658, %v3645, %v3647
      %v3667 = vsel %vm3658, %v3647, %v3649
      %v3668 = vsel %vm3658, %v3651, %v3653
      %v3669 = vsel %vm3658, %v3653, %v3655
      %v3670 = vsel %vm3658, %v3655, %v3657
      %v3684 = vsel %vm2584, %v3624, 0
      %v3687 = vsel %vm2584, %v3625, 0
      %3689 = vmatprep.subr.bf16.mxu0 %v3660
      %3690 = vmatpush1.bf16.msra.mxu0 %v3659
      %3691 = vmatprep.subr.bf16.mxu0 %v3663
      %3692 = vmatpush1.bf16.msra.mxu0 %v3662
      %3693 = vmatprep.subr.bf16.mxu0 %v3666
      %3694 = vmatpush1.bf16.msra.mxu0 %v3665
      %3695 = vmatprep.subr.bf16.mxu0 %v3669
      %3696 = vmatpush1.bf16.msra.mxu0 %v3668
      %3697 = vmatprep.subr.bf16.mxu0 0
      %3698 = vmatpush1.bf16.msra.mxu0 0
      %3699 = vmatprep.subr.bf16.mxu0 0
      %3700 = vmatpush1.bf16.msra.mxu0 0
      %3701 = vmatprep.subr.bf16.mxu0 0
      %3702 = vmatpush1.bf16.msra.mxu0 0
      %3703 = vmatprep.subr.bf16.mxu0 0
      %3704 = vmatpush1.bf16.msra.mxu0 0
      %3705 = vmatprep.subr.bf16.mxu0 0
      %3706 = vmatpush1.bf16.msra.mxu0 0
      %3707 = vmatprep.subr.bf16.mxu0 0
      %3708 = vmatpush1.bf16.msra.mxu0 0
      %3709 = vmatprep.subr.bf16.mxu0 0
      %3710 = vmatpush1.bf16.msra.mxu0 0
      %3711 = vmatprep.subr.bf16.mxu0 0
      %3712 = vmatpush1.bf16.msra.mxu0 0
      %3713 = vmatprep.subr.bf16.mxu0 0
      %3714 = vmatpush1.bf16.msra.mxu0 0
      %3715 = vmatprep.subr.bf16.mxu0 0
      %3716 = vmatpush1.bf16.msra.mxu0 0
      %3717 = vmatprep.subr.bf16.mxu0 0
      %3718 = vmatpush1.bf16.msra.mxu0 0
      %3719 = vmatprep.subr.bf16.mxu0 0
      %3720 = vmatpush1.bf16.msra.mxu0 0
      %3721 = vmatprep.mubr.bf16.mxu0 0
      %3722 = vmatmul.mubr.bf16.gmra.mrb[0].mxu0 %v3684
      %v3723 = vpop.f32.mrb[0].mxu0
      %v3724 = vadd.f32 0.0, %v3723
      %v3725 = vpop.f32.mrb[0].mxu0
      %v3726 = vadd.f32 0.0, %v3725
      %v3727 = vpop.f32.mrb[0].mxu0
      %v3728 = vadd.f32 0.0, %v3727
      %v3729 = vpop.f32.mrb[0].mxu0
      %v3730 = vadd.f32 0.0, %v3729
      %3731 = vmatprep.mubr.bf16.mxu0 0
      %3732 = vmatmul.mubr.bf16.gmra.mrb[0].mxu0 %v3687
      %v3733 = vpop.f32.mrb[0].mxu0
      %v3734 = vadd.f32 0.0, %v3733
      %v3735 = vpop.f32.mrb[0].mxu0
      %v3736 = vadd.f32 0.0, %v3735
      %v3737 = vpop.f32.mrb[0].mxu0
      %v3738 = vadd.f32 0.0, %v3737
      %v3739 = vpop.f32.mrb[0].mxu0
      %v3740 = vadd.f32 0.0, %v3739
      %3741 = vdwg.mxu0
      %3742 = vmatprep.subr.bf16.mxu0 0
      %3743 = vmatpush1.bf16.msra.mxu0 %v3661
      %3744 = vmatprep.subr.bf16.mxu0 0
      %3745 = vmatpush1.bf16.msra.mxu0 %v3664
      %3746 = vmatprep.subr.bf16.mxu0 0
      %3747 = vmatpush1.bf16.msra.mxu0 %v3667
      %3748 = vmatprep.subr.bf16.mxu0 0
      %3749 = vmatpush1.bf16.msra.mxu0 %v3670
      %3750 = vmatprep.subr.bf16.mxu0 0
      %3751 = vmatpush1.bf16.msra.mxu0 0
      %3752 = vmatprep.subr.bf16.mxu0 0
      %3753 = vmatpush1.bf16.msra.mxu0 0
      %3754 = vmatprep.subr.bf16.mxu0 0
      %3755 = vmatpush1.bf16.msra.mxu0 0
      %3756 = vmatprep.subr.bf16.mxu0 0
      %3757 = vmatpush1.bf16.msra.mxu0 0
      %3758 = vmatprep.subr.bf16.mxu0 0
      %3759 = vmatpush1.bf16.msra.mxu0 0
      %3760 = vmatprep.subr.bf16.mxu0 0
      %3761 = vmatpush1.bf16.msra.mxu0 0
      %3762 = vmatprep.subr.bf16.mxu0 0
      %3763 = vmatpush1.bf16.msra.mxu0 0
      %3764 = vmatprep.subr.bf16.mxu0 0
      %3765 = vmatpush1.bf16.msra.mxu0 0
      %3766 = vmatprep.subr.bf16.mxu0 0
      %3767 = vmatpush1.bf16.msra.mxu0 0
      %3768 = vmatprep.subr.bf16.mxu0 0
      %3769 = vmatpush1.bf16.msra.mxu0 0
      %3770 = vmatprep.subr.bf16.mxu0 0
      %3771 = vmatpush1.bf16.msra.mxu0 0
      %3772 = vmatprep.subr.bf16.mxu0 0
      %3773 = vmatpush1.bf16.msra.mxu0 0
      %3774 = vmatprep.mubr.bf16.mxu0 0
      %3775 = vmatmul.mubr.bf16.gmra.mrb[0].mxu0 %v3684
      %v3776 = vpop.f32.mrb[0].mxu0
      %v3777 = vadd.f32 0.0, %v3776
      %v3778 = vpop.f32.mrb[0].mxu0
      %v3779 = vpop.f32.mrb[0].mxu0
      %v3780 = vadd.f32 0.0, %v3779
      %v3781 = vpop.f32.mrb[0].mxu0
      %3782 = vmatprep.mubr.bf16.mxu0 0
      %3783 = vmatmul.mubr.bf16.gmra.mrb[0].mxu0 %v3687
      %v3784 = vpop.f32.mrb[0].mxu0
      %v3785 = vadd.f32 0.0, %v3784
      %v3786 = vpop.f32.mrb[0].mxu0
      %v3787 = vpop.f32.mrb[0].mxu0
      %v3788 = vadd.f32 0.0, %v3787
      %v3789 = vpop.f32.mrb[0].mxu0
      %3790 = vdwg.mxu0
      %v3791 = vadd.f32 %v3599, %v3724
      %v3792 = vadd.f32 %v3600, %v3726
      %v3793 = vadd.f32 %v3601, %v3777
      %v3794 = vadd.f32 %v3602, %v3728
      %v3795 = vadd.f32 %v3603, %v3730
      %v3796 = vadd.f32 %v3604, %v3780
      %v3797 = vadd.f32 %v3605, %v3734
      %v3798 = vadd.f32 %v3606, %v3736
      %v3799 = vadd.f32 %v3607, %v3785
      %v3800 = vadd.f32 %v3608, %v3738
      %v3801 = vadd.f32 %v3609, %v3740
      %v3802 = vadd.f32 %v3610, %v3788
      %s3803 = scalar_lea.vmem %s4, 112
      %v3804 = vld [vmem:[%s3803] sm:$0xf]
      %v3805 = vld [vmem:[%s3803 + $0x4] sm:$0xf]
      %v3806 = vld [vmem:[%s3803 + $0x8] sm:$0xf]
      %v3807 = vld [vmem:[%s3803 + $0xc] sm:$0xf]
      %v3812 = vunpack.c.l.b16 %v3804
      %v3813 = vunpack.c.l.b16 %v3805
      %v3814 = vunpack.c.l.b16 %v3806
      %v3815 = vunpack.c.l.b16 %v3807
      %v3816 = vpack.c.b16 %v3813, %v3812
      %v3817 = vpack.c.b16 %v3815, %v3814
      %3818 = vrot.lane.b32.xlu0 %v3387, 110
      %v3819 = vpop.permute.xlu0 %3818
      %3820 = vrot.lane.b32.xlu0 %v3388, 110
      %v3821 = vpop.permute.xlu0 %3820
      %3822 = vrot.lane.b32.xlu0 %v3389, 110
      %v3823 = vpop.permute.xlu0 %3822
      %3824 = vrot.lane.b32.xlu0 %v3390, 110
      %v3825 = vpop.permute.xlu0 %3824
      %3826 = vrot.lane.b32.xlu0 %v3391, 110
      %v3827 = vpop.permute.xlu0 %3826
      %3828 = vrot.lane.b32.xlu0 %v3392, 110
      %v3829 = vpop.permute.xlu0 %3828
      %3830 = vrot.lane.b32.xlu0 %v3393, 110
      %v3831 = vpop.permute.xlu0 %3830
      %3832 = vrot.lane.b32.xlu0 %v3394, 110
      %v3833 = vpop.permute.xlu0 %3832
      %3834 = vrot.lane.b32.xlu0 %v3395, 110
      %v3835 = vpop.permute.xlu0 %3834
      %3836 = vrot.lane.b32.xlu0 %v3396, 110
      %v3837 = vpop.permute.xlu0 %3836
      %3838 = vrot.lane.b32.xlu0 %v3397, 110
      %v3839 = vpop.permute.xlu0 %3838
      %3840 = vrot.lane.b32.xlu0 %v3398, 110
      %v3841 = vpop.permute.xlu0 %3840
      %3842 = vrot.lane.b32.xlu0 %v3399, 110
      %v3843 = vpop.permute.xlu0 %3842
      %3844 = vrot.lane.b32.xlu0 %v3400, 110
      %v3845 = vpop.permute.xlu0 %3844
      %3846 = vrot.lane.b32.xlu0 %v3401, 110
      %v3847 = vpop.permute.xlu0 %3846
      %3848 = vrot.lane.b32.xlu0 %v3402, 110
      %v3849 = vpop.permute.xlu0 %3848
      %vm3850 = vcmask 900096
      %v3851 = vsel %vm3850, %v3819, %v3821
      %v3852 = vsel %vm3850, %v3821, %v3823
      %v3853 = vsel %vm3850, %v3823, %v3825
      %v3854 = vsel %vm3850, %v3827, %v3829
      %v3855 = vsel %vm3850, %v3829, %v3831
      %v3856 = vsel %vm3850, %v3831, %v3833
      %v3857 = vsel %vm3850, %v3835, %v3837
      %v3858 = vsel %vm3850, %v3837, %v3839
      %v3859 = vsel %vm3850, %v3839, %v3841
      %v3860 = vsel %vm3850, %v3843, %v3845
      %v3861 = vsel %vm3850, %v3845, %v3847
      %v3862 = vsel %vm3850, %v3847, %v3849
      %v3876 = vsel %vm2584, %v3816, 0
      %v3879 = vsel %vm2584, %v3817, 0
      %3881 = vmatprep.subr.bf16.mxu0 %v3852
      %3882 = vmatpush1.bf16.msra.mxu0 %v3851
      %3883 = vmatprep.subr.bf16.mxu0 %v3855
      %3884 = vmatpush1.bf16.msra.mxu0 %v3854
      %3885 = vmatprep.subr.bf16.mxu0 %v3858
      %3886 = vmatpush1.bf16.msra.mxu0 %v3857
      %3887 = vmatprep.subr.bf16.mxu0 %v3861
      %3888 = vmatpush1.bf16.msra.mxu0 %v3860
      %3889 = vmatprep.subr.bf16.mxu0 0
      %3890 = vmatpush1.bf16.msra.mxu0 0
      %3891 = vmatprep.subr.bf16.mxu0 0
      %3892 = vmatpush1.bf16.msra.mxu0 0
      %3893 = vmatprep.subr.bf16.mxu0 0
      %3894 = vmatpush1.bf16.msra.mxu0 0
      %3895 = vmatprep.subr.bf16.mxu0 0
      %3896 = vmatpush1.bf16.msra.mxu0 0
      %3897 = vmatprep.subr.bf16.mxu0 0
      %3898 = vmatpush1.bf16.msra.mxu0 0
      %3899 = vmatprep.subr.bf16.mxu0 0
      %3900 = vmatpush1.bf16.msra.mxu0 0
      %3901 = vmatprep.subr.bf16.mxu0 0
      %3902 = vmatpush1.bf16.msra.mxu0 0
      %3903 = vmatprep.subr.bf16.mxu0 0
      %3904 = vmatpush1.bf16.msra.mxu0 0
      %3905 = vmatprep.subr.bf16.mxu0 0
      %3906 = vmatpush1.bf16.msra.mxu0 0
      %3907 = vmatprep.subr.bf16.mxu0 0
      %3908 = vmatpush1.bf16.msra.mxu0 0
      %3909 = vmatprep.subr.bf16.mxu0 0
      %3910 = vmatpush1.bf16.msra.mxu0 0
      %3911 = vmatprep.subr.bf16.mxu0 0
      %3912 = vmatpush1.bf16.msra.mxu0 0
      %3913 = vmatprep.mubr.bf16.mxu0 0
      %3914 = vmatmul.mubr.bf16.gmra.mrb[0].mxu0 %v3876
      %v3915 = vpop.f32.mrb[0].mxu0
      %v3916 = vadd.f32 0.0, %v3915
      %v3917 = vpop.f32.mrb[0].mxu0
      %v3918 = vadd.f32 0.0, %v3917
      %v3919 = vpop.f32.mrb[0].mxu0
      %v3920 = vadd.f32 0.0, %v3919
      %v3921 = vpop.f32.mrb[0].mxu0
      %v3922 = vadd.f32 0.0, %v3921
      %3923 = vmatprep.mubr.bf16.mxu0 0
      %3924 = vmatmul.mubr.bf16.gmra.mrb[0].mxu0 %v3879
      %v3925 = vpop.f32.mrb[0].mxu0
      %v3926 = vadd.f32 0.0, %v3925
      %v3927 = vpop.f32.mrb[0].mxu0
      %v3928 = vadd.f32 0.0, %v3927
      %v3929 = vpop.f32.mrb[0].mxu0
      %v3930 = vadd.f32 0.0, %v3929
      %v3931 = vpop.f32.mrb[0].mxu0
      %v3932 = vadd.f32 0.0, %v3931
      %3933 = vdwg.mxu0
      %3934 = vmatprep.subr.bf16.mxu0 0
      %3935 = vmatpush1.bf16.msra.mxu0 %v3853
      %3936 = vmatprep.subr.bf16.mxu0 0
      %3937 = vmatpush1.bf16.msra.mxu0 %v3856
      %3938 = vmatprep.subr.bf16.mxu0 0
      %3939 = vmatpush1.bf16.msra.mxu0 %v3859
      %3940 = vmatprep.subr.bf16.mxu0 0
      %3941 = vmatpush1.bf16.msra.mxu0 %v3862
      %3942 = vmatprep.subr.bf16.mxu0 0
      %3943 = vmatpush1.bf16.msra.mxu0 0
      %3944 = vmatprep.subr.bf16.mxu0 0
      %3945 = vmatpush1.bf16.msra.mxu0 0
      %3946 = vmatprep.subr.bf16.mxu0 0
      %3947 = vmatpush1.bf16.msra.mxu0 0
      %3948 = vmatprep.subr.bf16.mxu0 0
      %3949 = vmatpush1.bf16.msra.mxu0 0
      %3950 = vmatprep.subr.bf16.mxu0 0
      %3951 = vmatpush1.bf16.msra.mxu0 0
      %3952 = vmatprep.subr.bf16.mxu0 0
      %3953 = vmatpush1.bf16.msra.mxu0 0
      %3954 = vmatprep.subr.bf16.mxu0 0
      %3955 = vmatpush1.bf16.msra.mxu0 0
      %3956 = vmatprep.subr.bf16.mxu0 0
      %3957 = vmatpush1.bf16.msra.mxu0 0
      %3958 = vmatprep.subr.bf16.mxu0 0
      %3959 = vmatpush1.bf16.msra.mxu0 0
      %3960 = vmatprep.subr.bf16.mxu0 0
      %3961 = vmatpush1.bf16.msra.mxu0 0
      %3962 = vmatprep.subr.bf16.mxu0 0
      %3963 = vmatpush1.bf16.msra.mxu0 0
      %3964 = vmatprep.subr.bf16.mxu0 0
      %3965 = vmatpush1.bf16.msra.mxu0 0
      %3966 = vmatprep.mubr.bf16.mxu0 0
      %3967 = vmatmul.mubr.bf16.gmra.mrb[0].mxu0 %v3876
      %v3968 = vpop.f32.mrb[0].mxu0
      %v3969 = vadd.f32 0.0, %v3968
      %v3970 = vpop.f32.mrb[0].mxu0
      %v3971 = vpop.f32.mrb[0].mxu0
      %v3972 = vadd.f32 0.0, %v3971
      %v3973 = vpop.f32.mrb[0].mxu0
      %3974 = vmatprep.mubr.bf16.mxu0 0
      %3975 = vmatmul.mubr.bf16.gmra.mrb[0].mxu0 %v3879
      %v3976 = vpop.f32.mrb[0].mxu0
      %v3977 = vadd.f32 0.0, %v3976
      %v3978 = vpop.f32.mrb[0].mxu0
      %v3979 = vpop.f32.mrb[0].mxu0
      %v3980 = vadd.f32 0.0, %v3979
      %v3981 = vpop.f32.mrb[0].mxu0
      %3982 = vdwg.mxu0
      %v3983 = vadd.f32 %v3791, %v3916
      %v3984 = vadd.f32 %v3792, %v3918
      %v3985 = vadd.f32 %v3793, %v3969
      %v3986 = vadd.f32 %v3794, %v3920
      %v3987 = vadd.f32 %v3795, %v3922
      %v3988 = vadd.f32 %v3796, %v3972
      %v3989 = vadd.f32 %v3797, %v3926
      %v3990 = vadd.f32 %v3798, %v3928
      %v3991 = vadd.f32 %v3799, %v3977
      %v3992 = vadd.f32 %v3800, %v3930
      %v3993 = vadd.f32 %v3801, %v3932
      %v3994 = vadd.f32 %v3802, %v3980
      %s3995 = scalar_lea.vmem %s4, 128
      %v3996 = vld [vmem:[%s3995] sm:$0xf]
      %v3997 = vld [vmem:[%s3995 + $0x4] sm:$0xf]
      %v3998 = vld [vmem:[%s3995 + $0x8] sm:$0xf]
      %v3999 = vld [vmem:[%s3995 + $0xc] sm:$0xf]
      %v4004 = vunpack.c.l.b16 %v3996
      %v4005 = vunpack.c.l.b16 %v3997
      %v4006 = vunpack.c.l.b16 %v3998
      %v4007 = vunpack.c.l.b16 %v3999
      %v4008 = vpack.c.b16 %v4005, %v4004
      %v4009 = vpack.c.b16 %v4007, %v4006
      %4010 = vrot.lane.b32.xlu0 %v3387, 109
      %v4011 = vpop.permute.xlu0 %4010
      %4012 = vrot.lane.b32.xlu0 %v3388, 109
      %v4013 = vpop.permute.xlu0 %4012
      %4014 = vrot.lane.b32.xlu0 %v3389, 109
      %v4015 = vpop.permute.xlu0 %4014
      %4016 = vrot.lane.b32.xlu0 %v3390, 109
      %v4017 = vpop.permute.xlu0 %4016
      %4018 = vrot.lane.b32.xlu0 %v3391, 109
      %v4019 = vpop.permute.xlu0 %4018
      %4020 = vrot.lane.b32.xlu0 %v3392, 109
      %v4021 = vpop.permute.xlu0 %4020
      %4022 = vrot.lane.b32.xlu0 %v3393, 109
      %v4023 = vpop.permute.xlu0 %4022
      %4024 = vrot.lane.b32.xlu0 %v3394, 109
      %v4025 = vpop.permute.xlu0 %4024
      %4026 = vrot.lane.b32.xlu0 %v3395, 109
      %v4027 = vpop.permute.xlu0 %4026
      %4028 = vrot.lane.b32.xlu0 %v3396, 109
      %v4029 = vpop.permute.xlu0 %4028
      %4030 = vrot.lane.b32.xlu0 %v3397, 109
      %v4031 = vpop.permute.xlu0 %4030
      %4032 = vrot.lane.b32.xlu0 %v3398, 109
      %v4033 = vpop.permute.xlu0 %4032
      %4034 = vrot.lane.b32.xlu0 %v3399, 109
      %v4035 = vpop.permute.xlu0 %4034
      %4036 = vrot.lane.b32.xlu0 %v3400, 109
      %v4037 = vpop.permute.xlu0 %4036
      %4038 = vrot.lane.b32.xlu0 %v3401, 109
      %v4039 = vpop.permute.xlu0 %4038
      %4040 = vrot.lane.b32.xlu0 %v3402, 109
      %v4041 = vpop.permute.xlu0 %4040
      %vm4042 = vcmask 891904
      %v4043 = vsel %vm4042, %v4011, %v4013
      %v4044 = vsel %vm4042, %v4013, %v4015
      %v4045 = vsel %vm4042, %v4015, %v4017
      %v4046 = vsel %vm4042, %v4019, %v4021
      %v4047 = vsel %vm4042, %v4021, %v4023
      %v4048 = vsel %vm4042, %v4023, %v4025
      %v4049 = vsel %vm4042, %v4027, %v4029
      %v4050 = vsel %vm4042, %v4029, %v4031
      %v4051 = vsel %vm4042, %v4031, %v4033
      %v4052 = vsel %vm4042, %v4035, %v4037
      %v4053 = vsel %vm4042, %v4037, %v4039
      %v4054 = vsel %vm4042, %v4039, %v4041
      %v4068 = vsel %vm2584, %v4008, 0
      %v4071 = vsel %vm2584, %v4009, 0
      %4073 = vmatprep.subr.bf16.mxu0 %v4044
      %4074 = vmatpush1.bf16.msra.mxu0 %v4043
      %4075 = vmatprep.subr.bf16.mxu0 %v4047
      %4076 = vmatpush1.bf16.msra.mxu0 %v4046
      %4077 = vmatprep.subr.bf16.mxu0 %v4050
      %4078 = vmatpush1.bf16.msra.mxu0 %v4049
      %4079 = vmatprep.subr.bf16.mxu0 %v4053
      %4080 = vmatpush1.bf16.msra.mxu0 %v4052
      %4081 = vmatprep.subr.bf16.mxu0 0
      %4082 = vmatpush1.bf16.msra.mxu0 0
      %4083 = vmatprep.subr.bf16.mxu0 0
      %4084 = vmatpush1.bf16.msra.mxu0 0
      %4085 = vmatprep.subr.bf16.mxu0 0
      %4086 = vmatpush1.bf16.msra.mxu0 0
      %4087 = vmatprep.subr.bf16.mxu0 0
      %4088 = vmatpush1.bf16.msra.mxu0 0
      %4089 = vmatprep.subr.bf16.mxu0 0
      %4090 = vmatpush1.bf16.msra.mxu0 0
      %4091 = vmatprep.subr.bf16.mxu0 0
      %4092 = vmatpush1.bf16.msra.mxu0 0
      %4093 = vmatprep.subr.bf16.mxu0 0
      %4094 = vmatpush1.bf16.msra.mxu0 0
      %4095 = vmatprep.subr.bf16.mxu0 0
      %4096 = vmatpush1.bf16.msra.mxu0 0
      %4097 = vmatprep.subr.bf16.mxu0 0
      %4098 = vmatpush1.bf16.msra.mxu0 0
      %4099 = vmatprep.subr.bf16.mxu0 0
      %4100 = vmatpush1.bf16.msra.mxu0 0
      %4101 = vmatprep.subr.bf16.mxu0 0
      %4102 = vmatpush1.bf16.msra.mxu0 0
      %4103 = vmatprep.subr.bf16.mxu0 0
      %4104 = vmatpush1.bf16.msra.mxu0 0
      %4105 = vmatprep.mubr.bf16.mxu0 0
      %4106 = vmatmul.mubr.bf16.gmra.mrb[0].mxu0 %v4068
      %v4107 = vpop.f32.mrb[0].mxu0
      %v4108 = vadd.f32 0.0, %v4107
      %v4109 = vpop.f32.mrb[0].mxu0
      %v4110 = vadd.f32 0.0, %v4109
      %v4111 = vpop.f32.mrb[0].mxu0
      %v4112 = vadd.f32 0.0, %v4111
      %v4113 = vpop.f32.mrb[0].mxu0
      %v4114 = vadd.f32 0.0, %v4113
      %4115 = vmatprep.mubr.bf16.mxu0 0
      %4116 = vmatmul.mubr.bf16.gmra.mrb[0].mxu0 %v4071
      %v4117 = vpop.f32.mrb[0].mxu0
      %v4118 = vadd.f32 0.0, %v4117
      %v4119 = vpop.f32.mrb[0].mxu0
      %v4120 = vadd.f32 0.0, %v4119
      %v4121 = vpop.f32.mrb[0].mxu0
      %v4122 = vadd.f32 0.0, %v4121
      %v4123 = vpop.f32.mrb[0].mxu0
      %v4124 = vadd.f32 0.0, %v4123
      %4125 = vdwg.mxu0
      %4126 = vmatprep.subr.bf16.mxu0 0
      %4127 = vmatpush1.bf16.msra.mxu0 %v4045
      %4128 = vmatprep.subr.bf16.mxu0 0
      %4129 = vmatpush1.bf16.msra.mxu0 %v4048
      %4130 = vmatprep.subr.bf16.mxu0 0
      %4131 = vmatpush1.bf16.msra.mxu0 %v4051
      %4132 = vmatprep.subr.bf16.mxu0 0
      %4133 = vmatpush1.bf16.msra.mxu0 %v4054
      %4134 = vmatprep.subr.bf16.mxu0 0
      %4135 = vmatpush1.bf16.msra.mxu0 0
      %4136 = vmatprep.subr.bf16.mxu0 0
      %4137 = vmatpush1.bf16.msra.mxu0 0
      %4138 = vmatprep.subr.bf16.mxu0 0
      %4139 = vmatpush1.bf16.msra.mxu0 0
      %4140 = vmatprep.subr.bf16.mxu0 0
      %4141 = vmatpush1.bf16.msra.mxu0 0
      %4142 = vmatprep.subr.bf16.mxu0 0
      %4143 = vmatpush1.bf16.msra.mxu0 0
      %4144 = vmatprep.subr.bf16.mxu0 0
      %4145 = vmatpush1.bf16.msra.mxu0 0
      %4146 = vmatprep.subr.bf16.mxu0 0
      %4147 = vmatpush1.bf16.msra.mxu0 0
      %4148 = vmatprep.subr.bf16.mxu0 0
      %4149 = vmatpush1.bf16.msra.mxu0 0
      %4150 = vmatprep.subr.bf16.mxu0 0
      %4151 = vmatpush1.bf16.msra.mxu0 0
      %4152 = vmatprep.subr.bf16.mxu0 0
      %4153 = vmatpush1.bf16.msra.mxu0 0
      %4154 = vmatprep.subr.bf16.mxu0 0
      %4155 = vmatpush1.bf16.msra.mxu0 0
      %4156 = vmatprep.subr.bf16.mxu0 0
      %4157 = vmatpush1.bf16.msra.mxu0 0
      %4158 = vmatprep.mubr.bf16.mxu0 0
      %4159 = vmatmul.mubr.bf16.gmra.mrb[0].mxu0 %v4068
      %v4160 = vpop.f32.mrb[0].mxu0
      %v4161 = vadd.f32 0.0, %v4160
      %v4162 = vpop.f32.mrb[0].mxu0
      %v4163 = vpop.f32.mrb[0].mxu0
      %v4164 = vadd.f32 0.0, %v4163
      %v4165 = vpop.f32.mrb[0].mxu0
      %4166 = vmatprep.mubr.bf16.mxu0 0
      %4167 = vmatmul.mubr.bf16.gmra.mrb[0].mxu0 %v4071
      %v4168 = vpop.f32.mrb[0].mxu0
      %v4169 = vadd.f32 0.0, %v4168
      %v4170 = vpop.f32.mrb[0].mxu0
      %v4171 = vpop.f32.mrb[0].mxu0
      %v4172 = vadd.f32 0.0, %v4171
      %v4173 = vpop.f32.mrb[0].mxu0
      %4174 = vdwg.mxu0
      %v4175 = vadd.f32 %v3983, %v4108
      %v4176 = vadd.f32 %v3984, %v4110
      %v4177 = vadd.f32 %v3985, %v4161
      %v4178 = vadd.f32 %v3986, %v4112
      %v4179 = vadd.f32 %v3987, %v4114
      %v4180 = vadd.f32 %v3988, %v4164
      %v4181 = vadd.f32 %v3989, %v4118
      %v4182 = vadd.f32 %v3990, %v4120
      %v4183 = vadd.f32 %v3991, %v4169
      %v4184 = vadd.f32 %v3992, %v4122
      %v4185 = vadd.f32 %v3993, %v4124
      %v4186 = vadd.f32 %v3994, %v4172
      %v4187 = vld [vmem:[%s1] sm:$0x7]
      %v4188 = vld [vmem:[%s5] sm:$0xff]
      %v4189 = vld [vmem:[%s5 + $0x8] sm:$0xff]
      %v4190 = vld [vmem:[%s5 + $0x10] sm:$0xff]
      %v4191 = vld [vmem:[%s5 + $0x18] sm:$0xff]
      %4193 = vset.pattern.permute.xlu0 0
      %4194 = vperm.xlu0 %4193, %v4188
      %v4195 = vpop.permute.xlu0 %4194
      %4198 = vset.pattern.permute.xlu0 0
      %4199 = vperm.xlu0 %4198, %v4189
      %v4200 = vpop.permute.xlu0 %4199
      %4203 = vset.pattern.permute.xlu0 0
      %4204 = vperm.xlu0 %4203, %v4190
      %v4205 = vpop.permute.xlu0 %4204
      %4208 = vset.pattern.permute.xlu0 0
      %4209 = vperm.xlu0 %4208, %v4191
      %v4210 = vpop.permute.xlu0 %4209
      %v4212 = vadd.f32 %v4175, %v4195
      %v4213 = vadd.f32 %v4176, %v4195
      %v4214 = vadd.f32 %v4177, %v4195
      %v4215 = vadd.f32 %v4178, %v4200
      %v4216 = vadd.f32 %v4179, %v4200
      %v4217 = vadd.f32 %v4180, %v4200
      %v4218 = vadd.f32 %v4181, %v4205
      %v4219 = vadd.f32 %v4182, %v4205
      %v4220 = vadd.f32 %v4183, %v4205
      %v4221 = vadd.f32 %v4184, %v4210
      %v4222 = vadd.f32 %v4185, %v4210
      %v4223 = vadd.f32 %v4186, %v4210
      %v4224 = vmax.f32 %v4212, 0.0
      %v4225 = vmax.f32 %v4213, 0.0
      %v4226 = vmax.f32 %v4214, 0.0
      %v4227 = vmax.f32 %v4215, 0.0
      %v4228 = vmax.f32 %v4216, 0.0
      %v4229 = vmax.f32 %v4217, 0.0
      %v4230 = vmax.f32 %v4218, 0.0
      %v4231 = vmax.f32 %v4219, 0.0
      %v4232 = vmax.f32 %v4220, 0.0
      %v4233 = vmax.f32 %v4221, 0.0
      %v4234 = vmax.f32 %v4222, 0.0
      %v4235 = vmax.f32 %v4223, 0.0
      %v4237 = vlaneseq
      %v4238 = vshrl.u32 %v4237, 7
      %v4239 = vsub.s32 0, %v4238
      %v4240 = vrot.slane %v4187, %v4239
      %v4241 = vlaneseq
      %v4242 = vshrl.u32 %v4241, 7
      %v4243 = vsub.s32 1, %v4242
      %v4244 = vrot.slane %v4187, %v4243
      %v4245 = vlaneseq
      %v4246 = vshrl.u32 %v4245, 7
      %v4247 = vsub.s32 2, %v4246
      %v4248 = vrot.slane %v4187, %v4247
      %v4252 = vmul.f32 %v4224, %v4240
      %v4253 = vmul.f32 %v4225, %v4244
      %v4254 = vmul.f32 %v4226, %v4248
      %v4255 = vmul.f32 %v4227, %v4240
      %v4256 = vmul.f32 %v4228, %v4244
      %v4257 = vmul.f32 %v4229, %v4248
      %v4258 = vmul.f32 %v4230, %v4240
      %v4259 = vmul.f32 %v4231, %v4244
      %v4260 = vmul.f32 %v4232, %v4248
      %v4261 = vmul.f32 %v4233, %v4240
      %v4262 = vmul.f32 %v4234, %v4244
      %v4263 = vmul.f32 %v4235, %v4248
      %v4264 = vpack.c.bf16 %v4255, %v4252
      %v4265 = vpack.c.bf16 %v4256, %v4253
      %v4266 = vpack.c.bf16 %v4257, %v4254
      %v4267 = vpack.c.bf16 %v4261, %v4258
      %v4268 = vpack.c.bf16 %v4262, %v4259
      %v4269 = vpack.c.bf16 %v4263, %v4260
      %4270 = vst [vmem:[#allocation3 + $0x8] sm:$0xff] %v4264
      %4271 = vst [vmem:[#allocation3 + $0x10] sm:$0xff] %v4265
      %4272 = vst [vmem:[#allocation3 + $0x18] sm:$0xff] %v4266
      %4273 = vst [vmem:[#allocation3 + $0x30] sm:$0xff] %v4267
      %4274 = vst [vmem:[#allocation3 + $0x38] sm:$0xff] %v4268
      %4275 = vst [vmem:[#allocation3 + $0x40] sm:$0xff] %v4269
      %v4276 = vld [vmem:[#allocation3] sm:$0xff]
      %v4277 = vld [vmem:[#allocation3 + $0x8] sm:$0xff]
      %v4278 = vld [vmem:[#allocation3 + $0x10] sm:$0xff]
      %v4279 = vld [vmem:[#allocation3 + $0x18] sm:$0xff]
      %v4280 = vld [vmem:[#allocation3 + $0x28] sm:$0xff]
      %v4281 = vld [vmem:[#allocation3 + $0x30] sm:$0xff]
      %v4282 = vld [vmem:[#allocation3 + $0x38] sm:$0xff]
      %v4283 = vld [vmem:[#allocation3 + $0x40] sm:$0xff]
      %v4284 = vld [vmem:[%s6] sm:$0xff]
      %v4285 = vld [vmem:[%s6 + $0x8] sm:$0xff]
      %v4286 = vld [vmem:[%s6 + $0x10] sm:$0xff]
      %v4287 = vld [vmem:[%s6 + $0x18] sm:$0xff]
      %v4288 = vunpack.c.l.bf16 %v4276
      %v4289 = vunpack.c.l.bf16 %v4277
      %v4290 = vunpack.c.l.bf16 %v4278
      %v4291 = vunpack.c.l.bf16 %v4279
      %v4292 = vunpack.c.h.bf16 %v4276
      %v4293 = vunpack.c.h.bf16 %v4277
      %v4294 = vunpack.c.h.bf16 %v4278
      %v4295 = vunpack.c.h.bf16 %v4279
      %v4296 = vunpack.c.l.bf16 %v4280
      %v4297 = vunpack.c.l.bf16 %v4281
      %v4298 = vunpack.c.l.bf16 %v4282
      %v4299 = vunpack.c.l.bf16 %v4283
      %v4300 = vunpack.c.h.bf16 %v4280
      %v4301 = vunpack.c.h.bf16 %v4281
      %v4302 = vunpack.c.h.bf16 %v4282
      %v4303 = vunpack.c.h.bf16 %v4283
      %4305 = vset.pattern.permute.xlu0 0
      %4306 = vperm.xlu0 %4305, %v4284
      %v4307 = vpop.permute.xlu0 %4306
      %4310 = vset.pattern.permute.xlu0 0
      %4311 = vperm.xlu0 %4310, %v4285
      %v4312 = vpop.permute.xlu0 %4311
      %4315 = vset.pattern.permute.xlu0 0
      %4316 = vperm.xlu0 %4315, %v4286
      %v4317 = vpop.permute.xlu0 %4316
      %4320 = vset.pattern.permute.xlu0 0
      %4321 = vperm.xlu0 %4320, %v4287
      %v4322 = vpop.permute.xlu0 %4321
      %v4324 = vmul.f32 %v4307, %v4288
      %v4325 = vmul.f32 %v4307, %v4289
      %v4326 = vmul.f32 %v4307, %v4290
      %v4327 = vmul.f32 %v4307, %v4291
      %v4328 = vmul.f32 %v4312, %v4292
      %v4329 = vmul.f32 %v4312, %v4293
      %v4330 = vmul.f32 %v4312, %v4294
      %v4331 = vmul.f32 %v4312, %v4295
      %v4332 = vmul.f32 %v4317, %v4296
      %v4333 = vmul.f32 %v4317, %v4297
      %v4334 = vmul.f32 %v4317, %v4298
      %v4335 = vmul.f32 %v4317, %v4299
      %v4336 = vmul.f32 %v4322, %v4300
      %v4337 = vmul.f32 %v4322, %v4301
      %v4338 = vmul.f32 %v4322, %v4302
      %v4339 = vmul.f32 %v4322, %v4303
      %v4340 = vadd.f32 %v4324, 0.0
      %v4341 = vadd.f32 %v4325, 0.0
      %v4342 = vadd.f32 %v4326, 0.0
      %v4343 = vadd.f32 %v4327, 0.0
      %v4344 = vadd.f32 %v4328, 0.0
      %v4345 = vadd.f32 %v4329, 0.0
      %v4346 = vadd.f32 %v4330, 0.0
      %v4347 = vadd.f32 %v4331, 0.0
      %v4348 = vadd.f32 %v4332, 0.0
      %v4349 = vadd.f32 %v4333, 0.0
      %v4350 = vadd.f32 %v4334, 0.0
      %v4351 = vadd.f32 %v4335, 0.0
      %v4352 = vadd.f32 %v4336, 0.0
      %v4353 = vadd.f32 %v4337, 0.0
      %v4354 = vadd.f32 %v4338, 0.0
      %v4355 = vadd.f32 %v4339, 0.0
      %4356 = vset.pattern.permute.xlu0 1
      %4357 = vperm.xlu0 %4356, %v4284
      %v4358 = vpop.permute.xlu0 %4357
      %4360 = vset.pattern.permute.xlu0 1
      %4361 = vperm.xlu0 %4360, %v4285
      %v4362 = vpop.permute.xlu0 %4361
      %4364 = vset.pattern.permute.xlu0 1
      %4365 = vperm.xlu0 %4364, %v4286
      %v4366 = vpop.permute.xlu0 %4365
      %4368 = vset.pattern.permute.xlu0 1
      %4369 = vperm.xlu0 %4368, %v4287
      %v4370 = vpop.permute.xlu0 %4369
      %v4372 = vmul.f32 %v4358, %v4288
      %v4373 = vmul.f32 %v4358, %v4289
      %v4374 = vmul.f32 %v4358, %v4290
      %v4375 = vmul.f32 %v4358, %v4291
      %v4376 = vmul.f32 %v4362, %v4292
      %v4377 = vmul.f32 %v4362, %v4293
      %v4378 = vmul.f32 %v4362, %v4294
      %v4379 = vmul.f32 %v4362, %v4295
      %v4380 = vmul.f32 %v4366, %v4296
      %v4381 = vmul.f32 %v4366, %v4297
      %v4382 = vmul.f32 %v4366, %v4298
      %v4383 = vmul.f32 %v4366, %v4299
      %v4384 = vmul.f32 %v4370, %v4300
      %v4385 = vmul.f32 %v4370, %v4301
      %v4386 = vmul.f32 %v4370, %v4302
      %v4387 = vmul.f32 %v4370, %v4303
      %4404 = vrot.lane.b32.xlu0 %v4372, 127
      %v4405 = vpop.permute.xlu0 %4404
      %4406 = vrot.lane.b32.xlu0 %v4373, 127
      %v4407 = vpop.permute.xlu0 %4406
      %4408 = vrot.lane.b32.xlu0 %v4374, 127
      %v4409 = vpop.permute.xlu0 %4408
      %4410 = vrot.lane.b32.xlu0 %v4375, 127
      %v4411 = vpop.permute.xlu0 %4410
      %4412 = vrot.lane.b32.xlu0 %v4376, 127
      %v4413 = vpop.permute.xlu0 %4412
      %4414 = vrot.lane.b32.xlu0 %v4377, 127
      %v4415 = vpop.permute.xlu0 %4414
      %4416 = vrot.lane.b32.xlu0 %v4378, 127
      %v4417 = vpop.permute.xlu0 %4416
      %4418 = vrot.lane.b32.xlu0 %v4379, 127
      %v4419 = vpop.permute.xlu0 %4418
      %4420 = vrot.lane.b32.xlu0 %v4380, 127
      %v4421 = vpop.permute.xlu0 %4420
      %4422 = vrot.lane.b32.xlu0 %v4381, 127
      %v4423 = vpop.permute.xlu0 %4422
      %4424 = vrot.lane.b32.xlu0 %v4382, 127
      %v4425 = vpop.permute.xlu0 %4424
      %4426 = vrot.lane.b32.xlu0 %v4383, 127
      %v4427 = vpop.permute.xlu0 %4426
      %4428 = vrot.lane.b32.xlu0 %v4384, 127
      %v4429 = vpop.permute.xlu0 %4428
      %4430 = vrot.lane.b32.xlu0 %v4385, 127
      %v4431 = vpop.permute.xlu0 %4430
      %4432 = vrot.lane.b32.xlu0 %v4386, 127
      %v4433 = vpop.permute.xlu0 %4432
      %4434 = vrot.lane.b32.xlu0 %v4387, 127
      %v4435 = vpop.permute.xlu0 %4434
      %v4436 = vsel %vm611, %v4405, %v4407
      %v4437 = vsel %vm611, %v4407, %v4409
      %v4438 = vsel %vm611, %v4409, %v4411
      %v4439 = vsel %vm611, %v4413, %v4415
      %v4440 = vsel %vm611, %v4415, %v4417
      %v4441 = vsel %vm611, %v4417, %v4419
      %v4442 = vsel %vm611, %v4421, %v4423
      %v4443 = vsel %vm611, %v4423, %v4425
      %v4444 = vsel %vm611, %v4425, %v4427
      %v4445 = vsel %vm611, %v4429, %v4431
      %v4446 = vsel %vm611, %v4431, %v4433
      %v4447 = vsel %vm611, %v4433, %v4435
      %v4464 = vadd.f32 %v4340, %v4436
      %v4465 = vadd.f32 %v4341, %v4437
      %v4466 = vadd.f32 %v4342, %v4438
      %v4467 = vadd.f32 %v4343, %v4411
      %v4468 = vadd.f32 %v4344, %v4439
      %v4469 = vadd.f32 %v4345, %v4440
      %v4470 = vadd.f32 %v4346, %v4441
      %v4471 = vadd.f32 %v4347, %v4419
      %v4472 = vadd.f32 %v4348, %v4442
      %v4473 = vadd.f32 %v4349, %v4443
      %v4474 = vadd.f32 %v4350, %v4444
      %v4475 = vadd.f32 %v4351, %v4427
      %v4476 = vadd.f32 %v4352, %v4445
      %v4477 = vadd.f32 %v4353, %v4446
      %v4478 = vadd.f32 %v4354, %v4447
      %v4479 = vadd.f32 %v4355, %v4435
      %4480 = vset.pattern.permute.xlu0 2
      %4481 = vperm.xlu0 %4480, %v4284
      %v4482 = vpop.permute.xlu0 %4481
      %4484 = vset.pattern.permute.xlu0 2
      %4485 = vperm.xlu0 %4484, %v4285
      %v4486 = vpop.permute.xlu0 %4485
      %4488 = vset.pattern.permute.xlu0 2
      %4489 = vperm.xlu0 %4488, %v4286
      %v4490 = vpop.permute.xlu0 %4489
      %4492 = vset.pattern.permute.xlu0 2
      %4493 = vperm.xlu0 %4492, %v4287
      %v4494 = vpop.permute.xlu0 %4493
      %v4496 = vmul.f32 %v4482, %v4288
      %v4497 = vmul.f32 %v4482, %v4289
      %v4498 = vmul.f32 %v4482, %v4290
      %v4499 = vmul.f32 %v4482, %v4291
      %v4500 = vmul.f32 %v4486, %v4292
      %v4501 = vmul.f32 %v4486, %v4293
      %v4502 = vmul.f32 %v4486, %v4294
      %v4503 = vmul.f32 %v4486, %v4295
      %v4504 = vmul.f32 %v4490, %v4296
      %v4505 = vmul.f32 %v4490, %v4297
      %v4506 = vmul.f32 %v4490, %v4298
      %v4507 = vmul.f32 %v4490, %v4299
      %v4508 = vmul.f32 %v4494, %v4300
      %v4509 = vmul.f32 %v4494, %v4301
      %v4510 = vmul.f32 %v4494, %v4302
      %v4511 = vmul.f32 %v4494, %v4303
      %4528 = vrot.lane.b32.xlu0 %v4496, 126
      %v4529 = vpop.permute.xlu0 %4528
      %4530 = vrot.lane.b32.xlu0 %v4497, 126
      %v4531 = vpop.permute.xlu0 %4530
      %4532 = vrot.lane.b32.xlu0 %v4498, 126
      %v4533 = vpop.permute.xlu0 %4532
      %4534 = vrot.lane.b32.xlu0 %v4499, 126
      %v4535 = vpop.permute.xlu0 %4534
      %4536 = vrot.lane.b32.xlu0 %v4500, 126
      %v4537 = vpop.permute.xlu0 %4536
      %4538 = vrot.lane.b32.xlu0 %v4501, 126
      %v4539 = vpop.permute.xlu0 %4538
      %4540 = vrot.lane.b32.xlu0 %v4502, 126
      %v4541 = vpop.permute.xlu0 %4540
      %4542 = vrot.lane.b32.xlu0 %v4503, 126
      %v4543 = vpop.permute.xlu0 %4542
      %4544 = vrot.lane.b32.xlu0 %v4504, 126
      %v4545 = vpop.permute.xlu0 %4544
      %4546 = vrot.lane.b32.xlu0 %v4505, 126
      %v4547 = vpop.permute.xlu0 %4546
      %4548 = vrot.lane.b32.xlu0 %v4506, 126
      %v4549 = vpop.permute.xlu0 %4548
      %4550 = vrot.lane.b32.xlu0 %v4507, 126
      %v4551 = vpop.permute.xlu0 %4550
      %4552 = vrot.lane.b32.xlu0 %v4508, 126
      %v4553 = vpop.permute.xlu0 %4552
      %4554 = vrot.lane.b32.xlu0 %v4509, 126
      %v4555 = vpop.permute.xlu0 %4554
      %4556 = vrot.lane.b32.xlu0 %v4510, 126
      %v4557 = vpop.permute.xlu0 %4556
      %4558 = vrot.lane.b32.xlu0 %v4511, 126
      %v4559 = vpop.permute.xlu0 %4558
      %v4560 = vsel %vm844, %v4529, %v4531
      %v4561 = vsel %vm844, %v4531, %v4533
      %v4562 = vsel %vm844, %v4533, %v4535
      %v4563 = vsel %vm844, %v4537, %v4539
      %v4564 = vsel %vm844, %v4539, %v4541
      %v4565 = vsel %vm844, %v4541, %v4543
      %v4566 = vsel %vm844, %v4545, %v4547
      %v4567 = vsel %vm844, %v4547, %v4549
      %v4568 = vsel %vm844, %v4549, %v4551
      %v4569 = vsel %vm844, %v4553, %v4555
      %v4570 = vsel %vm844, %v4555, %v4557
      %v4571 = vsel %vm844, %v4557, %v4559
      %v4588 = vadd.f32 %v4464, %v4560
      %v4589 = vadd.f32 %v4465, %v4561
      %v4590 = vadd.f32 %v4466, %v4562
      %v4591 = vadd.f32 %v4467, %v4535
      %v4592 = vadd.f32 %v4468, %v4563
      %v4593 = vadd.f32 %v4469, %v4564
      %v4594 = vadd.f32 %v4470, %v4565
      %v4595 = vadd.f32 %v4471, %v4543
      %v4596 = vadd.f32 %v4472, %v4566
      %v4597 = vadd.f32 %v4473, %v4567
      %v4598 = vadd.f32 %v4474, %v4568
      %v4599 = vadd.f32 %v4475, %v4551
      %v4600 = vadd.f32 %v4476, %v4569
      %v4601 = vadd.f32 %v4477, %v4570
      %v4602 = vadd.f32 %v4478, %v4571
      %v4603 = vadd.f32 %v4479, %v4559
      %4604 = vset.pattern.permute.xlu0 3
      %4605 = vperm.xlu0 %4604, %v4284
      %v4606 = vpop.permute.xlu0 %4605
      %4608 = vset.pattern.permute.xlu0 3
      %4609 = vperm.xlu0 %4608, %v4285
      %v4610 = vpop.permute.xlu0 %4609
      %4612 = vset.pattern.permute.xlu0 3
      %4613 = vperm.xlu0 %4612, %v4286
      %v4614 = vpop.permute.xlu0 %4613
      %4616 = vset.pattern.permute.xlu0 3
      %4617 = vperm.xlu0 %4616, %v4287
      %v4618 = vpop.permute.xlu0 %4617
      %v4620 = vmul.f32 %v4606, %v4288
      %v4621 = vmul.f32 %v4606, %v4289
      %v4622 = vmul.f32 %v4606, %v4290
      %v4623 = vmul.f32 %v4606, %v4291
      %v4624 = vmul.f32 %v4610, %v4292
      %v4625 = vmul.f32 %v4610, %v4293
      %v4626 = vmul.f32 %v4610, %v4294
      %v4627 = vmul.f32 %v4610, %v4295
      %v4628 = vmul.f32 %v4614, %v4296
      %v4629 = vmul.f32 %v4614, %v4297
      %v4630 = vmul.f32 %v4614, %v4298
      %v4631 = vmul.f32 %v4614, %v4299
      %v4632 = vmul.f32 %v4618, %v4300
      %v4633 = vmul.f32 %v4618, %v4301
      %v4634 = vmul.f32 %v4618, %v4302
      %v4635 = vmul.f32 %v4618, %v4303
      %4652 = vrot.lane.b32.xlu0 %v4620, 110
      %v4653 = vpop.permute.xlu0 %4652
      %4654 = vrot.lane.b32.xlu0 %v4621, 110
      %v4655 = vpop.permute.xlu0 %4654
      %4656 = vrot.lane.b32.xlu0 %v4622, 110
      %v4657 = vpop.permute.xlu0 %4656
      %4658 = vrot.lane.b32.xlu0 %v4623, 110
      %v4659 = vpop.permute.xlu0 %4658
      %4660 = vrot.lane.b32.xlu0 %v4624, 110
      %v4661 = vpop.permute.xlu0 %4660
      %4662 = vrot.lane.b32.xlu0 %v4625, 110
      %v4663 = vpop.permute.xlu0 %4662
      %4664 = vrot.lane.b32.xlu0 %v4626, 110
      %v4665 = vpop.permute.xlu0 %4664
      %4666 = vrot.lane.b32.xlu0 %v4627, 110
      %v4667 = vpop.permute.xlu0 %4666
      %4668 = vrot.lane.b32.xlu0 %v4628, 110
      %v4669 = vpop.permute.xlu0 %4668
      %4670 = vrot.lane.b32.xlu0 %v4629, 110
      %v4671 = vpop.permute.xlu0 %4670
      %4672 = vrot.lane.b32.xlu0 %v4630, 110
      %v4673 = vpop.permute.xlu0 %4672
      %4674 = vrot.lane.b32.xlu0 %v4631, 110
      %v4675 = vpop.permute.xlu0 %4674
      %4676 = vrot.lane.b32.xlu0 %v4632, 110
      %v4677 = vpop.permute.xlu0 %4676
      %4678 = vrot.lane.b32.xlu0 %v4633, 110
      %v4679 = vpop.permute.xlu0 %4678
      %4680 = vrot.lane.b32.xlu0 %v4634, 110
      %v4681 = vpop.permute.xlu0 %4680
      %4682 = vrot.lane.b32.xlu0 %v4635, 110
      %v4683 = vpop.permute.xlu0 %4682
      %v4684 = vsel %vm1077, %v4653, %v4655
      %v4685 = vsel %vm1077, %v4655, %v4657
      %v4686 = vsel %vm1077, %v4657, %v4659
      %v4687 = vsel %vm1077, %v4661, %v4663
      %v4688 = vsel %vm1077, %v4663, %v4665
      %v4689 = vsel %vm1077, %v4665, %v4667
      %v4690 = vsel %vm1077, %v4669, %v4671
      %v4691 = vsel %vm1077, %v4671, %v4673
      %v4692 = vsel %vm1077, %v4673, %v4675
      %v4693 = vsel %vm1077, %v4677, %v4679
      %v4694 = vsel %vm1077, %v4679, %v4681
      %v4695 = vsel %vm1077, %v4681, %v4683
      %v4712 = vadd.f32 %v4588, %v4684
      %v4713 = vadd.f32 %v4589, %v4685
      %v4714 = vadd.f32 %v4590, %v4686
      %v4715 = vadd.f32 %v4591, %v4659
      %v4716 = vadd.f32 %v4592, %v4687
      %v4717 = vadd.f32 %v4593, %v4688
      %v4718 = vadd.f32 %v4594, %v4689
      %v4719 = vadd.f32 %v4595, %v4667
      %v4720 = vadd.f32 %v4596, %v4690
      %v4721 = vadd.f32 %v4597, %v4691
      %v4722 = vadd.f32 %v4598, %v4692
      %v4723 = vadd.f32 %v4599, %v4675
      %v4724 = vadd.f32 %v4600, %v4693
      %v4725 = vadd.f32 %v4601, %v4694
      %v4726 = vadd.f32 %v4602, %v4695
      %v4727 = vadd.f32 %v4603, %v4683
      %4728 = vset.pattern.permute.xlu0 4
      %4729 = vperm.xlu0 %4728, %v4284
      %v4730 = vpop.permute.xlu0 %4729
      %4732 = vset.pattern.permute.xlu0 4
      %4733 = vperm.xlu0 %4732, %v4285
      %v4734 = vpop.permute.xlu0 %4733
      %4736 = vset.pattern.permute.xlu0 4
      %4737 = vperm.xlu0 %4736, %v4286
      %v4738 = vpop.permute.xlu0 %4737
      %4740 = vset.pattern.permute.xlu0 4
      %4741 = vperm.xlu0 %4740, %v4287
      %v4742 = vpop.permute.xlu0 %4741
      %v4744 = vmul.f32 %v4730, %v4289
      %v4745 = vmul.f32 %v4730, %v4290
      %v4746 = vmul.f32 %v4730, %v4291
      %v4747 = vmul.f32 %v4734, %v4293
      %v4748 = vmul.f32 %v4734, %v4294
      %v4749 = vmul.f32 %v4734, %v4295
      %v4750 = vmul.f32 %v4738, %v4297
      %v4751 = vmul.f32 %v4738, %v4298
      %v4752 = vmul.f32 %v4738, %v4299
      %v4753 = vmul.f32 %v4742, %v4301
      %v4754 = vmul.f32 %v4742, %v4302
      %v4755 = vmul.f32 %v4742, %v4303
      %4768 = vrot.lane.b32.xlu0 %v4744, 109
      %v4769 = vpop.permute.xlu0 %4768
      %4770 = vrot.lane.b32.xlu0 %v4745, 109
      %v4771 = vpop.permute.xlu0 %4770
      %4772 = vrot.lane.b32.xlu0 %v4746, 109
      %v4773 = vpop.permute.xlu0 %4772
      %4774 = vrot.lane.b32.xlu0 %v4747, 109
      %v4775 = vpop.permute.xlu0 %4774
      %4776 = vrot.lane.b32.xlu0 %v4748, 109
      %v4777 = vpop.permute.xlu0 %4776
      %4778 = vrot.lane.b32.xlu0 %v4749, 109
      %v4779 = vpop.permute.xlu0 %4778
      %4780 = vrot.lane.b32.xlu0 %v4750, 109
      %v4781 = vpop.permute.xlu0 %4780
      %4782 = vrot.lane.b32.xlu0 %v4751, 109
      %v4783 = vpop.permute.xlu0 %4782
      %4784 = vrot.lane.b32.xlu0 %v4752, 109
      %v4785 = vpop.permute.xlu0 %4784
      %4786 = vrot.lane.b32.xlu0 %v4753, 109
      %v4787 = vpop.permute.xlu0 %4786
      %4788 = vrot.lane.b32.xlu0 %v4754, 109
      %v4789 = vpop.permute.xlu0 %4788
      %4790 = vrot.lane.b32.xlu0 %v4755, 109
      %v4791 = vpop.permute.xlu0 %4790
      %v4792 = vsel %vm1310, %v4769, %v4771
      %v4793 = vsel %vm1310, %v4771, %v4773
      %v4794 = vsel %vm1310, %v4775, %v4777
      %v4795 = vsel %vm1310, %v4777, %v4779
      %v4796 = vsel %vm1310, %v4781, %v4783
      %v4797 = vsel %vm1310, %v4783, %v4785
      %v4798 = vsel %vm1310, %v4787, %v4789
      %v4799 = vsel %vm1310, %v4789, %v4791
      %v4816 = vadd.f32 %v4712, %v4769
      %v4817 = vadd.f32 %v4713, %v4792
      %v4818 = vadd.f32 %v4714, %v4793
      %v4819 = vadd.f32 %v4715, %v4773
      %v4820 = vadd.f32 %v4716, %v4775
      %v4821 = vadd.f32 %v4717, %v4794
      %v4822 = vadd.f32 %v4718, %v4795
      %v4823 = vadd.f32 %v4719, %v4779
      %v4824 = vadd.f32 %v4720, %v4781
      %v4825 = vadd.f32 %v4721, %v4796
      %v4826 = vadd.f32 %v4722, %v4797
      %v4827 = vadd.f32 %v4723, %v4785
      %v4828 = vadd.f32 %v4724, %v4787
      %v4829 = vadd.f32 %v4725, %v4798
      %v4830 = vadd.f32 %v4726, %v4799
      %v4831 = vadd.f32 %v4727, %v4791
      %v4832 = vld [vmem:[#allocation3 + $0x8] sm:$0xff]
      %v4833 = vld [vmem:[#allocation3 + $0x10] sm:$0xff]
      %v4834 = vld [vmem:[#allocation3 + $0x18] sm:$0xff]
      %v4835 = vld [vmem:[#allocation3 + $0x20] sm:$0xff]
      %v4836 = vld [vmem:[#allocation3 + $0x30] sm:$0xff]
      %v4837 = vld [vmem:[#allocation3 + $0x38] sm:$0xff]
      %v4838 = vld [vmem:[#allocation3 + $0x40] sm:$0xff]
      %v4839 = vld [vmem:[#allocation3 + $0x48] sm:$0xff]
      %v4840 = vunpack.c.l.bf16 %v4832
      %v4841 = vunpack.c.l.bf16 %v4833
      %v4842 = vunpack.c.l.bf16 %v4834
      %v4843 = vunpack.c.l.bf16 %v4835
      %v4844 = vunpack.c.h.bf16 %v4832
      %v4845 = vunpack.c.h.bf16 %v4833
      %v4846 = vunpack.c.h.bf16 %v4834
      %v4847 = vunpack.c.h.bf16 %v4835
      %v4848 = vunpack.c.l.bf16 %v4836
      %v4849 = vunpack.c.l.bf16 %v4837
      %v4850 = vunpack.c.l.bf16 %v4838
      %v4851 = vunpack.c.l.bf16 %v4839
      %v4852 = vunpack.c.h.bf16 %v4836
      %v4853 = vunpack.c.h.bf16 %v4837
      %v4854 = vunpack.c.h.bf16 %v4838
      %v4855 = vunpack.c.h.bf16 %v4839
      %4856 = vset.pattern.permute.xlu0 5
      %4857 = vperm.xlu0 %4856, %v4284
      %v4858 = vpop.permute.xlu0 %4857
      %4860 = vset.pattern.permute.xlu0 5
      %4861 = vperm.xlu0 %4860, %v4285
      %v4862 = vpop.permute.xlu0 %4861
      %4864 = vset.pattern.permute.xlu0 5
      %4865 = vperm.xlu0 %4864, %v4286
      %v4866 = vpop.permute.xlu0 %4865
      %4868 = vset.pattern.permute.xlu0 5
      %4869 = vperm.xlu0 %4868, %v4287
      %v4870 = vpop.permute.xlu0 %4869
      %v4872 = vmul.f32 %v4858, %v4840
      %v4873 = vmul.f32 %v4858, %v4841
      %v4874 = vmul.f32 %v4858, %v4842
      %v4875 = vmul.f32 %v4858, %v4843
      %v4876 = vmul.f32 %v4862, %v4844
      %v4877 = vmul.f32 %v4862, %v4845
      %v4878 = vmul.f32 %v4862, %v4846
      %v4879 = vmul.f32 %v4862, %v4847
      %v4880 = vmul.f32 %v4866, %v4848
      %v4881 = vmul.f32 %v4866, %v4849
      %v4882 = vmul.f32 %v4866, %v4850
      %v4883 = vmul.f32 %v4866, %v4851
      %v4884 = vmul.f32 %v4870, %v4852
      %v4885 = vmul.f32 %v4870, %v4853
      %v4886 = vmul.f32 %v4870, %v4854
      %v4887 = vmul.f32 %v4870, %v4855
      %4904 = vrot.lane.b32.xlu0 %v4872, 108
      %v4905 = vpop.permute.xlu0 %4904
      %4906 = vrot.lane.b32.xlu0 %v4873, 108
      %v4907 = vpop.permute.xlu0 %4906
      %4908 = vrot.lane.b32.xlu0 %v4874, 108
      %v4909 = vpop.permute.xlu0 %4908
      %4910 = vrot.lane.b32.xlu0 %v4875, 108
      %v4911 = vpop.permute.xlu0 %4910
      %4912 = vrot.lane.b32.xlu0 %v4876, 108
      %v4913 = vpop.permute.xlu0 %4912
      %4914 = vrot.lane.b32.xlu0 %v4877, 108
      %v4915 = vpop.permute.xlu0 %4914
      %4916 = vrot.lane.b32.xlu0 %v4878, 108
      %v4917 = vpop.permute.xlu0 %4916
      %4918 = vrot.lane.b32.xlu0 %v4879, 108
      %v4919 = vpop.permute.xlu0 %4918
      %4920 = vrot.lane.b32.xlu0 %v4880, 108
      %v4921 = vpop.permute.xlu0 %4920
      %4922 = vrot.lane.b32.xlu0 %v4881, 108
      %v4923 = vpop.permute.xlu0 %4922
      %4924 = vrot.lane.b32.xlu0 %v4882, 108
      %v4925 = vpop.permute.xlu0 %4924
      %4926 = vrot.lane.b32.xlu0 %v4883, 108
      %v4927 = vpop.permute.xlu0 %4926
      %4928 = vrot.lane.b32.xlu0 %v4884, 108
      %v4929 = vpop.permute.xlu0 %4928
      %4930 = vrot.lane.b32.xlu0 %v4885, 108
      %v4931 = vpop.permute.xlu0 %4930
      %4932 = vrot.lane.b32.xlu0 %v4886, 108
      %v4933 = vpop.permute.xlu0 %4932
      %4934 = vrot.lane.b32.xlu0 %v4887, 108
      %v4935 = vpop.permute.xlu0 %4934
      %v4936 = vsel %vm1543, %v4905, %v4907
      %v4937 = vsel %vm1543, %v4907, %v4909
      %v4938 = vsel %vm1543, %v4909, %v4911
      %v4939 = vsel %vm1543, %v4913, %v4915
      %v4940 = vsel %vm1543, %v4915, %v4917
      %v4941 = vsel %vm1543, %v4917, %v4919
      %v4942 = vsel %vm1543, %v4921, %v4923
      %v4943 = vsel %vm1543, %v4923, %v4925
      %v4944 = vsel %vm1543, %v4925, %v4927
      %v4945 = vsel %vm1543, %v4929, %v4931
      %v4946 = vsel %vm1543, %v4931, %v4933
      %v4947 = vsel %vm1543, %v4933, %v4935
      %v4964 = vadd.f32 %v4816, %v4905
      %v4965 = vadd.f32 %v4817, %v4936
      %v4966 = vadd.f32 %v4818, %v4937
      %v4967 = vadd.f32 %v4819, %v4938
      %v4968 = vadd.f32 %v4820, %v4913
      %v4969 = vadd.f32 %v4821, %v4939
      %v4970 = vadd.f32 %v4822, %v4940
      %v4971 = vadd.f32 %v4823, %v4941
      %v4972 = vadd.f32 %v4824, %v4921
      %v4973 = vadd.f32 %v4825, %v4942
      %v4974 = vadd.f32 %v4826, %v4943
      %v4975 = vadd.f32 %v4827, %v4944
      %v4976 = vadd.f32 %v4828, %v4929
      %v4977 = vadd.f32 %v4829, %v4945
      %v4978 = vadd.f32 %v4830, %v4946
      %v4979 = vadd.f32 %v4831, %v4947
      %4980 = vset.pattern.permute.xlu0 6
      %4981 = vperm.xlu0 %4980, %v4284
      %v4982 = vpop.permute.xlu0 %4981
      %4984 = vset.pattern.permute.xlu0 6
      %4985 = vperm.xlu0 %4984, %v4285
      %v4986 = vpop.permute.xlu0 %4985
      %4988 = vset.pattern.permute.xlu0 6
      %4989 = vperm.xlu0 %4988, %v4286
      %v4990 = vpop.permute.xlu0 %4989
      %4992 = vset.pattern.permute.xlu0 6
      %4993 = vperm.xlu0 %4992, %v4287
      %v4994 = vpop.permute.xlu0 %4993
      %v4996 = vmul.f32 %v4982, %v4840
      %v4997 = vmul.f32 %v4982, %v4841
      %v4998 = vmul.f32 %v4982, %v4842
      %v4999 = vmul.f32 %v4982, %v4843
      %v5000 = vmul.f32 %v4986, %v4844
      %v5001 = vmul.f32 %v4986, %v4845
      %v5002 = vmul.f32 %v4986, %v4846
      %v5003 = vmul.f32 %v4986, %v4847
      %v5004 = vmul.f32 %v4990, %v4848
      %v5005 = vmul.f32 %v4990, %v4849
      %v5006 = vmul.f32 %v4990, %v4850
      %v5007 = vmul.f32 %v4990, %v4851
      %v5008 = vmul.f32 %v4994, %v4852
      %v5009 = vmul.f32 %v4994, %v4853
      %v5010 = vmul.f32 %v4994, %v4854
      %v5011 = vmul.f32 %v4994, %v4855
      %5028 = vrot.lane.b32.xlu0 %v4996, 92
      %v5029 = vpop.permute.xlu0 %5028
      %5030 = vrot.lane.b32.xlu0 %v4997, 92
      %v5031 = vpop.permute.xlu0 %5030
      %5032 = vrot.lane.b32.xlu0 %v4998, 92
      %v5033 = vpop.permute.xlu0 %5032
      %5034 = vrot.lane.b32.xlu0 %v4999, 92
      %v5035 = vpop.permute.xlu0 %5034
      %5036 = vrot.lane.b32.xlu0 %v5000, 92
      %v5037 = vpop.permute.xlu0 %5036
      %5038 = vrot.lane.b32.xlu0 %v5001, 92
      %v5039 = vpop.permute.xlu0 %5038
      %5040 = vrot.lane.b32.xlu0 %v5002, 92
      %v5041 = vpop.permute.xlu0 %5040
      %5042 = vrot.lane.b32.xlu0 %v5003, 92
      %v5043 = vpop.permute.xlu0 %5042
      %5044 = vrot.lane.b32.xlu0 %v5004, 92
      %v5045 = vpop.permute.xlu0 %5044
      %5046 = vrot.lane.b32.xlu0 %v5005, 92
      %v5047 = vpop.permute.xlu0 %5046
      %5048 = vrot.lane.b32.xlu0 %v5006, 92
      %v5049 = vpop.permute.xlu0 %5048
      %5050 = vrot.lane.b32.xlu0 %v5007, 92
      %v5051 = vpop.permute.xlu0 %5050
      %5052 = vrot.lane.b32.xlu0 %v5008, 92
      %v5053 = vpop.permute.xlu0 %5052
      %5054 = vrot.lane.b32.xlu0 %v5009, 92
      %v5055 = vpop.permute.xlu0 %5054
      %5056 = vrot.lane.b32.xlu0 %v5010, 92
      %v5057 = vpop.permute.xlu0 %5056
      %5058 = vrot.lane.b32.xlu0 %v5011, 92
      %v5059 = vpop.permute.xlu0 %5058
      %v5060 = vsel %vm1776, %v5029, %v5031
      %v5061 = vsel %vm1776, %v5031, %v5033
      %v5062 = vsel %vm1776, %v5033, %v5035
      %v5063 = vsel %vm1776, %v5037, %v5039
      %v5064 = vsel %vm1776, %v5039, %v5041
      %v5065 = vsel %vm1776, %v5041, %v5043
      %v5066 = vsel %vm1776, %v5045, %v5047
      %v5067 = vsel %vm1776, %v5047, %v5049
      %v5068 = vsel %vm1776, %v5049, %v5051
      %v5069 = vsel %vm1776, %v5053, %v5055
      %v5070 = vsel %vm1776, %v5055, %v5057
      %v5071 = vsel %vm1776, %v5057, %v5059
      %v5088 = vadd.f32 %v4964, %v5029
      %v5089 = vadd.f32 %v4965, %v5060
      %v5090 = vadd.f32 %v4966, %v5061
      %v5091 = vadd.f32 %v4967, %v5062
      %v5092 = vadd.f32 %v4968, %v5037
      %v5093 = vadd.f32 %v4969, %v5063
      %v5094 = vadd.f32 %v4970, %v5064
      %v5095 = vadd.f32 %v4971, %v5065
      %v5096 = vadd.f32 %v4972, %v5045
      %v5097 = vadd.f32 %v4973, %v5066
      %v5098 = vadd.f32 %v4974, %v5067
      %v5099 = vadd.f32 %v4975, %v5068
      %v5100 = vadd.f32 %v4976, %v5053
      %v5101 = vadd.f32 %v4977, %v5069
      %v5102 = vadd.f32 %v4978, %v5070
      %v5103 = vadd.f32 %v4979, %v5071
      %5104 = vset.pattern.permute.xlu0 7
      %5105 = vperm.xlu0 %5104, %v4284
      %v5106 = vpop.permute.xlu0 %5105
      %5108 = vset.pattern.permute.xlu0 7
      %5109 = vperm.xlu0 %5108, %v4285
      %v5110 = vpop.permute.xlu0 %5109
      %5112 = vset.pattern.permute.xlu0 7
      %5113 = vperm.xlu0 %5112, %v4286
      %v5114 = vpop.permute.xlu0 %5113
      %5116 = vset.pattern.permute.xlu0 7
      %5117 = vperm.xlu0 %5116, %v4287
      %v5118 = vpop.permute.xlu0 %5117
      %v5120 = vmul.f32 %v5106, %v4840
      %v5121 = vmul.f32 %v5106, %v4841
      %v5122 = vmul.f32 %v5106, %v4842
      %v5123 = vmul.f32 %v5106, %v4843
      %v5124 = vmul.f32 %v5110, %v4844
      %v5125 = vmul.f32 %v5110, %v4845
      %v5126 = vmul.f32 %v5110, %v4846
      %v5127 = vmul.f32 %v5110, %v4847
      %v5128 = vmul.f32 %v5114, %v4848
      %v5129 = vmul.f32 %v5114, %v4849
      %v5130 = vmul.f32 %v5114, %v4850
      %v5131 = vmul.f32 %v5114, %v4851
      %v5132 = vmul.f32 %v5118, %v4852
      %v5133 = vmul.f32 %v5118, %v4853
      %v5134 = vmul.f32 %v5118, %v4854
      %v5135 = vmul.f32 %v5118, %v4855
      %5152 = vrot.lane.b32.xlu0 %v5120, 91
      %v5153 = vpop.permute.xlu0 %5152
      %5154 = vrot.lane.b32.xlu0 %v5121, 91
      %v5155 = vpop.permute.xlu0 %5154
      %5156 = vrot.lane.b32.xlu0 %v5122, 91
      %v5157 = vpop.permute.xlu0 %5156
      %5158 = vrot.lane.b32.xlu0 %v5123, 91
      %v5159 = vpop.permute.xlu0 %5158
      %5160 = vrot.lane.b32.xlu0 %v5124, 91
      %v5161 = vpop.permute.xlu0 %5160
      %5162 = vrot.lane.b32.xlu0 %v5125, 91
      %v5163 = vpop.permute.xlu0 %5162
      %5164 = vrot.lane.b32.xlu0 %v5126, 91
      %v5165 = vpop.permute.xlu0 %5164
      %5166 = vrot.lane.b32.xlu0 %v5127, 91
      %v5167 = vpop.permute.xlu0 %5166
      %5168 = vrot.lane.b32.xlu0 %v5128, 91
      %v5169 = vpop.permute.xlu0 %5168
      %5170 = vrot.lane.b32.xlu0 %v5129, 91
      %v5171 = vpop.permute.xlu0 %5170
      %5172 = vrot.lane.b32.xlu0 %v5130, 91
      %v5173 = vpop.permute.xlu0 %5172
      %5174 = vrot.lane.b32.xlu0 %v5131, 91
      %v5175 = vpop.permute.xlu0 %5174
      %5176 = vrot.lane.b32.xlu0 %v5132, 91
      %v5177 = vpop.permute.xlu0 %5176
      %5178 = vrot.lane.b32.xlu0 %v5133, 91
      %v5179 = vpop.permute.xlu0 %5178
      %5180 = vrot.lane.b32.xlu0 %v5134, 91
      %v5181 = vpop.permute.xlu0 %5180
      %5182 = vrot.lane.b32.xlu0 %v5135, 91
      %v5183 = vpop.permute.xlu0 %5182
      %v5184 = vsel %vm2009, %v5153, %v5155
      %v5185 = vsel %vm2009, %v5155, %v5157
      %v5186 = vsel %vm2009, %v5157, %v5159
      %v5187 = vsel %vm2009, %v5161, %v5163
      %v5188 = vsel %vm2009, %v5163, %v5165
      %v5189 = vsel %vm2009, %v5165, %v5167
      %v5190 = vsel %vm2009, %v5169, %v5171
      %v5191 = vsel %vm2009, %v5171, %v5173
      %v5192 = vsel %vm2009, %v5173, %v5175
      %v5193 = vsel %vm2009, %v5177, %v5179
      %v5194 = vsel %vm2009, %v5179, %v5181
      %v5195 = vsel %vm2009, %v5181, %v5183
      %v5212 = vadd.f32 %v5088, %v5153
      %v5213 = vadd.f32 %v5089, %v5184
      %v5214 = vadd.f32 %v5090, %v5185
      %v5215 = vadd.f32 %v5091, %v5186
      %v5216 = vadd.f32 %v5092, %v5161
      %v5217 = vadd.f32 %v5093, %v5187
      %v5218 = vadd.f32 %v5094, %v5188
      %v5219 = vadd.f32 %v5095, %v5189
      %v5220 = vadd.f32 %v5096, %v5169
      %v5221 = vadd.f32 %v5097, %v5190
      %v5222 = vadd.f32 %v5098, %v5191
      %v5223 = vadd.f32 %v5099, %v5192
      %v5224 = vadd.f32 %v5100, %v5177
      %v5225 = vadd.f32 %v5101, %v5193
      %v5226 = vadd.f32 %v5102, %v5194
      %v5227 = vadd.f32 %v5103, %v5195
      %5228 = vset.pattern.permute.xlu0 8
      %5229 = vperm.xlu0 %5228, %v4284
      %v5230 = vpop.permute.xlu0 %5229
      %5232 = vset.pattern.permute.xlu0 8
      %5233 = vperm.xlu0 %5232, %v4285
      %v5234 = vpop.permute.xlu0 %5233
      %5236 = vset.pattern.permute.xlu0 8
      %5237 = vperm.xlu0 %5236, %v4286
      %v5238 = vpop.permute.xlu0 %5237
      %5240 = vset.pattern.permute.xlu0 8
      %5241 = vperm.xlu0 %5240, %v4287
      %v5242 = vpop.permute.xlu0 %5241
      %v5244 = vmul.f32 %v5230, %v4840
      %v5245 = vmul.f32 %v5230, %v4841
      %v5246 = vmul.f32 %v5230, %v4842
      %v5247 = vmul.f32 %v5230, %v4843
      %v5248 = vmul.f32 %v5234, %v4844
      %v5249 = vmul.f32 %v5234, %v4845
      %v5250 = vmul.f32 %v5234, %v4846
      %v5251 = vmul.f32 %v5234, %v4847
      %v5252 = vmul.f32 %v5238, %v4848
      %v5253 = vmul.f32 %v5238, %v4849
      %v5254 = vmul.f32 %v5238, %v4850
      %v5255 = vmul.f32 %v5238, %v4851
      %v5256 = vmul.f32 %v5242, %v4852
      %v5257 = vmul.f32 %v5242, %v4853
      %v5258 = vmul.f32 %v5242, %v4854
      %v5259 = vmul.f32 %v5242, %v4855
      %5276 = vrot.lane.b32.xlu0 %v5244, 90
      %v5277 = vpop.permute.xlu0 %5276
      %5278 = vrot.lane.b32.xlu0 %v5245, 90
      %v5279 = vpop.permute.xlu0 %5278
      %5280 = vrot.lane.b32.xlu0 %v5246, 90
      %v5281 = vpop.permute.xlu0 %5280
      %5282 = vrot.lane.b32.xlu0 %v5247, 90
      %v5283 = vpop.permute.xlu0 %5282
      %5284 = vrot.lane.b32.xlu0 %v5248, 90
      %v5285 = vpop.permute.xlu0 %5284
      %5286 = vrot.lane.b32.xlu0 %v5249, 90
      %v5287 = vpop.permute.xlu0 %5286
      %5288 = vrot.lane.b32.xlu0 %v5250, 90
      %v5289 = vpop.permute.xlu0 %5288
      %5290 = vrot.lane.b32.xlu0 %v5251, 90
      %v5291 = vpop.permute.xlu0 %5290
      %5292 = vrot.lane.b32.xlu0 %v5252, 90
      %v5293 = vpop.permute.xlu0 %5292
      %5294 = vrot.lane.b32.xlu0 %v5253, 90
      %v5295 = vpop.permute.xlu0 %5294
      %5296 = vrot.lane.b32.xlu0 %v5254, 90
      %v5297 = vpop.permute.xlu0 %5296
      %5298 = vrot.lane.b32.xlu0 %v5255, 90
      %v5299 = vpop.permute.xlu0 %5298
      %5300 = vrot.lane.b32.xlu0 %v5256, 90
      %v5301 = vpop.permute.xlu0 %5300
      %5302 = vrot.lane.b32.xlu0 %v5257, 90
      %v5303 = vpop.permute.xlu0 %5302
      %5304 = vrot.lane.b32.xlu0 %v5258, 90
      %v5305 = vpop.permute.xlu0 %5304
      %5306 = vrot.lane.b32.xlu0 %v5259, 90
      %v5307 = vpop.permute.xlu0 %5306
      %v5308 = vsel %vm2242, %v5277, %v5279
      %v5309 = vsel %vm2242, %v5279, %v5281
      %v5310 = vsel %vm2242, %v5281, %v5283
      %v5311 = vsel %vm2242, %v5285, %v5287
      %v5312 = vsel %vm2242, %v5287, %v5289
      %v5313 = vsel %vm2242, %v5289, %v5291
      %v5314 = vsel %vm2242, %v5293, %v5295
      %v5315 = vsel %vm2242, %v5295, %v5297
      %v5316 = vsel %vm2242, %v5297, %v5299
      %v5317 = vsel %vm2242, %v5301, %v5303
      %v5318 = vsel %vm2242, %v5303, %v5305
      %v5319 = vsel %vm2242, %v5305, %v5307
      %v5336 = vadd.f32 %v5212, %v5277
      %v5337 = vadd.f32 %v5213, %v5308
      %v5338 = vadd.f32 %v5214, %v5309
      %v5339 = vadd.f32 %v5215, %v5310
      %v5340 = vadd.f32 %v5216, %v5285
      %v5341 = vadd.f32 %v5217, %v5311
      %v5342 = vadd.f32 %v5218, %v5312
      %v5343 = vadd.f32 %v5219, %v5313
      %v5344 = vadd.f32 %v5220, %v5293
      %v5345 = vadd.f32 %v5221, %v5314
      %v5346 = vadd.f32 %v5222, %v5315
      %v5347 = vadd.f32 %v5223, %v5316
      %v5348 = vadd.f32 %v5224, %v5301
      %v5349 = vadd.f32 %v5225, %v5317
      %v5350 = vadd.f32 %v5226, %v5318
      %v5351 = vadd.f32 %v5227, %v5319
      %vm5352 = vcmask 1048424
      %v5353 = vsel %vm5352, %v5336, 0.0
      %v5354 = vsel %vm5352, %v5340, 0.0
      %v5355 = vadd.f32 %v5353, %v5354
      %v5356 = vsel %vm5352, %v5344, 0.0
      %v5357 = vadd.f32 %v5355, %v5356
      %v5358 = vsel %vm5352, %v5348, 0.0
      %v5359 = vadd.f32 %v5357, %v5358
      %v5360 = vrot.slane %v5359, 4
      %v5361 = vadd.f32 %v5359, %v5360
      %v5362 = vrot.slane %v5361, 2
      %v5363 = vadd.f32 %v5361, %v5362
      %v5364 = vrot.slane %v5363, 1
      %v5365 = vadd.f32 %v5363, %v5364
      %v5366 = vadd.f32 %v5337, %v5341
      %v5367 = vadd.f32 %v5366, %v5345
      %v5368 = vadd.f32 %v5367, %v5349
      %v5369 = vrot.slane %v5368, 4
      %v5370 = vadd.f32 %v5368, %v5369
      %v5371 = vrot.slane %v5370, 2
      %v5372 = vadd.f32 %v5370, %v5371
      %v5373 = vrot.slane %v5372, 1
      %v5374 = vadd.f32 %v5372, %v5373
      %v5375 = vadd.f32 %v5338, %v5342
      %v5376 = vadd.f32 %v5375, %v5346
      %v5377 = vadd.f32 %v5376, %v5350
      %v5378 = vrot.slane %v5377, 4
      %v5379 = vadd.f32 %v5377, %v5378
      %v5380 = vrot.slane %v5379, 2
      %v5381 = vadd.f32 %v5379, %v5380
      %v5382 = vrot.slane %v5381, 1
      %v5383 = vadd.f32 %v5381, %v5382
      %v5384 = vsel %vm1310, %v5339, 0.0
      %v5385 = vsel %vm1310, %v5343, 0.0
      %v5386 = vadd.f32 %v5384, %v5385
      %v5387 = vsel %vm1310, %v5347, 0.0
      %v5388 = vadd.f32 %v5386, %v5387
      %v5389 = vsel %vm1310, %v5351, 0.0
      %v5390 = vadd.f32 %v5388, %v5389
      %v5391 = vrot.slane %v5390, 4
      %v5392 = vadd.f32 %v5390, %v5391
      %v5393 = vrot.slane %v5392, 2
      %v5394 = vadd.f32 %v5392, %v5393
      %v5395 = vrot.slane %v5394, 1
      %v5396 = vadd.f32 %v5394, %v5395
      %v5397 = vld [vmem:[#allocation4] sm:$0x1]
      %5399 = vset.pattern.permute.xlu0 0
      %5400 = vperm.xlu0 %5399, %v5397
      %v5401 = vpop.permute.xlu0 %5400
      %v5403 = vlaneseq
      %v5404 = vshrl.u32 %v5403, 7
      %v5405 = vsub.s32 0, %v5404
      %v5406 = vrot.slane %v5401, %v5405
      %v5407 = vadd.f32 %v5365, %v5406
      %v5408 = vadd.f32 %v5374, %v5406
      %v5409 = vadd.f32 %v5383, %v5406
      %v5410 = vadd.f32 %v5396, %v5406
      %v5411 = vmax.f32 %v5407, 0.0
      %v5412 = vmax.f32 %v5408, 0.0
      %v5413 = vmax.f32 %v5409, 0.0
      %v5414 = vmax.f32 %v5410, 0.0
      %v5419 = vcombine.low %v5411, %v5412
      %v5420 = vcombine.low %v5413, %v5414
      %v5422 = vunpack.c.l.s4 1966171168
      %v5423 = vunpack.c.0.s8 %v5422
      %v5424 = vlaneseq
      %v5425 = vshrl.u32 %v5424, 7
      %v5426 = vsub.s32 %v5423, %v5425
      %v5427 = vrot.slane %v5419, %v5426
      %v5429 = vunpack.c.l.s4 1966171168
      %v5430 = vunpack.c.0.s8 %v5429
      %v5431 = vlaneseq
      %v5432 = vshrl.u32 %v5431, 7
      %v5433 = vsub.s32 %v5430, %v5432
      %v5434 = vrot.slane %v5420, %v5433
      %v5435 = vcombine.low %v5427, %v5434
      %v5437 = vunpack.c.l.s4 1966171168
      %v5438 = vunpack.c.0.s8 %v5437
      %v5439 = vlaneseq
      %v5440 = vshrl.u32 %v5439, 7
      %v5441 = vsub.s32 %v5438, %v5440
      %v5442 = vrot.slane %v5435, %v5441
      %5443 = vrot.lane.b32.xlu0 %v5442, 19
      %v5444 = vpop.permute.xlu0 %5443
      %v5445 = vrot.slane %v5444, 1
      %vm5446 = vcmask 154624
      %v5447 = vsel %vm5446, %v5444, %v5445
      %v5449 = vlaneseq
      %vm5450 = vcmp.ge.s32.totalorder %v5449, 0
      %vm5451 = vcmp.lt.s32.totalorder %v5449, 384
      %vm5452 = vmand %vm5450, %vm5451
      %5453 = vst.msk [vmem:[%s302] sm:$0x7] %vm5452, %v5447
      %p5454 = scmp.lt.s32.totalorder %s21, 1
      %s5455 = scalar_select %p5454, %s21, 1
      %s5456 = smul.addr %s5455, 3
      %s5457 = scalar_lea.vmem %s8, %s5456
      // Predicated region
      $region53: #{srcnn_forward_pallas.1} parent=51 // pred_check
        %p5458 = pneg %p212
      $region54: #{srcnn_forward_pallas.1} parent=51 // pred_check_branch
        %5460 = sbr.rel (%p5458) target = $region56
      $region55: #{srcnn_forward_pallas.1} parent=51 // pred_region
        _
      $region56: #{srcnn_forward_pallas.1} parent=51 // pred_fallthru
        _
    $region52: #{srcnn_forward_pallas.1} parent=5 // pred_fallthru
      _
    %p5461 = scmp.le.s32.totalorder 2, %s16
    // Predicated region
    $region57: #{srcnn_forward_pallas.1} parent=5 // pred_check
      %p5462 = pneg %p5461
    $region58: #{srcnn_forward_pallas.1} parent=5 // pred_check_branch
      %5464 = sbr.rel (%p5462) target = $region60
    $region59: #{srcnn_forward_pallas.1} parent=5 // pred_region
      %s5465 = ssub.s32 %s16, 2
      // Predicated region
      $region61: #{srcnn_forward_pallas.1} parent=59 // pred_check
        %p5466 = pneg %p218
      $region62: #{srcnn_forward_pallas.1} parent=59 // pred_check_branch
        %5468 = sbr.rel (%p5466) target = $region64
      $region63: #{srcnn_forward_pallas.1} parent=59 // pred_region
        %p5469 = scmp.lt.s32.totalorder %s22, 1
        %s5470 = scalar_select %p5469, %s22, 1
        %s5471 = smul.addr %s5470, 3
        %s5472 = scalar_lea.vmem %s8, %s5471
      $region64: #{srcnn_forward_pallas.1} parent=59 // pred_fallthru
        _
    $region60: #{srcnn_forward_pallas.1} parent=5 // pred_fallthru
      _
  $region6: #{srcnn_forward_pallas.1} parent=0 // loop_footer
    %s20 = sadd.s32 1, %s16
  $region7: #{srcnn_forward_pallas.1} parent=0 // loop_footer_branch
    %15 = sbr.rel target = $region3
  $region8: #{srcnn_forward_pallas.1} parent=0 // loop_exit
    _

</llo_original>
